<compile_context>
chip_gen: v7x
topology: tpu7x:2x2x1
jax: 0.10.0
libtpu: 0.0.40
codegen_flags: <defaults>
</compile_context>

<pallas_src>
import math
import functools
import numpy as np
import jax
import jax.numpy as jnp
from jax import lax
from jax.experimental import pallas as pl
from jax.experimental.pallas import tpu as pltpu

# ---- small, self-consistent model dimensions ----
B, S, D = 2, 8, 32          # batch, seq, d_model
H = 4                       # attention heads
DK = D // H                 # per-head dim
DFF = 64                    # feed-forward hidden dim
N_LAYERS = 2                # "N" identical encoder layers
EPS = 1e-6                  # LayerNorm eps (added to std, annotated-transformer style)

PROJ = 2 * D + H * D        # fused projection width: [Q | K | VO] = 192 lanes


def _layer_norm(x, a, b):
    # a * (x - mean) / (std + eps) + b, unbiased std (torch.std default).
    mean = jnp.mean(x, axis=-1, keepdims=True)
    cent = x - mean
    var = jnp.sum(cent * cent, axis=-1, keepdims=True) * (1.0 / (x.shape[-1] - 1))
    inv = pl.reciprocal(jnp.sqrt(var) + EPS, approx=True)     # EUP slot, ~free
    return a * (cent * inv) + b


def encoder_kernel(x_ref, bias_ref,
                   wproj_ref, bproj_ref, bo_ref,
                   w1_ref, b1_ref, w2_ref, b2_ref,
                   lna_ref, lnb_ref, fna_ref, fnb_ref,
                   o_ref, *, bb):
    # x_ref: (bb, S, D) f32 activations; bias_ref: (bb, 1, S) additive mask bias.
    x = x_ref[...].reshape(bb * S, D)     # residual stream in f32
    bias = bias_ref[...]                  # (bb, 1, S)

    for l in range(N_LAYERS):
        # per-layer static ref indexing (no whole-tensor materialization)
        ln_a = lna_ref[l]                 # (2, D)      f32
        ln_b = lnb_ref[l]                 # (2, D)      f32
        wproj_l = wproj_ref[l]            # (D, PROJ)   bf16  [Wq*scale | Wk | Wvo]
        bproj_l = bproj_ref[l]            # (1, PROJ)   f32   [bq*scale | bk | 0]
        bo_l = bo_ref[l]                  # (1, D)      f32   (bo + bv@Wo folded in)
        w1_l = w1_ref[l]                  # (D, DFF)    bf16
        b1_l = b1_ref[l]                  # (1, DFF)    f32
        w2_l = w2_ref[l]                  # (DFF, D)    bf16
        b2_l = b2_ref[l]                  # (1, D)      f32

        # ---- sublayer 0: pre-norm self-attention + residual ----
        xn = _layer_norm(x, ln_a[0:1, :], ln_b[0:1, :]).astype(jnp.bfloat16)
        # fused Q / K / (V@Wo) projection: one (bb*S, D) @ (D, 192) matmul
        proj = jnp.dot(xn, wproj_l, preferred_element_type=jnp.float32) + bproj_l

        attn_rows = []
        for bi in range(bb):
            rows = slice(bi * S, (bi + 1) * S)
            qb = proj[rows, 0:D].astype(jnp.bfloat16)               # (S, D)
            # K transpose hoisted out of the head loop: one (S, D) -> (D, S)
            # transpose per batch; per-head K slices become sublane slices.
            kbT = proj[rows, D:2 * D].T.astype(jnp.bfloat16)        # (D, S)
            vo = proj[rows, 2 * D:PROJ].astype(jnp.bfloat16)        # (S, H*D) lane-dense
            bias_b = bias[bi]                                       # (1, S)
            acc = jnp.zeros((S, D), jnp.float32)
            for hh in range(H):
                hd = slice(hh * DK, (hh + 1) * DK)
                # plain-contraction score dot; scale already folded into Wq
                s = jnp.dot(qb[:, hd], kbT[hd, :],
                            preferred_element_type=jnp.float32) + bias_b   # (S, S)
                s = s - jnp.max(s, axis=-1, keepdims=True)
                p = jnp.exp(s)
                p = p * pl.reciprocal(jnp.sum(p, axis=-1, keepdims=True), approx=True)
                # single context dot per head: P_h @ (V_h @ Wo_h)  -> (S, D)
                acc = acc + jnp.dot(p.astype(jnp.bfloat16),
                                    vo[:, hh * D:(hh + 1) * D],
                                    preferred_element_type=jnp.float32)
            attn_rows.append(acc)
        attn = attn_rows[0] if bb == 1 else jnp.concatenate(attn_rows, axis=0)
        x = x + attn + bo_l

        # ---- sublayer 1: pre-norm position-wise feed-forward + residual ----
        xn = _layer_norm(x, ln_a[1:2, :], ln_b[1:2, :]).astype(jnp.bfloat16)
        hid = jnp.maximum(jnp.dot(xn, w1_l, preferred_element_type=jnp.float32) + b1_l, 0.0)
        ff = jnp.dot(hid.astype(jnp.bfloat16), w2_l,
                     preferred_element_type=jnp.float32) + b2_l
        x = x + ff

    # ---- final LayerNorm (self.norm) ----
    out = _layer_norm(x, fna_ref[...], fnb_ref[...])
    o_ref[...] = out.reshape(bb, S, D)


KERNEL_PARAM_ORDER = ("wproj", "bproj", "bo", "w1", "b1", "w2", "b2",
                      "lna", "lnb", "fna", "fnb")


def prepare_params(p):
    """Host-side re-packing (done ONCE, outside the jitted forward):
      * fold 1/sqrt(dk) into Wq/bq,
      * fold Wo into Wv:  Wvo[h] = Wv[:, h] @ Wo[h]  (f32 product, then bf16),
      * fold bv@Wo + bo into a single per-layer residual bias,
      * fuse [Wq*scale | Wk | Wvo] into one (D, 192) projection,
      * cast matmul weights to bf16 (biases / LN params stay f32)."""
    scale = 1.0 / math.sqrt(DK)
    wq = p["wqkvo"][:, 0] * scale                      # (N, D, D)
    wk = p["wqkvo"][:, 1]
    wv = p["wqkvo"][:, 2]
    wo = p["wqkvo"][:, 3]
    bq = p["bqkvo"][:, 0] * scale                      # (N, D)
    bk = p["bqkvo"][:, 1]
    bv = p["bqkvo"][:, 2]
    bo = p["bqkvo"][:, 3]

    # Wvo[h] = Wv[:, h*DK:(h+1)*DK] @ Wo[h*DK:(h+1)*DK, :]  -> stacked (N, D, H*D)
    wv_h = wv.reshape(N_LAYERS, D, H, DK)
    wo_h = wo.reshape(N_LAYERS, H, DK, D)
    wvo = jnp.einsum("ndhk,nhke->ndhe", wv_h, wo_h).reshape(N_LAYERS, D, H * D)

    # bv@Wo folds into the residual bias (softmax rows sum to 1 => P_h @ const = const)
    bvo = jnp.einsum("nd,nde->ne", bv, wo)             # (N, D) == sum_h bv_h @ Wo_h

    wproj = jnp.concatenate([wq, wk, wvo], axis=-1).astype(jnp.bfloat16)      # (N, D, 192)
    bproj = jnp.concatenate(
        [bq, bk, jnp.zeros((N_LAYERS, H * D), jnp.float32)], axis=-1)[:, None, :]  # (N, 1, 192)

    return dict(
        wproj=wproj,
        bproj=bproj,
        bo=(bo + bvo)[:, None, :],                                            # (N, 1, D) f32
        w1=p["w1"].astype(jnp.bfloat16),                                      # (N, D, DFF)
        b1=p["b1"][:, None, :],                                               # (N, 1, DFF) f32
        w2=p["w2"].astype(jnp.bfloat16),                                      # (N, DFF, D)
        b2=p["b2"][:, None, :],                                               # (N, 1, D)  f32
        lna=p["lna"], lnb=p["lnb"],                                           # (N, 2, D)  f32
        fna=p["fna"], fnb=p["fnb"],                                           # (1, D)     f32
    )


def _encoder_forward_impl(x, mask, packed, *, batch_block):
    bb = batch_block
    assert B % bb == 0

    # additive mask bias: 0 where attend, -1e9 where masked (replaces where/select)
    bias = (mask - 1.0) * 1e9

    weights = [packed[k] for k in KERNEL_PARAM_ORDER]

    def _const_map(nd):
        return lambda i, _nd=nd: (0,) * _nd

    in_specs = [
        pl.BlockSpec((bb, S, D), lambda i: (i, 0, 0)),
        pl.BlockSpec((bb, 1, S), lambda i: (i, 0, 0)),
    ]
    for w in weights:
        in_specs.append(pl.BlockSpec(w.shape, _const_map(w.ndim)))

    return pl.pallas_call(
        functools.partial(encoder_kernel, bb=bb),
        out_shape=jax.ShapeDtypeStruct((B, S, D), jnp.float32),
        grid_spec=pltpu.PrefetchScalarGridSpec(
            num_scalar_prefetch=0,
            grid=(B // bb,),
            in_specs=in_specs,
            out_specs=pl.BlockSpec((bb, S, D), lambda i: (i, 0, 0)),
        ),
        compiler_params=pltpu.CompilerParams(
            dimension_semantics=("arbitrary",) if bb == B else ("parallel",)),
    )(x, bias, *weights)


# Batch is folded into a single grid step on all chips at this problem size
# (latency-bound tiny matmuls: doubling M is free, extra grid steps are not).
# Pass batch_block=1 to re-benchmark a megacore split on v7x.
encoder_forward = jax.jit(
    functools.partial(_encoder_forward_impl, batch_block=B))


# ---- pure-JAX f32 reference (original module semantics) for a sanity check ----
def _reference_single(x, mask, p):
    def ln(x, a, b):
        mean = jnp.mean(x, -1, keepdims=True)
        var = jnp.sum((x - mean) ** 2, -1, keepdims=True) / (x.shape[-1] - 1)
        return a * (x - mean) / (jnp.sqrt(var) + EPS) + b

    scale = 1.0 / math.sqrt(DK)
    for l in range(N_LAYERS):
        xn = ln(x, p["lna"][l, 0], p["lnb"][l, 0])
        q = xn @ p["wqkvo"][l, 0] + p["bqkvo"][l, 0]
        k = xn @ p["wqkvo"][l, 1] + p["bqkvo"][l, 1]
        v = xn @ p["wqkvo"][l, 2] + p["bqkvo"][l, 2]
        heads = []
        for hh in range(H):
            sl = slice(hh * DK, (hh + 1) * DK)
            s = (q[:, sl] @ k[:, sl].T) * scale
            s = jnp.where(mask == 0.0, -1e9, s)
            pmat = jax.nn.softmax(s, axis=-1)
            heads.append(pmat @ v[:, sl])
        attn = jnp.concatenate(heads, -1) @ p["wqkvo"][l, 3] + p["bqkvo"][l, 3]
        x = x + attn
        xn = ln(x, p["lna"][l, 1], p["lnb"][l, 1])
        x = x + (jnp.maximum(xn @ p["w1"][l] + p["b1"][l], 0.0) @ p["w2"][l] + p["b2"][l])
    return ln(x, p["fna"][0], p["fnb"][0])


if __name__ == "__main__":
    key = jax.random.PRNGKey(0)
    ks = jax.random.split(key, 8)

    params = {
        "wqkvo": jax.random.normal(ks[0], (N_LAYERS, 4, D, D), jnp.float32) * 0.1,
        "bqkvo": jax.random.normal(ks[1], (N_LAYERS, 4, D), jnp.float32) * 0.01,
        "w1": jax.random.normal(ks[2], (N_LAYERS, D, DFF), jnp.float32) * 0.1,
        "b1": jax.random.normal(ks[3], (N_LAYERS, DFF), jnp.float32) * 0.01,
        "w2": jax.random.normal(ks[4], (N_LAYERS, DFF, D), jnp.float32) * 0.1,
        "b2": jax.random.normal(ks[5], (N_LAYERS, D), jnp.float32) * 0.01,
        "lna": jnp.ones((N_LAYERS, 2, D), jnp.float32),
        "lnb": jnp.zeros((N_LAYERS, 2, D), jnp.float32),
        "fna": jnp.ones((1, D), jnp.float32),
        "fnb": jnp.zeros((1, D), jnp.float32),
    }

    x = jax.random.normal(ks[6], (B, S, D), jnp.float32)
    lengths = jnp.array([S, S - 2], jnp.int32)                       # second example is padded
    mask = (jnp.arange(S)[None, :] < lengths[:, None]).astype(jnp.float32)
    mask = mask.reshape(B, 1, S)

    # Parameters are packed once, outside the jitted per-call path.
    packed = jax.tree_util.tree_map(jax.block_until_ready, prepare_params(params))

    out = encoder_forward(x, mask, packed)
    out = jax.block_until_ready(out)

    ref = jax.vmap(lambda xb, mb: _reference_single(xb, mb, params))(x, mask)
    ref = jax.block_until_ready(ref)

    assert out.shape == (B, S, D)
    assert bool(jnp.all(jnp.isfinite(out)))
    # tolerance accommodates bf16 MXU operands (f32 accumulation), the bf16
    # Wv@Wo fold and approx reciprocals vs. the f32 reference
    np.testing.assert_allclose(np.asarray(out), np.asarray(ref), atol=7.5e-2, rtol=7.5e-2)
    print("KERNEL_OK")
</pallas_src>

<mosaic_0001>
module attributes {stable_mosaic.version = 11 : i64} {
  func.func @encoder_kernel(%arg0: i32, %arg1: memref<2x8x32xf32, #tpu.memory_space<vmem>>, %arg2: memref<2x1x8xf32, #tpu.memory_space<vmem>>, %arg3: memref<2x32x192xbf16, #tpu.memory_space<vmem>>, %arg4: memref<2x1x192xf32, #tpu.memory_space<vmem>>, %arg5: memref<2x1x32xf32, #tpu.memory_space<vmem>>, %arg6: memref<2x32x64xbf16, #tpu.memory_space<vmem>>, %arg7: memref<2x1x64xf32, #tpu.memory_space<vmem>>, %arg8: memref<2x64x32xbf16, #tpu.memory_space<vmem>>, %arg9: memref<2x1x32xf32, #tpu.memory_space<vmem>>, %arg10: memref<2x2x32xf32, #tpu.memory_space<vmem>>, %arg11: memref<2x2x32xf32, #tpu.memory_space<vmem>>, %arg12: memref<1x32xf32, #tpu.memory_space<vmem>>, %arg13: memref<1x32xf32, #tpu.memory_space<vmem>>, %arg14: memref<2x8x32xf32, #tpu.memory_space<vmem>>) attributes {dimension_semantics = [#tpu.dimension_semantics<arbitrary>], iteration_bounds = array<i64: 1>, scalar_prefetch = 0 : i64, scratch_operands = 0 : i64, tpu.core_type = #tpu.core_type<tc>, window_params = [{transform_indices = @transform_0, window_bounds = array<i64: 2, 8, 32>}, {transform_indices = @transform_1, window_bounds = array<i64: 2, 1, 8>}, {pipeline_mode = #tpu.pipeline_mode<synchronous>, transform_indices = @transform_2, window_bounds = array<i64: 2, 32, 192>}, {pipeline_mode = #tpu.pipeline_mode<synchronous>, transform_indices = @transform_3, window_bounds = array<i64: 2, 1, 192>}, {pipeline_mode = #tpu.pipeline_mode<synchronous>, transform_indices = @transform_4, window_bounds = array<i64: 2, 1, 32>}, {pipeline_mode = #tpu.pipeline_mode<synchronous>, transform_indices = @transform_5, window_bounds = array<i64: 2, 32, 64>}, {pipeline_mode = #tpu.pipeline_mode<synchronous>, transform_indices = @transform_6, window_bounds = array<i64: 2, 1, 64>}, {pipeline_mode = #tpu.pipeline_mode<synchronous>, transform_indices = @transform_7, window_bounds = array<i64: 2, 64, 32>}, {pipeline_mode = #tpu.pipeline_mode<synchronous>, transform_indices = @transform_8, window_bounds = array<i64: 2, 1, 32>}, {pipeline_mode = #tpu.pipeline_mode<synchronous>, transform_indices = @transform_9, window_bounds = array<i64: 2, 2, 32>}, {pipeline_mode = #tpu.pipeline_mode<synchronous>, transform_indices = @transform_10, window_bounds = array<i64: 2, 2, 32>}, {pipeline_mode = #tpu.pipeline_mode<synchronous>, transform_indices = @transform_11, window_bounds = array<i64: 1, 32>}, {pipeline_mode = #tpu.pipeline_mode<synchronous>, transform_indices = @transform_12, window_bounds = array<i64: 1, 32>}, {transform_indices = @transform_13, window_bounds = array<i64: 2, 8, 32>}]} {
    %c0 = arith.constant 0 : index
    %c0_0 = arith.constant 0 : index
    %c0_1 = arith.constant 0 : index
    %0 = vector.load %arg1[%c0, %c0_0, %c0_1] : memref<2x8x32xf32, #tpu.memory_space<vmem>>, vector<2x8x32xf32>
    %1 = vector.shape_cast %0 : vector<2x8x32xf32> to vector<16x32xf32>
    %c0_2 = arith.constant 0 : index
    %c0_3 = arith.constant 0 : index
    %c0_4 = arith.constant 0 : index
    %2 = vector.load %arg2[%c0_2, %c0_3, %c0_4] : memref<2x1x8xf32, #tpu.memory_space<vmem>>, vector<2x1x8xf32>
    %c0_5 = arith.constant 0 : index
    %c0_6 = arith.constant 0 : index
    %c0_7 = arith.constant 0 : index
    %3 = vector.load %arg10[%c0_5, %c0_6, %c0_7] : memref<2x2x32xf32, #tpu.memory_space<vmem>>, vector<1x2x32xf32>
    %4 = vector.shape_cast %3 : vector<1x2x32xf32> to vector<2x32xf32>
    %c0_8 = arith.constant 0 : index
    %c0_9 = arith.constant 0 : index
    %c0_10 = arith.constant 0 : index
    %5 = vector.load %arg11[%c0_8, %c0_9, %c0_10] : memref<2x2x32xf32, #tpu.memory_space<vmem>>, vector<1x2x32xf32>
    %6 = vector.shape_cast %5 : vector<1x2x32xf32> to vector<2x32xf32>
    %c0_11 = arith.constant 0 : index
    %c0_12 = arith.constant 0 : index
    %c0_13 = arith.constant 0 : index
    %7 = vector.load %arg3[%c0_11, %c0_12, %c0_13] : memref<2x32x192xbf16, #tpu.memory_space<vmem>>, vector<1x32x192xbf16>
    %8 = vector.shape_cast %7 : vector<1x32x192xbf16> to vector<32x192xbf16>
    %c0_14 = arith.constant 0 : index
    %c0_15 = arith.constant 0 : index
    %c0_16 = arith.constant 0 : index
    %9 = vector.load %arg4[%c0_14, %c0_15, %c0_16] : memref<2x1x192xf32, #tpu.memory_space<vmem>>, vector<1x1x192xf32>
    %10 = vector.shape_cast %9 : vector<1x1x192xf32> to vector<1x192xf32>
    %c0_17 = arith.constant 0 : index
    %c0_18 = arith.constant 0 : index
    %c0_19 = arith.constant 0 : index
    %11 = vector.load %arg5[%c0_17, %c0_18, %c0_19] : memref<2x1x32xf32, #tpu.memory_space<vmem>>, vector<1x1x32xf32>
    %12 = vector.shape_cast %11 : vector<1x1x32xf32> to vector<1x32xf32>
    %c0_20 = arith.constant 0 : index
    %c0_21 = arith.constant 0 : index
    %c0_22 = arith.constant 0 : index
    %13 = vector.load %arg6[%c0_20, %c0_21, %c0_22] : memref<2x32x64xbf16, #tpu.memory_space<vmem>>, vector<1x32x64xbf16>
    %14 = vector.shape_cast %13 : vector<1x32x64xbf16> to vector<32x64xbf16>
    %c0_23 = arith.constant 0 : index
    %c0_24 = arith.constant 0 : index
    %c0_25 = arith.constant 0 : index
    %15 = vector.load %arg7[%c0_23, %c0_24, %c0_25] : memref<2x1x64xf32, #tpu.memory_space<vmem>>, vector<1x1x64xf32>
    %16 = vector.shape_cast %15 : vector<1x1x64xf32> to vector<1x64xf32>
    %c0_26 = arith.constant 0 : index
    %c0_27 = arith.constant 0 : index
    %c0_28 = arith.constant 0 : index
    %17 = vector.load %arg8[%c0_26, %c0_27, %c0_28] : memref<2x64x32xbf16, #tpu.memory_space<vmem>>, vector<1x64x32xbf16>
    %18 = vector.shape_cast %17 : vector<1x64x32xbf16> to vector<64x32xbf16>
    %c0_29 = arith.constant 0 : index
    %c0_30 = arith.constant 0 : index
    %c0_31 = arith.constant 0 : index
    %19 = vector.load %arg9[%c0_29, %c0_30, %c0_31] : memref<2x1x32xf32, #tpu.memory_space<vmem>>, vector<1x1x32xf32>
    %20 = vector.shape_cast %19 : vector<1x1x32xf32> to vector<1x32xf32>
    %21 = vector.extract_strided_slice %4 {offsets = [0, 0], sizes = [1, 32], strides = [1, 1]} : vector<2x32xf32> to vector<1x32xf32>
    %22 = vector.extract_strided_slice %6 {offsets = [0, 0], sizes = [1, 32], strides = [1, 1]} : vector<2x32xf32> to vector<1x32xf32>
    %cst = arith.constant dense<0.000000e+00> : vector<16xf32>
    %23 = vector.multi_reduction <add>, %1, %cst [1] : vector<16x32xf32> to vector<16xf32>
    %24 = vector.shape_cast %23 : vector<16xf32> to vector<16x1xf32>
    %cst_32 = arith.constant 3.200000e+01 : f32
    %25 = vector.broadcast %cst_32 : f32 to vector<16x1xf32>
    %26 = arith.divf %24, %25 : vector<16x1xf32>
    %27 = vector.broadcast %26 : vector<16x1xf32> to vector<16x32xf32>
    %28 = arith.subf %1, %27 : vector<16x32xf32>
    %29 = arith.mulf %28, %28 : vector<16x32xf32>
    %cst_33 = arith.constant dense<0.000000e+00> : vector<16xf32>
    %30 = vector.multi_reduction <add>, %29, %cst_33 [1] : vector<16x32xf32> to vector<16xf32>
    %31 = vector.shape_cast %30 : vector<16xf32> to vector<16x1xf32>
    %cst_34 = arith.constant 0.0322580636 : f32
    %32 = vector.broadcast %cst_34 : f32 to vector<16x1xf32>
    %33 = arith.mulf %31, %32 : vector<16x1xf32>
    %34 = math.sqrt %33 : vector<16x1xf32>
    %cst_35 = arith.constant 9.99999997E-7 : f32
    %35 = vector.broadcast %cst_35 : f32 to vector<16x1xf32>
    %36 = arith.addf %34, %35 : vector<16x1xf32>
    %37 = tpu.reciprocal %36 {approx = true} : vector<16x1xf32> -> vector<16x1xf32>
    %38 = vector.broadcast %37 : vector<16x1xf32> to vector<16x32xf32>
    %39 = arith.mulf %28, %38 : vector<16x32xf32>
    %40 = vector.broadcast %21 : vector<1x32xf32> to vector<16x32xf32>
    %41 = arith.mulf %40, %39 : vector<16x32xf32>
    %42 = vector.broadcast %22 : vector<1x32xf32> to vector<16x32xf32>
    %43 = arith.addf %41, %42 : vector<16x32xf32>
    %44 = arith.truncf %43 : vector<16x32xf32> to vector<16x32xbf16>
    %cst_36 = arith.constant dense<0.000000e+00> : vector<16x192xf32>
    %45 = tpu.matmul %44, %8, %cst_36 {dimension_numbers = #tpu.dot_dimension_numbers<[1], [0], [0], [1], [0, 0, 1, 1], [], []>} : vector<16x32xbf16>, vector<32x192xbf16>, vector<16x192xf32> -> vector<16x192xf32>
    %46 = vector.broadcast %10 : vector<1x192xf32> to vector<16x192xf32>
    %47 = arith.addf %45, %46 : vector<16x192xf32>
    %48 = vector.extract_strided_slice %47 {offsets = [0, 0], sizes = [8, 32], strides = [1, 1]} : vector<16x192xf32> to vector<8x32xf32>
    %49 = arith.truncf %48 : vector<8x32xf32> to vector<8x32xbf16>
    %50 = vector.extract_strided_slice %47 {offsets = [0, 32], sizes = [8, 32], strides = [1, 1]} : vector<16x192xf32> to vector<8x32xf32>
    %51 = tpu.transpose %50, [1, 0] : vector<8x32xf32> -> vector<32x8xf32>
    %52 = arith.truncf %51 : vector<32x8xf32> to vector<32x8xbf16>
    %53 = vector.extract_strided_slice %47 {offsets = [0, 64], sizes = [8, 128], strides = [1, 1]} : vector<16x192xf32> to vector<8x128xf32>
    %54 = arith.truncf %53 : vector<8x128xf32> to vector<8x128xbf16>
    %55 = vector.extract_strided_slice %2 {offsets = [0, 0, 0], sizes = [1, 1, 8], strides = [1, 1, 1]} : vector<2x1x8xf32> to vector<1x1x8xf32>
    %56 = vector.shape_cast %55 : vector<1x1x8xf32> to vector<1x8xf32>
    %cst_37 = arith.constant 0.000000e+00 : f32
    %57 = vector.broadcast %cst_37 : f32 to vector<8x32xf32>
    %58 = vector.extract_strided_slice %49 {offsets = [0, 0], sizes = [8, 8], strides = [1, 1]} : vector<8x32xbf16> to vector<8x8xbf16>
    %59 = vector.extract_strided_slice %52 {offsets = [0, 0], sizes = [8, 8], strides = [1, 1]} : vector<32x8xbf16> to vector<8x8xbf16>
    %cst_38 = arith.constant dense<0.000000e+00> : vector<8x8xf32>
    %60 = tpu.matmul %58, %59, %cst_38 {dimension_numbers = #tpu.dot_dimension_numbers<[1], [0], [0], [1], [0, 0, 1, 1], [], []>} : vector<8x8xbf16>, vector<8x8xbf16>, vector<8x8xf32> -> vector<8x8xf32>
    %61 = vector.broadcast %56 : vector<1x8xf32> to vector<8x8xf32>
    %62 = arith.addf %60, %61 : vector<8x8xf32>
    %cst_39 = arith.constant dense<0xFF800000> : vector<8xf32>
    %63 = vector.multi_reduction <maximumf>, %62, %cst_39 [1] : vector<8x8xf32> to vector<8xf32>
    %64 = vector.shape_cast %63 : vector<8xf32> to vector<8x1xf32>
    %65 = vector.broadcast %64 : vector<8x1xf32> to vector<8x8xf32>
    %66 = arith.subf %62, %65 : vector<8x8xf32>
    %67 = math.exp %66 : vector<8x8xf32>
    %cst_40 = arith.constant dense<0.000000e+00> : vector<8xf32>
    %68 = vector.multi_reduction <add>, %67, %cst_40 [1] : vector<8x8xf32> to vector<8xf32>
    %69 = vector.shape_cast %68 : vector<8xf32> to vector<8x1xf32>
    %70 = tpu.reciprocal %69 {approx = true} : vector<8x1xf32> -> vector<8x1xf32>
    %71 = vector.broadcast %70 : vector<8x1xf32> to vector<8x8xf32>
    %72 = arith.mulf %67, %71 : vector<8x8xf32>
    %73 = arith.truncf %72 : vector<8x8xf32> to vector<8x8xbf16>
    %74 = vector.extract_strided_slice %54 {offsets = [0, 0], sizes = [8, 32], strides = [1, 1]} : vector<8x128xbf16> to vector<8x32xbf16>
    %cst_41 = arith.constant dense<0.000000e+00> : vector<8x32xf32>
    %75 = tpu.matmul %73, %74, %cst_41 {dimension_numbers = #tpu.dot_dimension_numbers<[1], [0], [0], [1], [0, 0, 1, 1], [], []>} : vector<8x8xbf16>, vector<8x32xbf16>, vector<8x32xf32> -> vector<8x32xf32>
    %76 = arith.addf %57, %75 : vector<8x32xf32>
    %77 = vector.extract_strided_slice %49 {offsets = [0, 8], sizes = [8, 8], strides = [1, 1]} : vector<8x32xbf16> to vector<8x8xbf16>
    %78 = vector.extract_strided_slice %52 {offsets = [8, 0], sizes = [8, 8], strides = [1, 1]} : vector<32x8xbf16> to vector<8x8xbf16>
    %cst_42 = arith.constant dense<0.000000e+00> : vector<8x8xf32>
    %79 = tpu.matmul %77, %78, %cst_42 {dimension_numbers = #tpu.dot_dimension_numbers<[1], [0], [0], [1], [0, 0, 1, 1], [], []>} : vector<8x8xbf16>, vector<8x8xbf16>, vector<8x8xf32> -> vector<8x8xf32>
    %80 = vector.broadcast %56 : vector<1x8xf32> to vector<8x8xf32>
    %81 = arith.addf %79, %80 : vector<8x8xf32>
    %cst_43 = arith.constant dense<0xFF800000> : vector<8xf32>
    %82 = vector.multi_reduction <maximumf>, %81, %cst_43 [1] : vector<8x8xf32> to vector<8xf32>
    %83 = vector.shape_cast %82 : vector<8xf32> to vector<8x1xf32>
    %84 = vector.broadcast %83 : vector<8x1xf32> to vector<8x8xf32>
    %85 = arith.subf %81, %84 : vector<8x8xf32>
    %86 = math.exp %85 : vector<8x8xf32>
    %cst_44 = arith.constant dense<0.000000e+00> : vector<8xf32>
    %87 = vector.multi_reduction <add>, %86, %cst_44 [1] : vector<8x8xf32> to vector<8xf32>
    %88 = vector.shape_cast %87 : vector<8xf32> to vector<8x1xf32>
    %89 = tpu.reciprocal %88 {approx = true} : vector<8x1xf32> -> vector<8x1xf32>
    %90 = vector.broadcast %89 : vector<8x1xf32> to vector<8x8xf32>
    %91 = arith.mulf %86, %90 : vector<8x8xf32>
    %92 = arith.truncf %91 : vector<8x8xf32> to vector<8x8xbf16>
    %93 = vector.extract_strided_slice %54 {offsets = [0, 32], sizes = [8, 32], strides = [1, 1]} : vector<8x128xbf16> to vector<8x32xbf16>
    %cst_45 = arith.constant dense<0.000000e+00> : vector<8x32xf32>
    %94 = tpu.matmul %92, %93, %cst_45 {dimension_numbers = #tpu.dot_dimension_numbers<[1], [0], [0], [1], [0, 0, 1, 1], [], []>} : vector<8x8xbf16>, vector<8x32xbf16>, vector<8x32xf32> -> vector<8x32xf32>
    %95 = arith.addf %76, %94 : vector<8x32xf32>
    %96 = vector.extract_strided_slice %49 {offsets = [0, 16], sizes = [8, 8], strides = [1, 1]} : vector<8x32xbf16> to vector<8x8xbf16>
    %97 = vector.extract_strided_slice %52 {offsets = [16, 0], sizes = [8, 8], strides = [1, 1]} : vector<32x8xbf16> to vector<8x8xbf16>
    %cst_46 = arith.constant dense<0.000000e+00> : vector<8x8xf32>
    %98 = tpu.matmul %96, %97, %cst_46 {dimension_numbers = #tpu.dot_dimension_numbers<[1], [0], [0], [1], [0, 0, 1, 1], [], []>} : vector<8x8xbf16>, vector<8x8xbf16>, vector<8x8xf32> -> vector<8x8xf32>
    %99 = vector.broadcast %56 : vector<1x8xf32> to vector<8x8xf32>
    %100 = arith.addf %98, %99 : vector<8x8xf32>
    %cst_47 = arith.constant dense<0xFF800000> : vector<8xf32>
    %101 = vector.multi_reduction <maximumf>, %100, %cst_47 [1] : vector<8x8xf32> to vector<8xf32>
    %102 = vector.shape_cast %101 : vector<8xf32> to vector<8x1xf32>
    %103 = vector.broadcast %102 : vector<8x1xf32> to vector<8x8xf32>
    %104 = arith.subf %100, %103 : vector<8x8xf32>
    %105 = math.exp %104 : vector<8x8xf32>
    %cst_48 = arith.constant dense<0.000000e+00> : vector<8xf32>
    %106 = vector.multi_reduction <add>, %105, %cst_48 [1] : vector<8x8xf32> to vector<8xf32>
    %107 = vector.shape_cast %106 : vector<8xf32> to vector<8x1xf32>
    %108 = tpu.reciprocal %107 {approx = true} : vector<8x1xf32> -> vector<8x1xf32>
    %109 = vector.broadcast %108 : vector<8x1xf32> to vector<8x8xf32>
    %110 = arith.mulf %105, %109 : vector<8x8xf32>
    %111 = arith.truncf %110 : vector<8x8xf32> to vector<8x8xbf16>
    %112 = vector.extract_strided_slice %54 {offsets = [0, 64], sizes = [8, 32], strides = [1, 1]} : vector<8x128xbf16> to vector<8x32xbf16>
    %cst_49 = arith.constant dense<0.000000e+00> : vector<8x32xf32>
    %113 = tpu.matmul %111, %112, %cst_49 {dimension_numbers = #tpu.dot_dimension_numbers<[1], [0], [0], [1], [0, 0, 1, 1], [], []>} : vector<8x8xbf16>, vector<8x32xbf16>, vector<8x32xf32> -> vector<8x32xf32>
    %114 = arith.addf %95, %113 : vector<8x32xf32>
    %115 = vector.extract_strided_slice %49 {offsets = [0, 24], sizes = [8, 8], strides = [1, 1]} : vector<8x32xbf16> to vector<8x8xbf16>
    %116 = vector.extract_strided_slice %52 {offsets = [24, 0], sizes = [8, 8], strides = [1, 1]} : vector<32x8xbf16> to vector<8x8xbf16>
    %cst_50 = arith.constant dense<0.000000e+00> : vector<8x8xf32>
    %117 = tpu.matmul %115, %116, %cst_50 {dimension_numbers = #tpu.dot_dimension_numbers<[1], [0], [0], [1], [0, 0, 1, 1], [], []>} : vector<8x8xbf16>, vector<8x8xbf16>, vector<8x8xf32> -> vector<8x8xf32>
    %118 = vector.broadcast %56 : vector<1x8xf32> to vector<8x8xf32>
    %119 = arith.addf %117, %118 : vector<8x8xf32>
    %cst_51 = arith.constant dense<0xFF800000> : vector<8xf32>
    %120 = vector.multi_reduction <maximumf>, %119, %cst_51 [1] : vector<8x8xf32> to vector<8xf32>
    %121 = vector.shape_cast %120 : vector<8xf32> to vector<8x1xf32>
    %122 = vector.broadcast %121 : vector<8x1xf32> to vector<8x8xf32>
    %123 = arith.subf %119, %122 : vector<8x8xf32>
    %124 = math.exp %123 : vector<8x8xf32>
    %cst_52 = arith.constant dense<0.000000e+00> : vector<8xf32>
    %125 = vector.multi_reduction <add>, %124, %cst_52 [1] : vector<8x8xf32> to vector<8xf32>
    %126 = vector.shape_cast %125 : vector<8xf32> to vector<8x1xf32>
    %127 = tpu.reciprocal %126 {approx = true} : vector<8x1xf32> -> vector<8x1xf32>
    %128 = vector.broadcast %127 : vector<8x1xf32> to vector<8x8xf32>
    %129 = arith.mulf %124, %128 : vector<8x8xf32>
    %130 = arith.truncf %129 : vector<8x8xf32> to vector<8x8xbf16>
    %131 = vector.extract_strided_slice %54 {offsets = [0, 96], sizes = [8, 32], strides = [1, 1]} : vector<8x128xbf16> to vector<8x32xbf16>
    %cst_53 = arith.constant dense<0.000000e+00> : vector<8x32xf32>
    %132 = tpu.matmul %130, %131, %cst_53 {dimension_numbers = #tpu.dot_dimension_numbers<[1], [0], [0], [1], [0, 0, 1, 1], [], []>} : vector<8x8xbf16>, vector<8x32xbf16>, vector<8x32xf32> -> vector<8x32xf32>
    %133 = arith.addf %114, %132 : vector<8x32xf32>
    %134 = vector.extract_strided_slice %47 {offsets = [8, 0], sizes = [8, 32], strides = [1, 1]} : vector<16x192xf32> to vector<8x32xf32>
    %135 = arith.truncf %134 : vector<8x32xf32> to vector<8x32xbf16>
    %136 = vector.extract_strided_slice %47 {offsets = [8, 32], sizes = [8, 32], strides = [1, 1]} : vector<16x192xf32> to vector<8x32xf32>
    %137 = tpu.transpose %136, [1, 0] : vector<8x32xf32> -> vector<32x8xf32>
    %138 = arith.truncf %137 : vector<32x8xf32> to vector<32x8xbf16>
    %139 = vector.extract_strided_slice %47 {offsets = [8, 64], sizes = [8, 128], strides = [1, 1]} : vector<16x192xf32> to vector<8x128xf32>
    %140 = arith.truncf %139 : vector<8x128xf32> to vector<8x128xbf16>
    %141 = vector.extract_strided_slice %2 {offsets = [1, 0, 0], sizes = [1, 1, 8], strides = [1, 1, 1]} : vector<2x1x8xf32> to vector<1x1x8xf32>
    %142 = vector.shape_cast %141 : vector<1x1x8xf32> to vector<1x8xf32>
    %cst_54 = arith.constant 0.000000e+00 : f32
    %143 = vector.broadcast %cst_54 : f32 to vector<8x32xf32>
    %144 = vector.extract_strided_slice %135 {offsets = [0, 0], sizes = [8, 8], strides = [1, 1]} : vector<8x32xbf16> to vector<8x8xbf16>
    %145 = vector.extract_strided_slice %138 {offsets = [0, 0], sizes = [8, 8], strides = [1, 1]} : vector<32x8xbf16> to vector<8x8xbf16>
    %cst_55 = arith.constant dense<0.000000e+00> : vector<8x8xf32>
    %146 = tpu.matmul %144, %145, %cst_55 {dimension_numbers = #tpu.dot_dimension_numbers<[1], [0], [0], [1], [0, 0, 1, 1], [], []>} : vector<8x8xbf16>, vector<8x8xbf16>, vector<8x8xf32> -> vector<8x8xf32>
    %147 = vector.broadcast %142 : vector<1x8xf32> to vector<8x8xf32>
    %148 = arith.addf %146, %147 : vector<8x8xf32>
    %cst_56 = arith.constant dense<0xFF800000> : vector<8xf32>
    %149 = vector.multi_reduction <maximumf>, %148, %cst_56 [1] : vector<8x8xf32> to vector<8xf32>
    %150 = vector.shape_cast %149 : vector<8xf32> to vector<8x1xf32>
    %151 = vector.broadcast %150 : vector<8x1xf32> to vector<8x8xf32>
    %152 = arith.subf %148, %151 : vector<8x8xf32>
    %153 = math.exp %152 : vector<8x8xf32>
    %cst_57 = arith.constant dense<0.000000e+00> : vector<8xf32>
    %154 = vector.multi_reduction <add>, %153, %cst_57 [1] : vector<8x8xf32> to vector<8xf32>
    %155 = vector.shape_cast %154 : vector<8xf32> to vector<8x1xf32>
    %156 = tpu.reciprocal %155 {approx = true} : vector<8x1xf32> -> vector<8x1xf32>
    %157 = vector.broadcast %156 : vector<8x1xf32> to vector<8x8xf32>
    %158 = arith.mulf %153, %157 : vector<8x8xf32>
    %159 = arith.truncf %158 : vector<8x8xf32> to vector<8x8xbf16>
    %160 = vector.extract_strided_slice %140 {offsets = [0, 0], sizes = [8, 32], strides = [1, 1]} : vector<8x128xbf16> to vector<8x32xbf16>
    %cst_58 = arith.constant dense<0.000000e+00> : vector<8x32xf32>
    %161 = tpu.matmul %159, %160, %cst_58 {dimension_numbers = #tpu.dot_dimension_numbers<[1], [0], [0], [1], [0, 0, 1, 1], [], []>} : vector<8x8xbf16>, vector<8x32xbf16>, vector<8x32xf32> -> vector<8x32xf32>
    %162 = arith.addf %143, %161 : vector<8x32xf32>
    %163 = vector.extract_strided_slice %135 {offsets = [0, 8], sizes = [8, 8], strides = [1, 1]} : vector<8x32xbf16> to vector<8x8xbf16>
    %164 = vector.extract_strided_slice %138 {offsets = [8, 0], sizes = [8, 8], strides = [1, 1]} : vector<32x8xbf16> to vector<8x8xbf16>
    %cst_59 = arith.constant dense<0.000000e+00> : vector<8x8xf32>
    %165 = tpu.matmul %163, %164, %cst_59 {dimension_numbers = #tpu.dot_dimension_numbers<[1], [0], [0], [1], [0, 0, 1, 1], [], []>} : vector<8x8xbf16>, vector<8x8xbf16>, vector<8x8xf32> -> vector<8x8xf32>
    %166 = vector.broadcast %142 : vector<1x8xf32> to vector<8x8xf32>
    %167 = arith.addf %165, %166 : vector<8x8xf32>
    %cst_60 = arith.constant dense<0xFF800000> : vector<8xf32>
    %168 = vector.multi_reduction <maximumf>, %167, %cst_60 [1] : vector<8x8xf32> to vector<8xf32>
    %169 = vector.shape_cast %168 : vector<8xf32> to vector<8x1xf32>
    %170 = vector.broadcast %169 : vector<8x1xf32> to vector<8x8xf32>
    %171 = arith.subf %167, %170 : vector<8x8xf32>
    %172 = math.exp %171 : vector<8x8xf32>
    %cst_61 = arith.constant dense<0.000000e+00> : vector<8xf32>
    %173 = vector.multi_reduction <add>, %172, %cst_61 [1] : vector<8x8xf32> to vector<8xf32>
    %174 = vector.shape_cast %173 : vector<8xf32> to vector<8x1xf32>
    %175 = tpu.reciprocal %174 {approx = true} : vector<8x1xf32> -> vector<8x1xf32>
    %176 = vector.broadcast %175 : vector<8x1xf32> to vector<8x8xf32>
    %177 = arith.mulf %172, %176 : vector<8x8xf32>
    %178 = arith.truncf %177 : vector<8x8xf32> to vector<8x8xbf16>
    %179 = vector.extract_strided_slice %140 {offsets = [0, 32], sizes = [8, 32], strides = [1, 1]} : vector<8x128xbf16> to vector<8x32xbf16>
    %cst_62 = arith.constant dense<0.000000e+00> : vector<8x32xf32>
    %180 = tpu.matmul %178, %179, %cst_62 {dimension_numbers = #tpu.dot_dimension_numbers<[1], [0], [0], [1], [0, 0, 1, 1], [], []>} : vector<8x8xbf16>, vector<8x32xbf16>, vector<8x32xf32> -> vector<8x32xf32>
    %181 = arith.addf %162, %180 : vector<8x32xf32>
    %182 = vector.extract_strided_slice %135 {offsets = [0, 16], sizes = [8, 8], strides = [1, 1]} : vector<8x32xbf16> to vector<8x8xbf16>
    %183 = vector.extract_strided_slice %138 {offsets = [16, 0], sizes = [8, 8], strides = [1, 1]} : vector<32x8xbf16> to vector<8x8xbf16>
    %cst_63 = arith.constant dense<0.000000e+00> : vector<8x8xf32>
    %184 = tpu.matmul %182, %183, %cst_63 {dimension_numbers = #tpu.dot_dimension_numbers<[1], [0], [0], [1], [0, 0, 1, 1], [], []>} : vector<8x8xbf16>, vector<8x8xbf16>, vector<8x8xf32> -> vector<8x8xf32>
    %185 = vector.broadcast %142 : vector<1x8xf32> to vector<8x8xf32>
    %186 = arith.addf %184, %185 : vector<8x8xf32>
    %cst_64 = arith.constant dense<0xFF800000> : vector<8xf32>
    %187 = vector.multi_reduction <maximumf>, %186, %cst_64 [1] : vector<8x8xf32> to vector<8xf32>
    %188 = vector.shape_cast %187 : vector<8xf32> to vector<8x1xf32>
    %189 = vector.broadcast %188 : vector<8x1xf32> to vector<8x8xf32>
    %190 = arith.subf %186, %189 : vector<8x8xf32>
    %191 = math.exp %190 : vector<8x8xf32>
    %cst_65 = arith.constant dense<0.000000e+00> : vector<8xf32>
    %192 = vector.multi_reduction <add>, %191, %cst_65 [1] : vector<8x8xf32> to vector<8xf32>
    %193 = vector.shape_cast %192 : vector<8xf32> to vector<8x1xf32>
    %194 = tpu.reciprocal %193 {approx = true} : vector<8x1xf32> -> vector<8x1xf32>
    %195 = vector.broadcast %194 : vector<8x1xf32> to vector<8x8xf32>
    %196 = arith.mulf %191, %195 : vector<8x8xf32>
    %197 = arith.truncf %196 : vector<8x8xf32> to vector<8x8xbf16>
    %198 = vector.extract_strided_slice %140 {offsets = [0, 64], sizes = [8, 32], strides = [1, 1]} : vector<8x128xbf16> to vector<8x32xbf16>
    %cst_66 = arith.constant dense<0.000000e+00> : vector<8x32xf32>
    %199 = tpu.matmul %197, %198, %cst_66 {dimension_numbers = #tpu.dot_dimension_numbers<[1], [0], [0], [1], [0, 0, 1, 1], [], []>} : vector<8x8xbf16>, vector<8x32xbf16>, vector<8x32xf32> -> vector<8x32xf32>
    %200 = arith.addf %181, %199 : vector<8x32xf32>
    %201 = vector.extract_strided_slice %135 {offsets = [0, 24], sizes = [8, 8], strides = [1, 1]} : vector<8x32xbf16> to vector<8x8xbf16>
    %202 = vector.extract_strided_slice %138 {offsets = [24, 0], sizes = [8, 8], strides = [1, 1]} : vector<32x8xbf16> to vector<8x8xbf16>
    %cst_67 = arith.constant dense<0.000000e+00> : vector<8x8xf32>
    %203 = tpu.matmul %201, %202, %cst_67 {dimension_numbers = #tpu.dot_dimension_numbers<[1], [0], [0], [1], [0, 0, 1, 1], [], []>} : vector<8x8xbf16>, vector<8x8xbf16>, vector<8x8xf32> -> vector<8x8xf32>
    %204 = vector.broadcast %142 : vector<1x8xf32> to vector<8x8xf32>
    %205 = arith.addf %203, %204 : vector<8x8xf32>
    %cst_68 = arith.constant dense<0xFF800000> : vector<8xf32>
    %206 = vector.multi_reduction <maximumf>, %205, %cst_68 [1] : vector<8x8xf32> to vector<8xf32>
    %207 = vector.shape_cast %206 : vector<8xf32> to vector<8x1xf32>
    %208 = vector.broadcast %207 : vector<8x1xf32> to vector<8x8xf32>
    %209 = arith.subf %205, %208 : vector<8x8xf32>
    %210 = math.exp %209 : vector<8x8xf32>
    %cst_69 = arith.constant dense<0.000000e+00> : vector<8xf32>
    %211 = vector.multi_reduction <add>, %210, %cst_69 [1] : vector<8x8xf32> to vector<8xf32>
    %212 = vector.shape_cast %211 : vector<8xf32> to vector<8x1xf32>
    %213 = tpu.reciprocal %212 {approx = true} : vector<8x1xf32> -> vector<8x1xf32>
    %214 = vector.broadcast %213 : vector<8x1xf32> to vector<8x8xf32>
    %215 = arith.mulf %210, %214 : vector<8x8xf32>
    %216 = arith.truncf %215 : vector<8x8xf32> to vector<8x8xbf16>
    %217 = vector.extract_strided_slice %140 {offsets = [0, 96], sizes = [8, 32], strides = [1, 1]} : vector<8x128xbf16> to vector<8x32xbf16>
    %cst_70 = arith.constant dense<0.000000e+00> : vector<8x32xf32>
    %218 = tpu.matmul %216, %217, %cst_70 {dimension_numbers = #tpu.dot_dimension_numbers<[1], [0], [0], [1], [0, 0, 1, 1], [], []>} : vector<8x8xbf16>, vector<8x32xbf16>, vector<8x32xf32> -> vector<8x32xf32>
    %219 = arith.addf %200, %218 : vector<8x32xf32>
    %220 = tpu.concatenate %133, %219 in 0 : vector<8x32xf32>, vector<8x32xf32> -> vector<16x32xf32>
    %221 = arith.addf %1, %220 : vector<16x32xf32>
    %222 = vector.broadcast %12 : vector<1x32xf32> to vector<16x32xf32>
    %223 = arith.addf %221, %222 : vector<16x32xf32>
    %224 = vector.extract_strided_slice %4 {offsets = [1, 0], sizes = [1, 32], strides = [1, 1]} : vector<2x32xf32> to vector<1x32xf32>
    %225 = vector.extract_strided_slice %6 {offsets = [1, 0], sizes = [1, 32], strides = [1, 1]} : vector<2x32xf32> to vector<1x32xf32>
    %cst_71 = arith.constant dense<0.000000e+00> : vector<16xf32>
    %226 = vector.multi_reduction <add>, %223, %cst_71 [1] : vector<16x32xf32> to vector<16xf32>
    %227 = vector.shape_cast %226 : vector<16xf32> to vector<16x1xf32>
    %cst_72 = arith.constant 3.200000e+01 : f32
    %228 = vector.broadcast %cst_72 : f32 to vector<16x1xf32>
    %229 = arith.divf %227, %228 : vector<16x1xf32>
    %230 = vector.broadcast %229 : vector<16x1xf32> to vector<16x32xf32>
    %231 = arith.subf %223, %230 : vector<16x32xf32>
    %232 = arith.mulf %231, %231 : vector<16x32xf32>
    %cst_73 = arith.constant dense<0.000000e+00> : vector<16xf32>
    %233 = vector.multi_reduction <add>, %232, %cst_73 [1] : vector<16x32xf32> to vector<16xf32>
    %234 = vector.shape_cast %233 : vector<16xf32> to vector<16x1xf32>
    %cst_74 = arith.constant 0.0322580636 : f32
    %235 = vector.broadcast %cst_74 : f32 to vector<16x1xf32>
    %236 = arith.mulf %234, %235 : vector<16x1xf32>
    %237 = math.sqrt %236 : vector<16x1xf32>
    %cst_75 = arith.constant 9.99999997E-7 : f32
    %238 = vector.broadcast %cst_75 : f32 to vector<16x1xf32>
    %239 = arith.addf %237, %238 : vector<16x1xf32>
    %240 = tpu.reciprocal %239 {approx = true} : vector<16x1xf32> -> vector<16x1xf32>
    %241 = vector.broadcast %240 : vector<16x1xf32> to vector<16x32xf32>
    %242 = arith.mulf %231, %241 : vector<16x32xf32>
    %243 = vector.broadcast %224 : vector<1x32xf32> to vector<16x32xf32>
    %244 = arith.mulf %243, %242 : vector<16x32xf32>
    %245 = vector.broadcast %225 : vector<1x32xf32> to vector<16x32xf32>
    %246 = arith.addf %244, %245 : vector<16x32xf32>
    %247 = arith.truncf %246 : vector<16x32xf32> to vector<16x32xbf16>
    %cst_76 = arith.constant dense<0.000000e+00> : vector<16x64xf32>
    %248 = tpu.matmul %247, %14, %cst_76 {dimension_numbers = #tpu.dot_dimension_numbers<[1], [0], [0], [1], [0, 0, 1, 1], [], []>} : vector<16x32xbf16>, vector<32x64xbf16>, vector<16x64xf32> -> vector<16x64xf32>
    %249 = vector.broadcast %16 : vector<1x64xf32> to vector<16x64xf32>
    %250 = arith.addf %248, %249 : vector<16x64xf32>
    %cst_77 = arith.constant 0.000000e+00 : f32
    %251 = vector.broadcast %cst_77 : f32 to vector<16x64xf32>
    %252 = arith.maximumf %250, %251 : vector<16x64xf32>
    %253 = arith.truncf %252 : vector<16x64xf32> to vector<16x64xbf16>
    %cst_78 = arith.constant dense<0.000000e+00> : vector<16x32xf32>
    %254 = tpu.matmul %253, %18, %cst_78 {dimension_numbers = #tpu.dot_dimension_numbers<[1], [0], [0], [1], [0, 0, 1, 1], [], []>} : vector<16x64xbf16>, vector<64x32xbf16>, vector<16x32xf32> -> vector<16x32xf32>
    %255 = vector.broadcast %20 : vector<1x32xf32> to vector<16x32xf32>
    %256 = arith.addf %254, %255 : vector<16x32xf32>
    %257 = arith.addf %223, %256 : vector<16x32xf32>
    %c1 = arith.constant 1 : index
    %c0_79 = arith.constant 0 : index
    %c0_80 = arith.constant 0 : index
    %258 = vector.load %arg10[%c1, %c0_79, %c0_80] : memref<2x2x32xf32, #tpu.memory_space<vmem>>, vector<1x2x32xf32>
    %259 = vector.shape_cast %258 : vector<1x2x32xf32> to vector<2x32xf32>
    %c1_81 = arith.constant 1 : index
    %c0_82 = arith.constant 0 : index
    %c0_83 = arith.constant 0 : index
    %260 = vector.load %arg11[%c1_81, %c0_82, %c0_83] : memref<2x2x32xf32, #tpu.memory_space<vmem>>, vector<1x2x32xf32>
    %261 = vector.shape_cast %260 : vector<1x2x32xf32> to vector<2x32xf32>
    %c1_84 = arith.constant 1 : index
    %c0_85 = arith.constant 0 : index
    %c0_86 = arith.constant 0 : index
    %262 = vector.load %arg3[%c1_84, %c0_85, %c0_86] : memref<2x32x192xbf16, #tpu.memory_space<vmem>>, vector<1x32x192xbf16>
    %263 = vector.shape_cast %262 : vector<1x32x192xbf16> to vector<32x192xbf16>
    %c1_87 = arith.constant 1 : index
    %c0_88 = arith.constant 0 : index
    %c0_89 = arith.constant 0 : index
    %264 = vector.load %arg4[%c1_87, %c0_88, %c0_89] : memref<2x1x192xf32, #tpu.memory_space<vmem>>, vector<1x1x192xf32>
    %265 = vector.shape_cast %264 : vector<1x1x192xf32> to vector<1x192xf32>
    %c1_90 = arith.constant 1 : index
    %c0_91 = arith.constant 0 : index
    %c0_92 = arith.constant 0 : index
    %266 = vector.load %arg5[%c1_90, %c0_91, %c0_92] : memref<2x1x32xf32, #tpu.memory_space<vmem>>, vector<1x1x32xf32>
    %267 = vector.shape_cast %266 : vector<1x1x32xf32> to vector<1x32xf32>
    %c1_93 = arith.constant 1 : index
    %c0_94 = arith.constant 0 : index
    %c0_95 = arith.constant 0 : index
    %268 = vector.load %arg6[%c1_93, %c0_94, %c0_95] : memref<2x32x64xbf16, #tpu.memory_space<vmem>>, vector<1x32x64xbf16>
    %269 = vector.shape_cast %268 : vector<1x32x64xbf16> to vector<32x64xbf16>
    %c1_96 = arith.constant 1 : index
    %c0_97 = arith.constant 0 : index
    %c0_98 = arith.constant 0 : index
    %270 = vector.load %arg7[%c1_96, %c0_97, %c0_98] : memref<2x1x64xf32, #tpu.memory_space<vmem>>, vector<1x1x64xf32>
    %271 = vector.shape_cast %270 : vector<1x1x64xf32> to vector<1x64xf32>
    %c1_99 = arith.constant 1 : index
    %c0_100 = arith.constant 0 : index
    %c0_101 = arith.constant 0 : index
    %272 = vector.load %arg8[%c1_99, %c0_100, %c0_101] : memref<2x64x32xbf16, #tpu.memory_space<vmem>>, vector<1x64x32xbf16>
    %273 = vector.shape_cast %272 : vector<1x64x32xbf16> to vector<64x32xbf16>
    %c1_102 = arith.constant 1 : index
    %c0_103 = arith.constant 0 : index
    %c0_104 = arith.constant 0 : index
    %274 = vector.load %arg9[%c1_102, %c0_103, %c0_104] : memref<2x1x32xf32, #tpu.memory_space<vmem>>, vector<1x1x32xf32>
    %275 = vector.shape_cast %274 : vector<1x1x32xf32> to vector<1x32xf32>
    %276 = vector.extract_strided_slice %259 {offsets = [0, 0], sizes = [1, 32], strides = [1, 1]} : vector<2x32xf32> to vector<1x32xf32>
    %277 = vector.extract_strided_slice %261 {offsets = [0, 0], sizes = [1, 32], strides = [1, 1]} : vector<2x32xf32> to vector<1x32xf32>
    %cst_105 = arith.constant dense<0.000000e+00> : vector<16xf32>
    %278 = vector.multi_reduction <add>, %257, %cst_105 [1] : vector<16x32xf32> to vector<16xf32>
    %279 = vector.shape_cast %278 : vector<16xf32> to vector<16x1xf32>
    %cst_106 = arith.constant 3.200000e+01 : f32
    %280 = vector.broadcast %cst_106 : f32 to vector<16x1xf32>
    %281 = arith.divf %279, %280 : vector<16x1xf32>
    %282 = vector.broadcast %281 : vector<16x1xf32> to vector<16x32xf32>
    %283 = arith.subf %257, %282 : vector<16x32xf32>
    %284 = arith.mulf %283, %283 : vector<16x32xf32>
    %cst_107 = arith.constant dense<0.000000e+00> : vector<16xf32>
    %285 = vector.multi_reduction <add>, %284, %cst_107 [1] : vector<16x32xf32> to vector<16xf32>
    %286 = vector.shape_cast %285 : vector<16xf32> to vector<16x1xf32>
    %cst_108 = arith.constant 0.0322580636 : f32
    %287 = vector.broadcast %cst_108 : f32 to vector<16x1xf32>
    %288 = arith.mulf %286, %287 : vector<16x1xf32>
    %289 = math.sqrt %288 : vector<16x1xf32>
    %cst_109 = arith.constant 9.99999997E-7 : f32
    %290 = vector.broadcast %cst_109 : f32 to vector<16x1xf32>
    %291 = arith.addf %289, %290 : vector<16x1xf32>
    %292 = tpu.reciprocal %291 {approx = true} : vector<16x1xf32> -> vector<16x1xf32>
    %293 = vector.broadcast %292 : vector<16x1xf32> to vector<16x32xf32>
    %294 = arith.mulf %283, %293 : vector<16x32xf32>
    %295 = vector.broadcast %276 : vector<1x32xf32> to vector<16x32xf32>
    %296 = arith.mulf %295, %294 : vector<16x32xf32>
    %297 = vector.broadcast %277 : vector<1x32xf32> to vector<16x32xf32>
    %298 = arith.addf %296, %297 : vector<16x32xf32>
    %299 = arith.truncf %298 : vector<16x32xf32> to vector<16x32xbf16>
    %cst_110 = arith.constant dense<0.000000e+00> : vector<16x192xf32>
    %300 = tpu.matmul %299, %263, %cst_110 {dimension_numbers = #tpu.dot_dimension_numbers<[1], [0], [0], [1], [0, 0, 1, 1], [], []>} : vector<16x32xbf16>, vector<32x192xbf16>, vector<16x192xf32> -> vector<16x192xf32>
    %301 = vector.broadcast %265 : vector<1x192xf32> to vector<16x192xf32>
    %302 = arith.addf %300, %301 : vector<16x192xf32>
    %303 = vector.extract_strided_slice %302 {offsets = [0, 0], sizes = [8, 32], strides = [1, 1]} : vector<16x192xf32> to vector<8x32xf32>
    %304 = arith.truncf %303 : vector<8x32xf32> to vector<8x32xbf16>
    %305 = vector.extract_strided_slice %302 {offsets = [0, 32], sizes = [8, 32], strides = [1, 1]} : vector<16x192xf32> to vector<8x32xf32>
    %306 = tpu.transpose %305, [1, 0] : vector<8x32xf32> -> vector<32x8xf32>
    %307 = arith.truncf %306 : vector<32x8xf32> to vector<32x8xbf16>
    %308 = vector.extract_strided_slice %302 {offsets = [0, 64], sizes = [8, 128], strides = [1, 1]} : vector<16x192xf32> to vector<8x128xf32>
    %309 = arith.truncf %308 : vector<8x128xf32> to vector<8x128xbf16>
    %310 = vector.extract_strided_slice %2 {offsets = [0, 0, 0], sizes = [1, 1, 8], strides = [1, 1, 1]} : vector<2x1x8xf32> to vector<1x1x8xf32>
    %311 = vector.shape_cast %310 : vector<1x1x8xf32> to vector<1x8xf32>
    %cst_111 = arith.constant 0.000000e+00 : f32
    %312 = vector.broadcast %cst_111 : f32 to vector<8x32xf32>
    %313 = vector.extract_strided_slice %304 {offsets = [0, 0], sizes = [8, 8], strides = [1, 1]} : vector<8x32xbf16> to vector<8x8xbf16>
    %314 = vector.extract_strided_slice %307 {offsets = [0, 0], sizes = [8, 8], strides = [1, 1]} : vector<32x8xbf16> to vector<8x8xbf16>
    %cst_112 = arith.constant dense<0.000000e+00> : vector<8x8xf32>
    %315 = tpu.matmul %313, %314, %cst_112 {dimension_numbers = #tpu.dot_dimension_numbers<[1], [0], [0], [1], [0, 0, 1, 1], [], []>} : vector<8x8xbf16>, vector<8x8xbf16>, vector<8x8xf32> -> vector<8x8xf32>
    %316 = vector.broadcast %311 : vector<1x8xf32> to vector<8x8xf32>
    %317 = arith.addf %315, %316 : vector<8x8xf32>
    %cst_113 = arith.constant dense<0xFF800000> : vector<8xf32>
    %318 = vector.multi_reduction <maximumf>, %317, %cst_113 [1] : vector<8x8xf32> to vector<8xf32>
    %319 = vector.shape_cast %318 : vector<8xf32> to vector<8x1xf32>
    %320 = vector.broadcast %319 : vector<8x1xf32> to vector<8x8xf32>
    %321 = arith.subf %317, %320 : vector<8x8xf32>
    %322 = math.exp %321 : vector<8x8xf32>
    %cst_114 = arith.constant dense<0.000000e+00> : vector<8xf32>
    %323 = vector.multi_reduction <add>, %322, %cst_114 [1] : vector<8x8xf32> to vector<8xf32>
    %324 = vector.shape_cast %323 : vector<8xf32> to vector<8x1xf32>
    %325 = tpu.reciprocal %324 {approx = true} : vector<8x1xf32> -> vector<8x1xf32>
    %326 = vector.broadcast %325 : vector<8x1xf32> to vector<8x8xf32>
    %327 = arith.mulf %322, %326 : vector<8x8xf32>
    %328 = arith.truncf %327 : vector<8x8xf32> to vector<8x8xbf16>
    %329 = vector.extract_strided_slice %309 {offsets = [0, 0], sizes = [8, 32], strides = [1, 1]} : vector<8x128xbf16> to vector<8x32xbf16>
    %cst_115 = arith.constant dense<0.000000e+00> : vector<8x32xf32>
    %330 = tpu.matmul %328, %329, %cst_115 {dimension_numbers = #tpu.dot_dimension_numbers<[1], [0], [0], [1], [0, 0, 1, 1], [], []>} : vector<8x8xbf16>, vector<8x32xbf16>, vector<8x32xf32> -> vector<8x32xf32>
    %331 = arith.addf %312, %330 : vector<8x32xf32>
    %332 = vector.extract_strided_slice %304 {offsets = [0, 8], sizes = [8, 8], strides = [1, 1]} : vector<8x32xbf16> to vector<8x8xbf16>
    %333 = vector.extract_strided_slice %307 {offsets = [8, 0], sizes = [8, 8], strides = [1, 1]} : vector<32x8xbf16> to vector<8x8xbf16>
    %cst_116 = arith.constant dense<0.000000e+00> : vector<8x8xf32>
    %334 = tpu.matmul %332, %333, %cst_116 {dimension_numbers = #tpu.dot_dimension_numbers<[1], [0], [0], [1], [0, 0, 1, 1], [], []>} : vector<8x8xbf16>, vector<8x8xbf16>, vector<8x8xf32> -> vector<8x8xf32>
    %335 = vector.broadcast %311 : vector<1x8xf32> to vector<8x8xf32>
    %336 = arith.addf %334, %335 : vector<8x8xf32>
    %cst_117 = arith.constant dense<0xFF800000> : vector<8xf32>
    %337 = vector.multi_reduction <maximumf>, %336, %cst_117 [1] : vector<8x8xf32> to vector<8xf32>
    %338 = vector.shape_cast %337 : vector<8xf32> to vector<8x1xf32>
    %339 = vector.broadcast %338 : vector<8x1xf32> to vector<8x8xf32>
    %340 = arith.subf %336, %339 : vector<8x8xf32>
    %341 = math.exp %340 : vector<8x8xf32>
    %cst_118 = arith.constant dense<0.000000e+00> : vector<8xf32>
    %342 = vector.multi_reduction <add>, %341, %cst_118 [1] : vector<8x8xf32> to vector<8xf32>
    %343 = vector.shape_cast %342 : vector<8xf32> to vector<8x1xf32>
    %344 = tpu.reciprocal %343 {approx = true} : vector<8x1xf32> -> vector<8x1xf32>
    %345 = vector.broadcast %344 : vector<8x1xf32> to vector<8x8xf32>
    %346 = arith.mulf %341, %345 : vector<8x8xf32>
    %347 = arith.truncf %346 : vector<8x8xf32> to vector<8x8xbf16>
    %348 = vector.extract_strided_slice %309 {offsets = [0, 32], sizes = [8, 32], strides = [1, 1]} : vector<8x128xbf16> to vector<8x32xbf16>
    %cst_119 = arith.constant dense<0.000000e+00> : vector<8x32xf32>
    %349 = tpu.matmul %347, %348, %cst_119 {dimension_numbers = #tpu.dot_dimension_numbers<[1], [0], [0], [1], [0, 0, 1, 1], [], []>} : vector<8x8xbf16>, vector<8x32xbf16>, vector<8x32xf32> -> vector<8x32xf32>
    %350 = arith.addf %331, %349 : vector<8x32xf32>
    %351 = vector.extract_strided_slice %304 {offsets = [0, 16], sizes = [8, 8], strides = [1, 1]} : vector<8x32xbf16> to vector<8x8xbf16>
    %352 = vector.extract_strided_slice %307 {offsets = [16, 0], sizes = [8, 8], strides = [1, 1]} : vector<32x8xbf16> to vector<8x8xbf16>
    %cst_120 = arith.constant dense<0.000000e+00> : vector<8x8xf32>
    %353 = tpu.matmul %351, %352, %cst_120 {dimension_numbers = #tpu.dot_dimension_numbers<[1], [0], [0], [1], [0, 0, 1, 1], [], []>} : vector<8x8xbf16>, vector<8x8xbf16>, vector<8x8xf32> -> vector<8x8xf32>
    %354 = vector.broadcast %311 : vector<1x8xf32> to vector<8x8xf32>
    %355 = arith.addf %353, %354 : vector<8x8xf32>
    %cst_121 = arith.constant dense<0xFF800000> : vector<8xf32>
    %356 = vector.multi_reduction <maximumf>, %355, %cst_121 [1] : vector<8x8xf32> to vector<8xf32>
    %357 = vector.shape_cast %356 : vector<8xf32> to vector<8x1xf32>
    %358 = vector.broadcast %357 : vector<8x1xf32> to vector<8x8xf32>
    %359 = arith.subf %355, %358 : vector<8x8xf32>
    %360 = math.exp %359 : vector<8x8xf32>
    %cst_122 = arith.constant dense<0.000000e+00> : vector<8xf32>
    %361 = vector.multi_reduction <add>, %360, %cst_122 [1] : vector<8x8xf32> to vector<8xf32>
    %362 = vector.shape_cast %361 : vector<8xf32> to vector<8x1xf32>
    %363 = tpu.reciprocal %362 {approx = true} : vector<8x1xf32> -> vector<8x1xf32>
    %364 = vector.broadcast %363 : vector<8x1xf32> to vector<8x8xf32>
    %365 = arith.mulf %360, %364 : vector<8x8xf32>
    %366 = arith.truncf %365 : vector<8x8xf32> to vector<8x8xbf16>
    %367 = vector.extract_strided_slice %309 {offsets = [0, 64], sizes = [8, 32], strides = [1, 1]} : vector<8x128xbf16> to vector<8x32xbf16>
    %cst_123 = arith.constant dense<0.000000e+00> : vector<8x32xf32>
    %368 = tpu.matmul %366, %367, %cst_123 {dimension_numbers = #tpu.dot_dimension_numbers<[1], [0], [0], [1], [0, 0, 1, 1], [], []>} : vector<8x8xbf16>, vector<8x32xbf16>, vector<8x32xf32> -> vector<8x32xf32>
    %369 = arith.addf %350, %368 : vector<8x32xf32>
    %370 = vector.extract_strided_slice %304 {offsets = [0, 24], sizes = [8, 8], strides = [1, 1]} : vector<8x32xbf16> to vector<8x8xbf16>
    %371 = vector.extract_strided_slice %307 {offsets = [24, 0], sizes = [8, 8], strides = [1, 1]} : vector<32x8xbf16> to vector<8x8xbf16>
    %cst_124 = arith.constant dense<0.000000e+00> : vector<8x8xf32>
    %372 = tpu.matmul %370, %371, %cst_124 {dimension_numbers = #tpu.dot_dimension_numbers<[1], [0], [0], [1], [0, 0, 1, 1], [], []>} : vector<8x8xbf16>, vector<8x8xbf16>, vector<8x8xf32> -> vector<8x8xf32>
    %373 = vector.broadcast %311 : vector<1x8xf32> to vector<8x8xf32>
    %374 = arith.addf %372, %373 : vector<8x8xf32>
    %cst_125 = arith.constant dense<0xFF800000> : vector<8xf32>
    %375 = vector.multi_reduction <maximumf>, %374, %cst_125 [1] : vector<8x8xf32> to vector<8xf32>
    %376 = vector.shape_cast %375 : vector<8xf32> to vector<8x1xf32>
    %377 = vector.broadcast %376 : vector<8x1xf32> to vector<8x8xf32>
    %378 = arith.subf %374, %377 : vector<8x8xf32>
    %379 = math.exp %378 : vector<8x8xf32>
    %cst_126 = arith.constant dense<0.000000e+00> : vector<8xf32>
    %380 = vector.multi_reduction <add>, %379, %cst_126 [1] : vector<8x8xf32> to vector<8xf32>
    %381 = vector.shape_cast %380 : vector<8xf32> to vector<8x1xf32>
    %382 = tpu.reciprocal %381 {approx = true} : vector<8x1xf32> -> vector<8x1xf32>
    %383 = vector.broadcast %382 : vector<8x1xf32> to vector<8x8xf32>
    %384 = arith.mulf %379, %383 : vector<8x8xf32>
    %385 = arith.truncf %384 : vector<8x8xf32> to vector<8x8xbf16>
    %386 = vector.extract_strided_slice %309 {offsets = [0, 96], sizes = [8, 32], strides = [1, 1]} : vector<8x128xbf16> to vector<8x32xbf16>
    %cst_127 = arith.constant dense<0.000000e+00> : vector<8x32xf32>
    %387 = tpu.matmul %385, %386, %cst_127 {dimension_numbers = #tpu.dot_dimension_numbers<[1], [0], [0], [1], [0, 0, 1, 1], [], []>} : vector<8x8xbf16>, vector<8x32xbf16>, vector<8x32xf32> -> vector<8x32xf32>
    %388 = arith.addf %369, %387 : vector<8x32xf32>
    %389 = vector.extract_strided_slice %302 {offsets = [8, 0], sizes = [8, 32], strides = [1, 1]} : vector<16x192xf32> to vector<8x32xf32>
    %390 = arith.truncf %389 : vector<8x32xf32> to vector<8x32xbf16>
    %391 = vector.extract_strided_slice %302 {offsets = [8, 32], sizes = [8, 32], strides = [1, 1]} : vector<16x192xf32> to vector<8x32xf32>
    %392 = tpu.transpose %391, [1, 0] : vector<8x32xf32> -> vector<32x8xf32>
    %393 = arith.truncf %392 : vector<32x8xf32> to vector<32x8xbf16>
    %394 = vector.extract_strided_slice %302 {offsets = [8, 64], sizes = [8, 128], strides = [1, 1]} : vector<16x192xf32> to vector<8x128xf32>
    %395 = arith.truncf %394 : vector<8x128xf32> to vector<8x128xbf16>
    %396 = vector.extract_strided_slice %2 {offsets = [1, 0, 0], sizes = [1, 1, 8], strides = [1, 1, 1]} : vector<2x1x8xf32> to vector<1x1x8xf32>
    %397 = vector.shape_cast %396 : vector<1x1x8xf32> to vector<1x8xf32>
    %cst_128 = arith.constant 0.000000e+00 : f32
    %398 = vector.broadcast %cst_128 : f32 to vector<8x32xf32>
    %399 = vector.extract_strided_slice %390 {offsets = [0, 0], sizes = [8, 8], strides = [1, 1]} : vector<8x32xbf16> to vector<8x8xbf16>
    %400 = vector.extract_strided_slice %393 {offsets = [0, 0], sizes = [8, 8], strides = [1, 1]} : vector<32x8xbf16> to vector<8x8xbf16>
    %cst_129 = arith.constant dense<0.000000e+00> : vector<8x8xf32>
    %401 = tpu.matmul %399, %400, %cst_129 {dimension_numbers = #tpu.dot_dimension_numbers<[1], [0], [0], [1], [0, 0, 1, 1], [], []>} : vector<8x8xbf16>, vector<8x8xbf16>, vector<8x8xf32> -> vector<8x8xf32>
    %402 = vector.broadcast %397 : vector<1x8xf32> to vector<8x8xf32>
    %403 = arith.addf %401, %402 : vector<8x8xf32>
    %cst_130 = arith.constant dense<0xFF800000> : vector<8xf32>
    %404 = vector.multi_reduction <maximumf>, %403, %cst_130 [1] : vector<8x8xf32> to vector<8xf32>
    %405 = vector.shape_cast %404 : vector<8xf32> to vector<8x1xf32>
    %406 = vector.broadcast %405 : vector<8x1xf32> to vector<8x8xf32>
    %407 = arith.subf %403, %406 : vector<8x8xf32>
    %408 = math.exp %407 : vector<8x8xf32>
    %cst_131 = arith.constant dense<0.000000e+00> : vector<8xf32>
    %409 = vector.multi_reduction <add>, %408, %cst_131 [1] : vector<8x8xf32> to vector<8xf32>
    %410 = vector.shape_cast %409 : vector<8xf32> to vector<8x1xf32>
    %411 = tpu.reciprocal %410 {approx = true} : vector<8x1xf32> -> vector<8x1xf32>
    %412 = vector.broadcast %411 : vector<8x1xf32> to vector<8x8xf32>
    %413 = arith.mulf %408, %412 : vector<8x8xf32>
    %414 = arith.truncf %413 : vector<8x8xf32> to vector<8x8xbf16>
    %415 = vector.extract_strided_slice %395 {offsets = [0, 0], sizes = [8, 32], strides = [1, 1]} : vector<8x128xbf16> to vector<8x32xbf16>
    %cst_132 = arith.constant dense<0.000000e+00> : vector<8x32xf32>
    %416 = tpu.matmul %414, %415, %cst_132 {dimension_numbers = #tpu.dot_dimension_numbers<[1], [0], [0], [1], [0, 0, 1, 1], [], []>} : vector<8x8xbf16>, vector<8x32xbf16>, vector<8x32xf32> -> vector<8x32xf32>
    %417 = arith.addf %398, %416 : vector<8x32xf32>
    %418 = vector.extract_strided_slice %390 {offsets = [0, 8], sizes = [8, 8], strides = [1, 1]} : vector<8x32xbf16> to vector<8x8xbf16>
    %419 = vector.extract_strided_slice %393 {offsets = [8, 0], sizes = [8, 8], strides = [1, 1]} : vector<32x8xbf16> to vector<8x8xbf16>
    %cst_133 = arith.constant dense<0.000000e+00> : vector<8x8xf32>
    %420 = tpu.matmul %418, %419, %cst_133 {dimension_numbers = #tpu.dot_dimension_numbers<[1], [0], [0], [1], [0, 0, 1, 1], [], []>} : vector<8x8xbf16>, vector<8x8xbf16>, vector<8x8xf32> -> vector<8x8xf32>
    %421 = vector.broadcast %397 : vector<1x8xf32> to vector<8x8xf32>
    %422 = arith.addf %420, %421 : vector<8x8xf32>
    %cst_134 = arith.constant dense<0xFF800000> : vector<8xf32>
    %423 = vector.multi_reduction <maximumf>, %422, %cst_134 [1] : vector<8x8xf32> to vector<8xf32>
    %424 = vector.shape_cast %423 : vector<8xf32> to vector<8x1xf32>
    %425 = vector.broadcast %424 : vector<8x1xf32> to vector<8x8xf32>
    %426 = arith.subf %422, %425 : vector<8x8xf32>
    %427 = math.exp %426 : vector<8x8xf32>
    %cst_135 = arith.constant dense<0.000000e+00> : vector<8xf32>
    %428 = vector.multi_reduction <add>, %427, %cst_135 [1] : vector<8x8xf32> to vector<8xf32>
    %429 = vector.shape_cast %428 : vector<8xf32> to vector<8x1xf32>
    %430 = tpu.reciprocal %429 {approx = true} : vector<8x1xf32> -> vector<8x1xf32>
    %431 = vector.broadcast %430 : vector<8x1xf32> to vector<8x8xf32>
    %432 = arith.mulf %427, %431 : vector<8x8xf32>
    %433 = arith.truncf %432 : vector<8x8xf32> to vector<8x8xbf16>
    %434 = vector.extract_strided_slice %395 {offsets = [0, 32], sizes = [8, 32], strides = [1, 1]} : vector<8x128xbf16> to vector<8x32xbf16>
    %cst_136 = arith.constant dense<0.000000e+00> : vector<8x32xf32>
    %435 = tpu.matmul %433, %434, %cst_136 {dimension_numbers = #tpu.dot_dimension_numbers<[1], [0], [0], [1], [0, 0, 1, 1], [], []>} : vector<8x8xbf16>, vector<8x32xbf16>, vector<8x32xf32> -> vector<8x32xf32>
    %436 = arith.addf %417, %435 : vector<8x32xf32>
    %437 = vector.extract_strided_slice %390 {offsets = [0, 16], sizes = [8, 8], strides = [1, 1]} : vector<8x32xbf16> to vector<8x8xbf16>
    %438 = vector.extract_strided_slice %393 {offsets = [16, 0], sizes = [8, 8], strides = [1, 1]} : vector<32x8xbf16> to vector<8x8xbf16>
    %cst_137 = arith.constant dense<0.000000e+00> : vector<8x8xf32>
    %439 = tpu.matmul %437, %438, %cst_137 {dimension_numbers = #tpu.dot_dimension_numbers<[1], [0], [0], [1], [0, 0, 1, 1], [], []>} : vector<8x8xbf16>, vector<8x8xbf16>, vector<8x8xf32> -> vector<8x8xf32>
    %440 = vector.broadcast %397 : vector<1x8xf32> to vector<8x8xf32>
    %441 = arith.addf %439, %440 : vector<8x8xf32>
    %cst_138 = arith.constant dense<0xFF800000> : vector<8xf32>
    %442 = vector.multi_reduction <maximumf>, %441, %cst_138 [1] : vector<8x8xf32> to vector<8xf32>
    %443 = vector.shape_cast %442 : vector<8xf32> to vector<8x1xf32>
    %444 = vector.broadcast %443 : vector<8x1xf32> to vector<8x8xf32>
    %445 = arith.subf %441, %444 : vector<8x8xf32>
    %446 = math.exp %445 : vector<8x8xf32>
    %cst_139 = arith.constant dense<0.000000e+00> : vector<8xf32>
    %447 = vector.multi_reduction <add>, %446, %cst_139 [1] : vector<8x8xf32> to vector<8xf32>
    %448 = vector.shape_cast %447 : vector<8xf32> to vector<8x1xf32>
    %449 = tpu.reciprocal %448 {approx = true} : vector<8x1xf32> -> vector<8x1xf32>
    %450 = vector.broadcast %449 : vector<8x1xf32> to vector<8x8xf32>
    %451 = arith.mulf %446, %450 : vector<8x8xf32>
    %452 = arith.truncf %451 : vector<8x8xf32> to vector<8x8xbf16>
    %453 = vector.extract_strided_slice %395 {offsets = [0, 64], sizes = [8, 32], strides = [1, 1]} : vector<8x128xbf16> to vector<8x32xbf16>
    %cst_140 = arith.constant dense<0.000000e+00> : vector<8x32xf32>
    %454 = tpu.matmul %452, %453, %cst_140 {dimension_numbers = #tpu.dot_dimension_numbers<[1], [0], [0], [1], [0, 0, 1, 1], [], []>} : vector<8x8xbf16>, vector<8x32xbf16>, vector<8x32xf32> -> vector<8x32xf32>
    %455 = arith.addf %436, %454 : vector<8x32xf32>
    %456 = vector.extract_strided_slice %390 {offsets = [0, 24], sizes = [8, 8], strides = [1, 1]} : vector<8x32xbf16> to vector<8x8xbf16>
    %457 = vector.extract_strided_slice %393 {offsets = [24, 0], sizes = [8, 8], strides = [1, 1]} : vector<32x8xbf16> to vector<8x8xbf16>
    %cst_141 = arith.constant dense<0.000000e+00> : vector<8x8xf32>
    %458 = tpu.matmul %456, %457, %cst_141 {dimension_numbers = #tpu.dot_dimension_numbers<[1], [0], [0], [1], [0, 0, 1, 1], [], []>} : vector<8x8xbf16>, vector<8x8xbf16>, vector<8x8xf32> -> vector<8x8xf32>
    %459 = vector.broadcast %397 : vector<1x8xf32> to vector<8x8xf32>
    %460 = arith.addf %458, %459 : vector<8x8xf32>
    %cst_142 = arith.constant dense<0xFF800000> : vector<8xf32>
    %461 = vector.multi_reduction <maximumf>, %460, %cst_142 [1] : vector<8x8xf32> to vector<8xf32>
    %462 = vector.shape_cast %461 : vector<8xf32> to vector<8x1xf32>
    %463 = vector.broadcast %462 : vector<8x1xf32> to vector<8x8xf32>
    %464 = arith.subf %460, %463 : vector<8x8xf32>
    %465 = math.exp %464 : vector<8x8xf32>
    %cst_143 = arith.constant dense<0.000000e+00> : vector<8xf32>
    %466 = vector.multi_reduction <add>, %465, %cst_143 [1] : vector<8x8xf32> to vector<8xf32>
    %467 = vector.shape_cast %466 : vector<8xf32> to vector<8x1xf32>
    %468 = tpu.reciprocal %467 {approx = true} : vector<8x1xf32> -> vector<8x1xf32>
    %469 = vector.broadcast %468 : vector<8x1xf32> to vector<8x8xf32>
    %470 = arith.mulf %465, %469 : vector<8x8xf32>
    %471 = arith.truncf %470 : vector<8x8xf32> to vector<8x8xbf16>
    %472 = vector.extract_strided_slice %395 {offsets = [0, 96], sizes = [8, 32], strides = [1, 1]} : vector<8x128xbf16> to vector<8x32xbf16>
    %cst_144 = arith.constant dense<0.000000e+00> : vector<8x32xf32>
    %473 = tpu.matmul %471, %472, %cst_144 {dimension_numbers = #tpu.dot_dimension_numbers<[1], [0], [0], [1], [0, 0, 1, 1], [], []>} : vector<8x8xbf16>, vector<8x32xbf16>, vector<8x32xf32> -> vector<8x32xf32>
    %474 = arith.addf %455, %473 : vector<8x32xf32>
    %475 = tpu.concatenate %388, %474 in 0 : vector<8x32xf32>, vector<8x32xf32> -> vector<16x32xf32>
    %476 = arith.addf %257, %475 : vector<16x32xf32>
    %477 = vector.broadcast %267 : vector<1x32xf32> to vector<16x32xf32>
    %478 = arith.addf %476, %477 : vector<16x32xf32>
    %479 = vector.extract_strided_slice %259 {offsets = [1, 0], sizes = [1, 32], strides = [1, 1]} : vector<2x32xf32> to vector<1x32xf32>
    %480 = vector.extract_strided_slice %261 {offsets = [1, 0], sizes = [1, 32], strides = [1, 1]} : vector<2x32xf32> to vector<1x32xf32>
    %cst_145 = arith.constant dense<0.000000e+00> : vector<16xf32>
    %481 = vector.multi_reduction <add>, %478, %cst_145 [1] : vector<16x32xf32> to vector<16xf32>
    %482 = vector.shape_cast %481 : vector<16xf32> to vector<16x1xf32>
    %cst_146 = arith.constant 3.200000e+01 : f32
    %483 = vector.broadcast %cst_146 : f32 to vector<16x1xf32>
    %484 = arith.divf %482, %483 : vector<16x1xf32>
    %485 = vector.broadcast %484 : vector<16x1xf32> to vector<16x32xf32>
    %486 = arith.subf %478, %485 : vector<16x32xf32>
    %487 = arith.mulf %486, %486 : vector<16x32xf32>
    %cst_147 = arith.constant dense<0.000000e+00> : vector<16xf32>
    %488 = vector.multi_reduction <add>, %487, %cst_147 [1] : vector<16x32xf32> to vector<16xf32>
    %489 = vector.shape_cast %488 : vector<16xf32> to vector<16x1xf32>
    %cst_148 = arith.constant 0.0322580636 : f32
    %490 = vector.broadcast %cst_148 : f32 to vector<16x1xf32>
    %491 = arith.mulf %489, %490 : vector<16x1xf32>
    %492 = math.sqrt %491 : vector<16x1xf32>
    %cst_149 = arith.constant 9.99999997E-7 : f32
    %493 = vector.broadcast %cst_149 : f32 to vector<16x1xf32>
    %494 = arith.addf %492, %493 : vector<16x1xf32>
    %495 = tpu.reciprocal %494 {approx = true} : vector<16x1xf32> -> vector<16x1xf32>
    %496 = vector.broadcast %495 : vector<16x1xf32> to vector<16x32xf32>
    %497 = arith.mulf %486, %496 : vector<16x32xf32>
    %498 = vector.broadcast %479 : vector<1x32xf32> to vector<16x32xf32>
    %499 = arith.mulf %498, %497 : vector<16x32xf32>
    %500 = vector.broadcast %480 : vector<1x32xf32> to vector<16x32xf32>
    %501 = arith.addf %499, %500 : vector<16x32xf32>
    %502 = arith.truncf %501 : vector<16x32xf32> to vector<16x32xbf16>
    %cst_150 = arith.constant dense<0.000000e+00> : vector<16x64xf32>
    %503 = tpu.matmul %502, %269, %cst_150 {dimension_numbers = #tpu.dot_dimension_numbers<[1], [0], [0], [1], [0, 0, 1, 1], [], []>} : vector<16x32xbf16>, vector<32x64xbf16>, vector<16x64xf32> -> vector<16x64xf32>
    %504 = vector.broadcast %271 : vector<1x64xf32> to vector<16x64xf32>
    %505 = arith.addf %503, %504 : vector<16x64xf32>
    %cst_151 = arith.constant 0.000000e+00 : f32
    %506 = vector.broadcast %cst_151 : f32 to vector<16x64xf32>
    %507 = arith.maximumf %505, %506 : vector<16x64xf32>
    %508 = arith.truncf %507 : vector<16x64xf32> to vector<16x64xbf16>
    %cst_152 = arith.constant dense<0.000000e+00> : vector<16x32xf32>
    %509 = tpu.matmul %508, %273, %cst_152 {dimension_numbers = #tpu.dot_dimension_numbers<[1], [0], [0], [1], [0, 0, 1, 1], [], []>} : vector<16x64xbf16>, vector<64x32xbf16>, vector<16x32xf32> -> vector<16x32xf32>
    %510 = vector.broadcast %275 : vector<1x32xf32> to vector<16x32xf32>
    %511 = arith.addf %509, %510 : vector<16x32xf32>
    %512 = arith.addf %478, %511 : vector<16x32xf32>
    %c0_153 = arith.constant 0 : index
    %c0_154 = arith.constant 0 : index
    %513 = vector.load %arg12[%c0_153, %c0_154] : memref<1x32xf32, #tpu.memory_space<vmem>>, vector<1x32xf32>
    %c0_155 = arith.constant 0 : index
    %c0_156 = arith.constant 0 : index
    %514 = vector.load %arg13[%c0_155, %c0_156] : memref<1x32xf32, #tpu.memory_space<vmem>>, vector<1x32xf32>
    %cst_157 = arith.constant dense<0.000000e+00> : vector<16xf32>
    %515 = vector.multi_reduction <add>, %512, %cst_157 [1] : vector<16x32xf32> to vector<16xf32>
    %516 = vector.shape_cast %515 : vector<16xf32> to vector<16x1xf32>
    %cst_158 = arith.constant 3.200000e+01 : f32
    %517 = vector.broadcast %cst_158 : f32 to vector<16x1xf32>
    %518 = arith.divf %516, %517 : vector<16x1xf32>
    %519 = vector.broadcast %518 : vector<16x1xf32> to vector<16x32xf32>
    %520 = arith.subf %512, %519 : vector<16x32xf32>
    %521 = arith.mulf %520, %520 : vector<16x32xf32>
    %cst_159 = arith.constant dense<0.000000e+00> : vector<16xf32>
    %522 = vector.multi_reduction <add>, %521, %cst_159 [1] : vector<16x32xf32> to vector<16xf32>
    %523 = vector.shape_cast %522 : vector<16xf32> to vector<16x1xf32>
    %cst_160 = arith.constant 0.0322580636 : f32
    %524 = vector.broadcast %cst_160 : f32 to vector<16x1xf32>
    %525 = arith.mulf %523, %524 : vector<16x1xf32>
    %526 = math.sqrt %525 : vector<16x1xf32>
    %cst_161 = arith.constant 9.99999997E-7 : f32
    %527 = vector.broadcast %cst_161 : f32 to vector<16x1xf32>
    %528 = arith.addf %526, %527 : vector<16x1xf32>
    %529 = tpu.reciprocal %528 {approx = true} : vector<16x1xf32> -> vector<16x1xf32>
    %530 = vector.broadcast %529 : vector<16x1xf32> to vector<16x32xf32>
    %531 = arith.mulf %520, %530 : vector<16x32xf32>
    %532 = vector.broadcast %513 : vector<1x32xf32> to vector<16x32xf32>
    %533 = arith.mulf %532, %531 : vector<16x32xf32>
    %534 = vector.broadcast %514 : vector<1x32xf32> to vector<16x32xf32>
    %535 = arith.addf %533, %534 : vector<16x32xf32>
    %536 = vector.shape_cast %535 : vector<16x32xf32> to vector<2x8x32xf32>
    %c0_162 = arith.constant 0 : index
    %c0_163 = arith.constant 0 : index
    %c0_164 = arith.constant 0 : index
    %537 = vector.load %arg14[%c0_162, %c0_163, %c0_164] : memref<2x8x32xf32, #tpu.memory_space<vmem>>, vector<2x8x32xf32>
    tpu.vector_store %arg14[%c0_162, %c0_163, %c0_164], %536 {strides = array<i32>} : memref<2x8x32xf32, #tpu.memory_space<vmem>>, vector<2x8x32xf32>,
    return
  }
  func.func @transform_0(%arg0: i32) -> (i32, i32, i32) {
    %c0_i32 = arith.constant 0 : i32
    %c0_i32_0 = arith.constant 0 : i32
    %c0_i32_1 = arith.constant 0 : i32
    return %arg0, %c0_i32, %c0_i32_0 : i32, i32, i32
  }
  func.func @transform_1(%arg0: i32) -> (i32, i32, i32) {
    %c0_i32 = arith.constant 0 : i32
    %c0_i32_0 = arith.constant 0 : i32
    %c0_i32_1 = arith.constant 0 : i32
    return %arg0, %c0_i32, %c0_i32_0 : i32, i32, i32
  }
  func.func @transform_2(%arg0: i32) -> (i32, i32, i32) {
    %c0_i32 = arith.constant 0 : i32
    %c0_i32_0 = arith.constant 0 : i32
    %c0_i32_1 = arith.constant 0 : i32
    %c0_i32_2 = arith.constant 0 : i32
    return %c0_i32, %c0_i32_0, %c0_i32_1 : i32, i32, i32
  }
  func.func @transform_3(%arg0: i32) -> (i32, i32, i32) {
    %c0_i32 = arith.constant 0 : i32
    %c0_i32_0 = arith.constant 0 : i32
    %c0_i32_1 = arith.constant 0 : i32
    %c0_i32_2 = arith.constant 0 : i32
    return %c0_i32, %c0_i32_0, %c0_i32_1 : i32, i32, i32
  }
  func.func @transform_4(%arg0: i32) -> (i32, i32, i32) {
    %c0_i32 = arith.constant 0 : i32
    %c0_i32_0 = arith.constant 0 : i32
    %c0_i32_1 = arith.constant 0 : i32
    %c0_i32_2 = arith.constant 0 : i32
    return %c0_i32, %c0_i32_0, %c0_i32_1 : i32, i32, i32
  }
  func.func @transform_5(%arg0: i32) -> (i32, i32, i32) {
    %c0_i32 = arith.constant 0 : i32
    %c0_i32_0 = arith.constant 0 : i32
    %c0_i32_1 = arith.constant 0 : i32
    %c0_i32_2 = arith.constant 0 : i32
    return %c0_i32, %c0_i32_0, %c0_i32_1 : i32, i32, i32
  }
  func.func @transform_6(%arg0: i32) -> (i32, i32, i32) {
    %c0_i32 = arith.constant 0 : i32
    %c0_i32_0 = arith.constant 0 : i32
    %c0_i32_1 = arith.constant 0 : i32
    %c0_i32_2 = arith.constant 0 : i32
    return %c0_i32, %c0_i32_0, %c0_i32_1 : i32, i32, i32
  }
  func.func @transform_7(%arg0: i32) -> (i32, i32, i32) {
    %c0_i32 = arith.constant 0 : i32
    %c0_i32_0 = arith.constant 0 : i32
    %c0_i32_1 = arith.constant 0 : i32
    %c0_i32_2 = arith.constant 0 : i32
    return %c0_i32, %c0_i32_0, %c0_i32_1 : i32, i32, i32
  }
  func.func @transform_8(%arg0: i32) -> (i32, i32, i32) {
    %c0_i32 = arith.constant 0 : i32
    %c0_i32_0 = arith.constant 0 : i32
    %c0_i32_1 = arith.constant 0 : i32
    %c0_i32_2 = arith.constant 0 : i32
    return %c0_i32, %c0_i32_0, %c0_i32_1 : i32, i32, i32
  }
  func.func @transform_9(%arg0: i32) -> (i32, i32, i32) {
    %c0_i32 = arith.constant 0 : i32
    %c0_i32_0 = arith.constant 0 : i32
    %c0_i32_1 = arith.constant 0 : i32
    %c0_i32_2 = arith.constant 0 : i32
    return %c0_i32, %c0_i32_0, %c0_i32_1 : i32, i32, i32
  }
  func.func @transform_10(%arg0: i32) -> (i32, i32, i32) {
    %c0_i32 = arith.constant 0 : i32
    %c0_i32_0 = arith.constant 0 : i32
    %c0_i32_1 = arith.constant 0 : i32
    %c0_i32_2 = arith.constant 0 : i32
    return %c0_i32, %c0_i32_0, %c0_i32_1 : i32, i32, i32
  }
  func.func @transform_11(%arg0: i32) -> (i32, i32) {
    %c0_i32 = arith.constant 0 : i32
    %c0_i32_0 = arith.constant 0 : i32
    %c0_i32_1 = arith.constant 0 : i32
    return %c0_i32, %c0_i32_0 : i32, i32
  }
  func.func @transform_12(%arg0: i32) -> (i32, i32) {
    %c0_i32 = arith.constant 0 : i32
    %c0_i32_0 = arith.constant 0 : i32
    %c0_i32_1 = arith.constant 0 : i32
    return %c0_i32, %c0_i32_0 : i32, i32
  }
  func.func @transform_13(%arg0: i32) -> (i32, i32, i32) {
    %c0_i32 = arith.constant 0 : i32
    %c0_i32_0 = arith.constant 0 : i32
    %c0_i32_1 = arith.constant 0 : i32
    return %arg0, %c0_i32, %c0_i32_0 : i32, i32, i32
  }
}

</mosaic_0001>

<llo_original>
// kernel: _encoder_forward_impl.1
$region0: #{_encoder_forward_impl.1}
  #allocation0 [shape = 'u32[]', space=smem, size = 0x4, offset = 0x4, fixed_abs, tag = 'smem constant byte address 0x4 - core index']
  #allocation1 [shape = 'u32[144,128]{1,0:T(1,128)}', space=vmem, size = 0x12000, scoped, tag = 'internal scratch']
  %s0 = inlined_call_operand.hbm [shape: f32[2,8,32], index: 0, kind: input, shape index: {}]
  %s1 = inlined_call_operand.vmem [shape: f32[2,1,8], index: 1, kind: input, shape index: {}]
  %s2 = inlined_call_operand.vmem [shape: bf16[2,32,192], index: 2, kind: input, shape index: {}]
  %s3 = inlined_call_operand.vmem [shape: f32[2,1,192], index: 3, kind: input, shape index: {}]
  %s4 = inlined_call_operand.hbm [shape: f32[2,1,32], index: 4, kind: input, shape index: {}]
  %s5 = inlined_call_operand.vmem [shape: bf16[2,32,64], index: 5, kind: input, shape index: {}]
  %s6 = inlined_call_operand.hbm [shape: f32[2,1,64], index: 6, kind: input, shape index: {}]
  %s7 = inlined_call_operand.vmem [shape: bf16[2,64,32], index: 7, kind: input, shape index: {}]
  %s8 = inlined_call_operand.hbm [shape: f32[2,1,32], index: 8, kind: input, shape index: {}]
  %s9 = inlined_call_operand.vmem [shape: f32[2,2,32], index: 9, kind: input, shape index: {}]
  %s10 = inlined_call_operand.vmem [shape: f32[2,2,32], index: 10, kind: input, shape index: {}]
  %s11 = inlined_call_operand.vmem [shape: f32[1,32], index: 11, kind: input, shape index: {}]
  %s12 = inlined_call_operand.hbm [shape: f32[1,32], index: 12, kind: input, shape index: {}]
  %s13 = inlined_call_operand.hbm [shape: f32[2,8,32], index: 13, kind: output, shape index: {}]
  %s14 = sld [smem:[#allocation0]]
  $region82: #{_encoder_forward_impl.1} parent=0
    _
  %s16 = ssub.s32 1, %s14
  %s17 = scalar_select 0, %s16, %s14
  $region1: #{_encoder_forward_impl.1} parent=0
    #allocation2 [shape = 'u8[8192]{0}', space=vmem, size = 0x2000, scoped, tag = 'input window, operand 0, single buffered']
    #allocation3 [shape = 's32[1]{0}', space=sflag, size = 0x4, scoped, tag = 'scoped memory for _encoder_forward_impl.1']
    #allocation4 [shape = 's32[1]{0}', space=sflag, size = 0x4, scoped, tag = 'scoped memory for _encoder_forward_impl.1']
    #allocation5 [shape = 'u8[1024]{0}', space=vmem, size = 0x400, scoped, tag = 'input window, operand 4, single buffered']
    #allocation6 [shape = 's32[1]{0}', space=sflag, size = 0x4, scoped, tag = 'scoped memory for _encoder_forward_impl.1']
    #allocation7 [shape = 'u8[1024]{0}', space=vmem, size = 0x400, scoped, tag = 'input window, operand 6, single buffered']
    #allocation8 [shape = 'u8[1024]{0}', space=vmem, size = 0x400, scoped, tag = 'input window, operand 8, single buffered']
    #allocation9 [shape = 's32[1]{0}', space=sflag, size = 0x4, scoped, tag = 'scoped memory for _encoder_forward_impl.1']
    #allocation10 [shape = 'u8[512]{0}', space=vmem, size = 0x400, scoped, tag = 'input window, operand 12, single buffered']
    #allocation11 [shape = 'u8[8192]{0}', space=vmem, size = 0x2000, scoped, tag = 'output window, operand 0, single buffered']
    %18 = vsyncpa [#allocation3], 0
    %19 = vsyncpa [#allocation6], 0
    %20 = vsyncpa [#allocation9], 0
    %21 = vsyncpa [#allocation4], 0
    // Predicated region
    $region2: #{_encoder_forward_impl.1} parent=1 // pred_check
      _
    $region3: #{_encoder_forward_impl.1} parent=1 // pred_check_branch
      %23 = sbr.rel (0) target = $region5
    $region4: #{_encoder_forward_impl.1} parent=1 // pred_region
      %s25 = ssub.s32 256, 256
      %26 = vsyncadd [#allocation3], %s25
      %s27 = sshll.u32 [#allocation2], 4
      %s28 = int_to_ptr.vmem [resolvable:$true] %s27
      %33 = dma.hbm_to_vmem [thread:$0]  %s0, 256, %s28, [#allocation3], 128, 128, 8
    $region5: #{_encoder_forward_impl.1} parent=1 // pred_fallthru
      _
    // Predicated region
    $region6: #{_encoder_forward_impl.1} parent=1 // pred_check
      _
    $region7: #{_encoder_forward_impl.1} parent=1 // pred_check_branch
      %35 = sbr.rel (0) target = $region9
    $region8: #{_encoder_forward_impl.1} parent=1 // pred_region
      _
    $region9: #{_encoder_forward_impl.1} parent=1 // pred_fallthru
      _
    // Predicated region
    $region10: #{_encoder_forward_impl.1} parent=1 // pred_check
      _
    $region11: #{_encoder_forward_impl.1} parent=1 // pred_check_branch
      %37 = sbr.rel (0) target = $region13
    $region12: #{_encoder_forward_impl.1} parent=1 // pred_region
      _
    $region13: #{_encoder_forward_impl.1} parent=1 // pred_fallthru
      _
    // Predicated region
    $region14: #{_encoder_forward_impl.1} parent=1 // pred_check
      _
    $region15: #{_encoder_forward_impl.1} parent=1 // pred_check_branch
      %39 = sbr.rel (0) target = $region17
    $region16: #{_encoder_forward_impl.1} parent=1 // pred_region
      _
    $region17: #{_encoder_forward_impl.1} parent=1 // pred_fallthru
      _
    // Predicated region
    $region18: #{_encoder_forward_impl.1} parent=1 // pred_check
      _
    $region19: #{_encoder_forward_impl.1} parent=1 // pred_check_branch
      %41 = sbr.rel (0) target = $region21
    $region20: #{_encoder_forward_impl.1} parent=1 // pred_region
      %s43 = ssub.s32 32, 32
      %44 = vsyncadd [#allocation6], %s43
      %s45 = sshll.u32 [#allocation5], 4
      %s46 = int_to_ptr.vmem [resolvable:$true] %s45
      %51 = dma.hbm_to_vmem [thread:$0]  %s4, 32, %s46, [#allocation6], 16, 16, 1
    $region21: #{_encoder_forward_impl.1} parent=1 // pred_fallthru
      _
    // Predicated region
    $region22: #{_encoder_forward_impl.1} parent=1 // pred_check
      _
    $region23: #{_encoder_forward_impl.1} parent=1 // pred_check_branch
      %53 = sbr.rel (0) target = $region25
    $region24: #{_encoder_forward_impl.1} parent=1 // pred_region
      _
    $region25: #{_encoder_forward_impl.1} parent=1 // pred_fallthru
      _
    // Predicated region
    $region26: #{_encoder_forward_impl.1} parent=1 // pred_check
      _
    $region27: #{_encoder_forward_impl.1} parent=1 // pred_check_branch
      %55 = sbr.rel (0) target = $region29
    $region28: #{_encoder_forward_impl.1} parent=1 // pred_region
      %s57 = ssub.s32 32, 32
      %58 = vsyncadd [#allocation6], %s57
      %s59 = sshll.u32 [#allocation7], 4
      %s60 = int_to_ptr.vmem [resolvable:$true] %s59
      %65 = dma.hbm_to_vmem [thread:$0]  %s6, 32, %s60, [#allocation6], 16, 16, 1
    $region29: #{_encoder_forward_impl.1} parent=1 // pred_fallthru
      _
    // Predicated region
    $region30: #{_encoder_forward_impl.1} parent=1 // pred_check
      _
    $region31: #{_encoder_forward_impl.1} parent=1 // pred_check_branch
      %67 = sbr.rel (0) target = $region33
    $region32: #{_encoder_forward_impl.1} parent=1 // pred_region
      _
    $region33: #{_encoder_forward_impl.1} parent=1 // pred_fallthru
      _
    // Predicated region
    $region34: #{_encoder_forward_impl.1} parent=1 // pred_check
      _
    $region35: #{_encoder_forward_impl.1} parent=1 // pred_check_branch
      %69 = sbr.rel (0) target = $region37
    $region36: #{_encoder_forward_impl.1} parent=1 // pred_region
      %s71 = ssub.s32 32, 32
      %72 = vsyncadd [#allocation9], %s71
      %s73 = sshll.u32 [#allocation8], 4
      %s74 = int_to_ptr.vmem [resolvable:$true] %s73
      %79 = dma.hbm_to_vmem [thread:$0]  %s8, 32, %s74, [#allocation9], 16, 16, 1
    $region37: #{_encoder_forward_impl.1} parent=1 // pred_fallthru
      _
    // Predicated region
    $region38: #{_encoder_forward_impl.1} parent=1 // pred_check
      _
    $region39: #{_encoder_forward_impl.1} parent=1 // pred_check_branch
      %81 = sbr.rel (0) target = $region41
    $region40: #{_encoder_forward_impl.1} parent=1 // pred_region
      _
    $region41: #{_encoder_forward_impl.1} parent=1 // pred_fallthru
      _
    // Predicated region
    $region42: #{_encoder_forward_impl.1} parent=1 // pred_check
      _
    $region43: #{_encoder_forward_impl.1} parent=1 // pred_check_branch
      %83 = sbr.rel (0) target = $region45
    $region44: #{_encoder_forward_impl.1} parent=1 // pred_region
      _
    $region45: #{_encoder_forward_impl.1} parent=1 // pred_fallthru
      _
    // Predicated region
    $region46: #{_encoder_forward_impl.1} parent=1 // pred_check
      _
    $region47: #{_encoder_forward_impl.1} parent=1 // pred_check_branch
      %85 = sbr.rel (0) target = $region49
    $region48: #{_encoder_forward_impl.1} parent=1 // pred_region
      _
    $region49: #{_encoder_forward_impl.1} parent=1 // pred_fallthru
      _
    // Predicated region
    $region50: #{_encoder_forward_impl.1} parent=1 // pred_check
      _
    $region51: #{_encoder_forward_impl.1} parent=1 // pred_check_branch
      %87 = sbr.rel (0) target = $region53
    $region52: #{_encoder_forward_impl.1} parent=1 // pred_region
      %s89 = ssub.s32 16, 16
      %90 = vsyncadd [#allocation9], %s89
      %s92 = sshll.u32 [#allocation10], 4
      %s93 = int_to_ptr.vmem [resolvable:$true] %s92
      %95 = dma.hbm_to_vmem [thread:$0]  %s12, 16, %s93, [#allocation9]
    $region53: #{_encoder_forward_impl.1} parent=1 // pred_fallthru
      _
    // Predicated region
    $region54: #{_encoder_forward_impl.1} parent=1 // pred_check
      _
    $region55: #{_encoder_forward_impl.1} parent=1 // pred_check_branch
      %97 = sbr.rel (0) target = $region57
    $region56: #{_encoder_forward_impl.1} parent=1 // pred_region
      %98 = dma.done [#allocation3], 256
    $region57: #{_encoder_forward_impl.1} parent=1 // pred_fallthru
      _
    // Predicated region
    $region58: #{_encoder_forward_impl.1} parent=1 // pred_check
      _
    $region59: #{_encoder_forward_impl.1} parent=1 // pred_check_branch
      %100 = sbr.rel (0) target = $region61
    $region60: #{_encoder_forward_impl.1} parent=1 // pred_region
      %101 = dma.done [#allocation6], 32
    $region61: #{_encoder_forward_impl.1} parent=1 // pred_fallthru
      _
    // Predicated region
    $region62: #{_encoder_forward_impl.1} parent=1 // pred_check
      _
    $region63: #{_encoder_forward_impl.1} parent=1 // pred_check_branch
      %103 = sbr.rel (0) target = $region65
    $region64: #{_encoder_forward_impl.1} parent=1 // pred_region
      %104 = dma.done [#allocation6], 32
    $region65: #{_encoder_forward_impl.1} parent=1 // pred_fallthru
      _
    // Predicated region
    $region66: #{_encoder_forward_impl.1} parent=1 // pred_check
      _
    $region67: #{_encoder_forward_impl.1} parent=1 // pred_check_branch
      %106 = sbr.rel (0) target = $region69
    $region68: #{_encoder_forward_impl.1} parent=1 // pred_region
      %107 = dma.done [#allocation9], 32
    $region69: #{_encoder_forward_impl.1} parent=1 // pred_fallthru
      _
    // Predicated region
    $region70: #{_encoder_forward_impl.1} parent=1 // pred_check
      _
    $region71: #{_encoder_forward_impl.1} parent=1 // pred_check_branch
      %109 = sbr.rel (0) target = $region73
    $region72: #{_encoder_forward_impl.1} parent=1 // pred_region
      %110 = dma.done [#allocation9], 16
    $region73: #{_encoder_forward_impl.1} parent=1 // pred_fallthru
      _
    %v112 = vld [vmem:[#allocation2] sm:$0xff]
    %v113 = vld [vmem:[#allocation2 + $0x8] sm:$0xff]
    %v114 = vld [vmem:[%s1] sm:$0x1]
    %v115 = vld [vmem:[%s1 + $0x1] sm:$0x1]
    %v116 = vld [vmem:[%s9] sm:$0x3]
    %v117 = vld [vmem:[%s10] sm:$0x3]
    %v118 = vld [vmem:[%s2] sm:$0xff]
    %v119 = vld [vmem:[%s2 + $0x8] sm:$0xff]
    %v120 = vld [vmem:[%s2 + $0x10] sm:$0xff]
    %v121 = vld [vmem:[%s2 + $0x18] sm:$0xff]
    %v122 = vld [vmem:[%s3] sm:$0x3]
    %v123 = vld [vmem:[#allocation5] sm:$0x1]
    %v124 = vld [vmem:[%s5] sm:$0xf]
    %v125 = vld [vmem:[%s5 + $0x4] sm:$0xf]
    %v126 = vld [vmem:[%s5 + $0x8] sm:$0xf]
    %v127 = vld [vmem:[%s5 + $0xc] sm:$0xf]
    %v128 = vld [vmem:[#allocation7] sm:$0x1]
    %v129 = vld [vmem:[%s7] sm:$0xf]
    %v130 = vld [vmem:[%s7 + $0x4] sm:$0xf]
    %v131 = vld [vmem:[%s7 + $0x8] sm:$0xf]
    %v132 = vld [vmem:[%s7 + $0xc] sm:$0xf]
    %v133 = vld [vmem:[%s7 + $0x10] sm:$0xf]
    %v134 = vld [vmem:[%s7 + $0x14] sm:$0xf]
    %v135 = vld [vmem:[%s7 + $0x18] sm:$0xf]
    %v136 = vld [vmem:[%s7 + $0x1c] sm:$0xf]
    %v137 = vld [vmem:[#allocation8] sm:$0x1]
    %vm138 = vcmask 261120
    %v139 = vsel %vm138, %v112, 0.0
    %140 = vadd.xlane.f32.xlu0 %v139
    %v141 = vpop.xlane.xlu0 %140
    %v142 = vsel %vm138, %v113, 0.0
    %143 = vadd.xlane.f32.xlu0 %v142
    %v144 = vpop.xlane.xlu0 %143
    %v145 = vrcp.pop 32.0
    %v146 = vmul.f32 %v141, %v145
    %v147 = vmul.f32 %v144, %v145
    %v148 = vsub.f32 %v112, %v146
    %v149 = vsub.f32 %v113, %v147
    %v150 = vmul.f32 %v148, %v148
    %v151 = vmul.f32 %v149, %v149
    %v152 = vsel %vm138, %v150, 0.0
    %153 = vadd.xlane.f32.xlu0 %v152
    %v154 = vpop.xlane.xlu0 %153
    %v155 = vsel %vm138, %v151, 0.0
    %156 = vadd.xlane.f32.xlu0 %v155
    %v157 = vpop.xlane.xlu0 %156
    %v158 = vmul.f32 %v154, 0.032258064
    %v159 = vmul.f32 %v157, 0.032258064
    %v160 = vrsqrt.pop %v158
    %v161 = vmul.f32 %v158, %v160
    %vm162 = vcmp.eq.f32.partialorder %v158, inf
    %v163 = vsel %vm162, %v158, %v161
    %vm164 = vcmp.eq.f32.partialorder %v158, 0.0
    %v165 = vand.u32 %v158, 2147483648
    %v166 = vsel %vm164, %v165, %v163
    %v167 = vrsqrt.pop %v159
    %v168 = vmul.f32 %v159, %v167
    %vm169 = vcmp.eq.f32.partialorder %v159, inf
    %v170 = vsel %vm169, %v159, %v168
    %vm171 = vcmp.eq.f32.partialorder %v159, 0.0
    %v172 = vand.u32 %v159, 2147483648
    %v173 = vsel %vm171, %v172, %v170
    %v174 = vadd.f32 %v166, 1e-06
    %v175 = vadd.f32 %v173, 1e-06
    %v176 = vrcp.pop %v174
    %v177 = vrcp.pop %v175
    %v178 = vmul.f32 %v148, %v176
    %v179 = vmul.f32 %v149, %v177
    %v180 = vlaneseq
    %v181 = vshrl.u32 %v180, 7
    %v182 = vsub.s32 0, %v181
    %v183 = vrot.slane %v116, %v182
    %v184 = vmul.f32 %v183, %v178
    %v185 = vmul.f32 %v183, %v179
    %v186 = vlaneseq
    %v187 = vshrl.u32 %v186, 7
    %v188 = vsub.s32 0, %v187
    %v189 = vrot.slane %v117, %v188
    %v190 = vadd.f32 %v184, %v189
    %v191 = vadd.f32 %v185, %v189
    %v192 = vpack.c.bf16 %v191, %v190
    %v194 = vlaneseq
    %v195 = vshrl.u32 %v194, 7
    %v196 = vsub.s32 0, %v195
    %v197 = vrot.slane %v122, %v196
    %v198 = vlaneseq
    %v199 = vshrl.u32 %v198, 7
    %v200 = vsub.s32 1, %v199
    %v201 = vrot.slane %v122, %v200
    %v208 = vunpack.c.l.b16 %v118
    %v209 = vunpack.c.h.b16 %v118
    %v210 = vunpack.c.l.b16 %v119
    %v211 = vunpack.c.h.b16 %v119
    %v212 = vunpack.c.l.b16 %v120
    %v213 = vunpack.c.h.b16 %v120
    %v214 = vunpack.c.l.b16 %v121
    %v215 = vunpack.c.h.b16 %v121
    %v216 = vpack.c.b16 %v210, %v208
    %v217 = vpack.c.b16 %v211, %v209
    %v218 = vpack.c.b16 %v214, %v212
    %v219 = vpack.c.b16 %v215, %v213
    %v225 = vsel %vm138, %v192, 0
    %227 = vmatprep.subr.bf16.mxu0 %v217
    %228 = vmatpush1.bf16.msra.mxu0 %v216
    %229 = vmatprep.subr.bf16.mxu0 %v219
    %230 = vmatpush1.bf16.msra.mxu0 %v218
    %231 = vmatprep.subr.bf16.mxu0 0
    %232 = vmatpush1.bf16.msra.mxu0 0
    %233 = vmatprep.subr.bf16.mxu0 0
    %234 = vmatpush1.bf16.msra.mxu0 0
    %235 = vmatprep.subr.bf16.mxu0 0
    %236 = vmatpush1.bf16.msra.mxu0 0
    %237 = vmatprep.subr.bf16.mxu0 0
    %238 = vmatpush1.bf16.msra.mxu0 0
    %239 = vmatprep.subr.bf16.mxu0 0
    %240 = vmatpush1.bf16.msra.mxu0 0
    %241 = vmatprep.subr.bf16.mxu0 0
    %242 = vmatpush1.bf16.msra.mxu0 0
    %243 = vmatprep.subr.bf16.mxu0 0
    %244 = vmatpush1.bf16.msra.mxu0 0
    %245 = vmatprep.subr.bf16.mxu0 0
    %246 = vmatpush1.bf16.msra.mxu0 0
    %247 = vmatprep.subr.bf16.mxu0 0
    %248 = vmatpush1.bf16.msra.mxu0 0
    %249 = vmatprep.subr.bf16.mxu0 0
    %250 = vmatpush1.bf16.msra.mxu0 0
    %251 = vmatprep.subr.bf16.mxu0 0
    %252 = vmatpush1.bf16.msra.mxu0 0
    %253 = vmatprep.subr.bf16.mxu0 0
    %254 = vmatpush1.bf16.msra.mxu0 0
    %255 = vmatprep.subr.bf16.mxu0 0
    %256 = vmatpush1.bf16.msra.mxu0 0
    %257 = vmatprep.subr.bf16.mxu0 0
    %258 = vmatpush1.bf16.msra.mxu0 0
    %259 = vmatprep.mubr.bf16.mxu0 0
    %260 = vmatmul.mubr.bf16.gmra.mrb[0].mxu0 %v225
    %v261 = vpop.f32.mrb[0].mxu0
    %v262 = vadd.f32 %v197, %v261
    %v263 = vpop.f32.mrb[0].mxu0
    %v264 = vadd.f32 %v201, %v263
    %v265 = vpop.f32.mrb[0].mxu0
    %v266 = vadd.f32 %v197, %v265
    %v267 = vpop.f32.mrb[0].mxu0
    %v268 = vadd.f32 %v201, %v267
    %269 = vdwg.mxu0
    %v270 = vpack.c.bf16 %v262, %v262
    %272 = vrot.lane.b32.xlu0 %v262, 96
    %v273 = vpop.permute.xlu0 %272
    %275 = vxpose.xlu0.b32.start [1/16] %v273, 128
    %276 = vxpose.xlu0.b32.cont [2/16] 0.0, 128
    %277 = vxpose.xlu0.b32.cont [3/16] 0.0, 128
    %278 = vxpose.xlu0.b32.cont [4/16] 0.0, 128
    %279 = vxpose.xlu0.b32.cont [5/16] 0.0, 128
    %280 = vxpose.xlu0.b32.cont [6/16] 0.0, 128
    %281 = vxpose.xlu0.b32.cont [7/16] 0.0, 128
    %282 = vxpose.xlu0.b32.cont [8/16] 0.0, 128
    %283 = vxpose.xlu0.b32.cont [9/16] 0.0, 128
    %284 = vxpose.xlu0.b32.cont [10/16] 0.0, 128
    %285 = vxpose.xlu0.b32.cont [11/16] 0.0, 128
    %286 = vxpose.xlu0.b32.cont [12/16] 0.0, 128
    %287 = vxpose.xlu0.b32.cont [13/16] 0.0, 128
    %288 = vxpose.xlu0.b32.cont [14/16] 0.0, 128
    %289 = vxpose.xlu0.b32.cont [15/16] 0.0, 128
    %290 = vxpose.xlu0.b32.end [16/16] 0.0, 128
    %v291 = vpop.trf.xlu0
    %v292 = vpop.trf.xlu0
    %v293 = vpop.trf.xlu0
    %v294 = vpop.trf.xlu0
    %v295 = vpop.trf.xlu0
    %v296 = vpop.trf.xlu0
    %v297 = vpop.trf.xlu0
    %v298 = vpop.trf.xlu0
    %v299 = vpop.trf.xlu0
    %v300 = vpop.trf.xlu0
    %v301 = vpop.trf.xlu0
    %v302 = vpop.trf.xlu0
    %v303 = vpop.trf.xlu0
    %v304 = vpop.trf.xlu0
    %v305 = vpop.trf.xlu0
    %v306 = vpop.trf.xlu0
    %v307 = vpack.c.bf16 %v292, %v291
    %v308 = vpack.c.bf16 %v294, %v293
    %v309 = vpack.c.bf16 %v264, %v264
    %v311 = vlaneseq
    %v312 = vshrl.u32 %v311, 7
    %v313 = vsub.s32 0, %v312
    %v314 = vrot.slane %v114, %v313
    %vm316 = vcmask 64512
    %v318 = vsel %vm316, %v270, 0
    %vm320 = vcmask 1043456
    %v322 = vsel %vm320, %v307, 0
    %324 = vmatprep.subr.bf16.mxu0 0
    %325 = vmatpush1.bf16.msra.mxu0 %v322
    %326 = vmatprep.subr.bf16.mxu0 0
    %327 = vmatpush1.bf16.msra.mxu0 0
    %328 = vmatprep.subr.bf16.mxu0 0
    %329 = vmatpush1.bf16.msra.mxu0 0
    %330 = vmatprep.subr.bf16.mxu0 0
    %331 = vmatpush1.bf16.msra.mxu0 0
    %332 = vmatprep.subr.bf16.mxu0 0
    %333 = vmatpush1.bf16.msra.mxu0 0
    %334 = vmatprep.subr.bf16.mxu0 0
    %335 = vmatpush1.bf16.msra.mxu0 0
    %336 = vmatprep.subr.bf16.mxu0 0
    %337 = vmatpush1.bf16.msra.mxu0 0
    %338 = vmatprep.subr.bf16.mxu0 0
    %339 = vmatpush1.bf16.msra.mxu0 0
    %340 = vmatprep.subr.bf16.mxu0 0
    %341 = vmatpush1.bf16.msra.mxu0 0
    %342 = vmatprep.subr.bf16.mxu0 0
    %343 = vmatpush1.bf16.msra.mxu0 0
    %344 = vmatprep.subr.bf16.mxu0 0
    %345 = vmatpush1.bf16.msra.mxu0 0
    %346 = vmatprep.subr.bf16.mxu0 0
    %347 = vmatpush1.bf16.msra.mxu0 0
    %348 = vmatprep.subr.bf16.mxu0 0
    %349 = vmatpush1.bf16.msra.mxu0 0
    %350 = vmatprep.subr.bf16.mxu0 0
    %351 = vmatpush1.bf16.msra.mxu0 0
    %352 = vmatprep.subr.bf16.mxu0 0
    %353 = vmatpush1.bf16.msra.mxu0 0
    %354 = vmatprep.subr.bf16.mxu0 0
    %355 = vmatpush1.bf16.msra.mxu0 0
    %356 = vmatprep.mubr.bf16.mxu0 0
    %357 = vmatmul.mubr.bf16.gmra.mrb[0].mxu0 %v318
    %v358 = vpop.f32.mrb[0].mxu0
    %v359 = vadd.f32 %v314, %v358
    %v360 = vpop.f32.mrb[0].mxu0
    %v361 = vpop.f32.mrb[0].mxu0
    %v362 = vpop.f32.mrb[0].mxu0
    %363 = vdwg.mxu0
    %v364 = vsel %vm316, %v359, -inf
    %365 = vmax.xlane.f32.xlu0 %v364
    %v366 = vpop.xlane.xlu0 %365
    %v367 = vsub.f32 %v359, %v366
    %v368 = vmul.f32 %v367, 1.442695
    %v369 = vpow.pop %v368
    %v370 = vsel %vm316, %v369, 0.0
    %371 = vadd.xlane.f32.xlu0 %v370
    %v372 = vpop.xlane.xlu0 %371
    %v373 = vrcp.pop %v372
    %v374 = vmul.f32 %v369, %v373
    %v375 = vpack.c.bf16 %v374, %v374
    %377 = vrot.lane.b32.xlu0 %v270, 120
    %v378 = vpop.permute.xlu0 %377
    %v380 = vrot.slane %v307, 4
    %v382 = vsel %vm316, %v378, 0
    %v385 = vsel %vm320, %v380, 0
    %387 = vmatprep.subr.bf16.mxu0 0
    %388 = vmatpush1.bf16.msra.mxu0 %v385
    %389 = vmatprep.subr.bf16.mxu0 0
    %390 = vmatpush1.bf16.msra.mxu0 0
    %391 = vmatprep.subr.bf16.mxu0 0
    %392 = vmatpush1.bf16.msra.mxu0 0
    %393 = vmatprep.subr.bf16.mxu0 0
    %394 = vmatpush1.bf16.msra.mxu0 0
    %395 = vmatprep.subr.bf16.mxu0 0
    %396 = vmatpush1.bf16.msra.mxu0 0
    %397 = vmatprep.subr.bf16.mxu0 0
    %398 = vmatpush1.bf16.msra.mxu0 0
    %399 = vmatprep.subr.bf16.mxu0 0
    %400 = vmatpush1.bf16.msra.mxu0 0
    %401 = vmatprep.subr.bf16.mxu0 0
    %402 = vmatpush1.bf16.msra.mxu0 0
    %403 = vmatprep.subr.bf16.mxu0 0
    %404 = vmatpush1.bf16.msra.mxu0 0
    %405 = vmatprep.subr.bf16.mxu0 0
    %406 = vmatpush1.bf16.msra.mxu0 0
    %407 = vmatprep.subr.bf16.mxu0 0
    %408 = vmatpush1.bf16.msra.mxu0 0
    %409 = vmatprep.subr.bf16.mxu0 0
    %410 = vmatpush1.bf16.msra.mxu0 0
    %411 = vmatprep.subr.bf16.mxu0 0
    %412 = vmatpush1.bf16.msra.mxu0 0
    %413 = vmatprep.subr.bf16.mxu0 0
    %414 = vmatpush1.bf16.msra.mxu0 0
    %415 = vmatprep.subr.bf16.mxu0 0
    %416 = vmatpush1.bf16.msra.mxu0 0
    %417 = vmatprep.subr.bf16.mxu0 0
    %418 = vmatpush1.bf16.msra.mxu0 0
    %419 = vmatprep.mubr.bf16.mxu0 0
    %420 = vmatmul.mubr.bf16.gmra.mrb[0].mxu0 %v382
    %v421 = vpop.f32.mrb[0].mxu0
    %v422 = vadd.f32 %v314, %v421
    %v423 = vpop.f32.mrb[0].mxu0
    %v424 = vpop.f32.mrb[0].mxu0
    %v425 = vpop.f32.mrb[0].mxu0
    %426 = vdwg.mxu0
    %v427 = vsel %vm316, %v422, -inf
    %428 = vmax.xlane.f32.xlu0 %v427
    %v429 = vpop.xlane.xlu0 %428
    %v430 = vsub.f32 %v422, %v429
    %v431 = vmul.f32 %v430, 1.442695
    %v432 = vpow.pop %v431
    %v433 = vsel %vm316, %v432, 0.0
    %434 = vadd.xlane.f32.xlu0 %v433
    %v435 = vpop.xlane.xlu0 %434
    %v436 = vrcp.pop %v435
    %v437 = vmul.f32 %v432, %v436
    %v438 = vpack.c.bf16 %v437, %v437
    %439 = vrot.lane.b32.xlu0 %v270, 32
    %v440 = vpop.permute.xlu0 %439
    %v442 = vsel %vm316, %v438, 0
    %v445 = vsel %vm320, %v440, 0
    %447 = vmatprep.subr.bf16.mxu0 0
    %448 = vmatpush1.bf16.msra.mxu0 %v445
    %449 = vmatprep.subr.bf16.mxu0 0
    %450 = vmatpush1.bf16.msra.mxu0 0
    %451 = vmatprep.subr.bf16.mxu0 0
    %452 = vmatpush1.bf16.msra.mxu0 0
    %453 = vmatprep.subr.bf16.mxu0 0
    %454 = vmatpush1.bf16.msra.mxu0 0
    %455 = vmatprep.subr.bf16.mxu0 0
    %456 = vmatpush1.bf16.msra.mxu0 0
    %457 = vmatprep.subr.bf16.mxu0 0
    %458 = vmatpush1.bf16.msra.mxu0 0
    %459 = vmatprep.subr.bf16.mxu0 0
    %460 = vmatpush1.bf16.msra.mxu0 0
    %461 = vmatprep.subr.bf16.mxu0 0
    %462 = vmatpush1.bf16.msra.mxu0 0
    %463 = vmatprep.subr.bf16.mxu0 0
    %464 = vmatpush1.bf16.msra.mxu0 0
    %465 = vmatprep.subr.bf16.mxu0 0
    %466 = vmatpush1.bf16.msra.mxu0 0
    %467 = vmatprep.subr.bf16.mxu0 0
    %468 = vmatpush1.bf16.msra.mxu0 0
    %469 = vmatprep.subr.bf16.mxu0 0
    %470 = vmatpush1.bf16.msra.mxu0 0
    %471 = vmatprep.subr.bf16.mxu0 0
    %472 = vmatpush1.bf16.msra.mxu0 0
    %473 = vmatprep.subr.bf16.mxu0 0
    %474 = vmatpush1.bf16.msra.mxu0 0
    %475 = vmatprep.subr.bf16.mxu0 0
    %476 = vmatpush1.bf16.msra.mxu0 0
    %477 = vmatprep.subr.bf16.mxu0 0
    %478 = vmatpush1.bf16.msra.mxu0 0
    %479 = vmatprep.mubr.bf16.mxu0 0
    %480 = vmatmul.mubr.bf16.gmra.mrb[0].mxu0 %v442
    %v481 = vpop.f32.mrb[0].mxu0
    %v482 = vadd.f32 0.0, %v481
    %v483 = vpop.f32.mrb[0].mxu0
    %v484 = vpop.f32.mrb[0].mxu0
    %v485 = vpop.f32.mrb[0].mxu0
    %486 = vdwg.mxu0
    %487 = vrot.lane.b32.xlu0 %v270, 64
    %v488 = vpop.permute.xlu0 %487
    %v490 = vsel %vm316, %v375, 0
    %v493 = vsel %vm320, %v488, 0
    %495 = vmatprep.subr.bf16.mxu0 0
    %496 = vmatpush1.bf16.msra.mxu0 %v493
    %497 = vmatprep.subr.bf16.mxu0 0
    %498 = vmatpush1.bf16.msra.mxu0 0
    %499 = vmatprep.subr.bf16.mxu0 0
    %500 = vmatpush1.bf16.msra.mxu0 0
    %501 = vmatprep.subr.bf16.mxu0 0
    %502 = vmatpush1.bf16.msra.mxu0 0
    %503 = vmatprep.subr.bf16.mxu0 0
    %504 = vmatpush1.bf16.msra.mxu0 0
    %505 = vmatprep.subr.bf16.mxu0 0
    %506 = vmatpush1.bf16.msra.mxu0 0
    %507 = vmatprep.subr.bf16.mxu0 0
    %508 = vmatpush1.bf16.msra.mxu0 0
    %509 = vmatprep.subr.bf16.mxu0 0
    %510 = vmatpush1.bf16.msra.mxu0 0
    %511 = vmatprep.subr.bf16.mxu0 0
    %512 = vmatpush1.bf16.msra.mxu0 0
    %513 = vmatprep.subr.bf16.mxu0 0
    %514 = vmatpush1.bf16.msra.mxu0 0
    %515 = vmatprep.subr.bf16.mxu0 0
    %516 = vmatpush1.bf16.msra.mxu0 0
    %517 = vmatprep.subr.bf16.mxu0 0
    %518 = vmatpush1.bf16.msra.mxu0 0
    %519 = vmatprep.subr.bf16.mxu0 0
    %520 = vmatpush1.bf16.msra.mxu0 0
    %521 = vmatprep.subr.bf16.mxu0 0
    %522 = vmatpush1.bf16.msra.mxu0 0
    %523 = vmatprep.subr.bf16.mxu0 0
    %524 = vmatpush1.bf16.msra.mxu0 0
    %525 = vmatprep.subr.bf16.mxu0 0
    %526 = vmatpush1.bf16.msra.mxu0 0
    %527 = vmatprep.mubr.bf16.mxu0 0
    %528 = vmatmul.mubr.bf16.gmra.mrb[0].mxu0 %v490
    %v529 = vpop.f32.mrb[0].mxu0
    %v530 = vadd.f32 %v482, %v529
    %v531 = vpop.f32.mrb[0].mxu0
    %v532 = vpop.f32.mrb[0].mxu0
    %v533 = vpop.f32.mrb[0].mxu0
    %534 = vdwg.mxu0
    %535 = vrot.lane.b32.xlu0 %v270, 112
    %v536 = vpop.permute.xlu0 %535
    %v538 = vsel %vm316, %v536, 0
    %v541 = vsel %vm320, %v308, 0
    %543 = vmatprep.subr.bf16.mxu0 0
    %544 = vmatpush1.bf16.msra.mxu0 %v541
    %545 = vmatprep.subr.bf16.mxu0 0
    %546 = vmatpush1.bf16.msra.mxu0 0
    %547 = vmatprep.subr.bf16.mxu0 0
    %548 = vmatpush1.bf16.msra.mxu0 0
    %549 = vmatprep.subr.bf16.mxu0 0
    %550 = vmatpush1.bf16.msra.mxu0 0
    %551 = vmatprep.subr.bf16.mxu0 0
    %552 = vmatpush1.bf16.msra.mxu0 0
    %553 = vmatprep.subr.bf16.mxu0 0
    %554 = vmatpush1.bf16.msra.mxu0 0
    %555 = vmatprep.subr.bf16.mxu0 0
    %556 = vmatpush1.bf16.msra.mxu0 0
    %557 = vmatprep.subr.bf16.mxu0 0
    %558 = vmatpush1.bf16.msra.mxu0 0
    %559 = vmatprep.subr.bf16.mxu0 0
    %560 = vmatpush1.bf16.msra.mxu0 0
    %561 = vmatprep.subr.bf16.mxu0 0
    %562 = vmatpush1.bf16.msra.mxu0 0
    %563 = vmatprep.subr.bf16.mxu0 0
    %564 = vmatpush1.bf16.msra.mxu0 0
    %565 = vmatprep.subr.bf16.mxu0 0
    %566 = vmatpush1.bf16.msra.mxu0 0
    %567 = vmatprep.subr.bf16.mxu0 0
    %568 = vmatpush1.bf16.msra.mxu0 0
    %569 = vmatprep.subr.bf16.mxu0 0
    %570 = vmatpush1.bf16.msra.mxu0 0
    %571 = vmatprep.subr.bf16.mxu0 0
    %572 = vmatpush1.bf16.msra.mxu0 0
    %573 = vmatprep.subr.bf16.mxu0 0
    %574 = vmatpush1.bf16.msra.mxu0 0
    %575 = vmatprep.mubr.bf16.mxu0 0
    %576 = vmatmul.mubr.bf16.gmra.mrb[0].mxu0 %v538
    %v577 = vpop.f32.mrb[0].mxu0
    %v578 = vadd.f32 %v314, %v577
    %v579 = vpop.f32.mrb[0].mxu0
    %v580 = vpop.f32.mrb[0].mxu0
    %v581 = vpop.f32.mrb[0].mxu0
    %582 = vdwg.mxu0
    %v583 = vsel %vm316, %v578, -inf
    %584 = vmax.xlane.f32.xlu0 %v583
    %v585 = vpop.xlane.xlu0 %584
    %v586 = vsub.f32 %v578, %v585
    %v587 = vmul.f32 %v586, 1.442695
    %v588 = vpow.pop %v587
    %v589 = vsel %vm316, %v588, 0.0
    %590 = vadd.xlane.f32.xlu0 %v589
    %v591 = vpop.xlane.xlu0 %590
    %v592 = vrcp.pop %v591
    %v593 = vmul.f32 %v588, %v592
    %v594 = vpack.c.bf16 %v593, %v593
    %v596 = vsel %vm316, %v594, 0
    %v599 = vsel %vm320, %v309, 0
    %601 = vmatprep.subr.bf16.mxu0 0
    %602 = vmatpush1.bf16.msra.mxu0 %v599
    %603 = vmatprep.subr.bf16.mxu0 0
    %604 = vmatpush1.bf16.msra.mxu0 0
    %605 = vmatprep.subr.bf16.mxu0 0
    %606 = vmatpush1.bf16.msra.mxu0 0
    %607 = vmatprep.subr.bf16.mxu0 0
    %608 = vmatpush1.bf16.msra.mxu0 0
    %609 = vmatprep.subr.bf16.mxu0 0
    %610 = vmatpush1.bf16.msra.mxu0 0
    %611 = vmatprep.subr.bf16.mxu0 0
    %612 = vmatpush1.bf16.msra.mxu0 0
    %613 = vmatprep.subr.bf16.mxu0 0
    %614 = vmatpush1.bf16.msra.mxu0 0
    %615 = vmatprep.subr.bf16.mxu0 0
    %616 = vmatpush1.bf16.msra.mxu0 0
    %617 = vmatprep.subr.bf16.mxu0 0
    %618 = vmatpush1.bf16.msra.mxu0 0
    %619 = vmatprep.subr.bf16.mxu0 0
    %620 = vmatpush1.bf16.msra.mxu0 0
    %621 = vmatprep.subr.bf16.mxu0 0
    %622 = vmatpush1.bf16.msra.mxu0 0
    %623 = vmatprep.subr.bf16.mxu0 0
    %624 = vmatpush1.bf16.msra.mxu0 0
    %625 = vmatprep.subr.bf16.mxu0 0
    %626 = vmatpush1.bf16.msra.mxu0 0
    %627 = vmatprep.subr.bf16.mxu0 0
    %628 = vmatpush1.bf16.msra.mxu0 0
    %629 = vmatprep.subr.bf16.mxu0 0
    %630 = vmatpush1.bf16.msra.mxu0 0
    %631 = vmatprep.subr.bf16.mxu0 0
    %632 = vmatpush1.bf16.msra.mxu0 0
    %633 = vmatprep.mubr.bf16.mxu0 0
    %634 = vmatmul.mubr.bf16.gmra.mrb[0].mxu0 %v596
    %v635 = vpop.f32.mrb[0].mxu0
    %v636 = vadd.f32 0.0, %v635
    %v637 = vpop.f32.mrb[0].mxu0
    %v638 = vpop.f32.mrb[0].mxu0
    %v639 = vpop.f32.mrb[0].mxu0
    %640 = vdwg.mxu0
    %v641 = vadd.f32 %v530, %v636
    %642 = vrot.lane.b32.xlu0 %v270, 104
    %v643 = vpop.permute.xlu0 %642
    %v645 = vrot.slane %v308, 4
    %v647 = vsel %vm316, %v643, 0
    %v650 = vsel %vm320, %v645, 0
    %652 = vmatprep.subr.bf16.mxu0 0
    %653 = vmatpush1.bf16.msra.mxu0 %v650
    %654 = vmatprep.subr.bf16.mxu0 0
    %655 = vmatpush1.bf16.msra.mxu0 0
    %656 = vmatprep.subr.bf16.mxu0 0
    %657 = vmatpush1.bf16.msra.mxu0 0
    %658 = vmatprep.subr.bf16.mxu0 0
    %659 = vmatpush1.bf16.msra.mxu0 0
    %660 = vmatprep.subr.bf16.mxu0 0
    %661 = vmatpush1.bf16.msra.mxu0 0
    %662 = vmatprep.subr.bf16.mxu0 0
    %663 = vmatpush1.bf16.msra.mxu0 0
    %664 = vmatprep.subr.bf16.mxu0 0
    %665 = vmatpush1.bf16.msra.mxu0 0
    %666 = vmatprep.subr.bf16.mxu0 0
    %667 = vmatpush1.bf16.msra.mxu0 0
    %668 = vmatprep.subr.bf16.mxu0 0
    %669 = vmatpush1.bf16.msra.mxu0 0
    %670 = vmatprep.subr.bf16.mxu0 0
    %671 = vmatpush1.bf16.msra.mxu0 0
    %672 = vmatprep.subr.bf16.mxu0 0
    %673 = vmatpush1.bf16.msra.mxu0 0
    %674 = vmatprep.subr.bf16.mxu0 0
    %675 = vmatpush1.bf16.msra.mxu0 0
    %676 = vmatprep.subr.bf16.mxu0 0
    %677 = vmatpush1.bf16.msra.mxu0 0
    %678 = vmatprep.subr.bf16.mxu0 0
    %679 = vmatpush1.bf16.msra.mxu0 0
    %680 = vmatprep.subr.bf16.mxu0 0
    %681 = vmatpush1.bf16.msra.mxu0 0
    %682 = vmatprep.subr.bf16.mxu0 0
    %683 = vmatpush1.bf16.msra.mxu0 0
    %684 = vmatprep.mubr.bf16.mxu0 0
    %685 = vmatmul.mubr.bf16.gmra.mrb[0].mxu0 %v647
    %v686 = vpop.f32.mrb[0].mxu0
    %v687 = vadd.f32 %v314, %v686
    %v688 = vpop.f32.mrb[0].mxu0
    %v689 = vpop.f32.mrb[0].mxu0
    %v690 = vpop.f32.mrb[0].mxu0
    %691 = vdwg.mxu0
    %v692 = vsel %vm316, %v687, -inf
    %693 = vmax.xlane.f32.xlu0 %v692
    %v694 = vpop.xlane.xlu0 %693
    %v695 = vsub.f32 %v687, %v694
    %v696 = vmul.f32 %v695, 1.442695
    %v697 = vpow.pop %v696
    %v698 = vsel %vm316, %v697, 0.0
    %699 = vadd.xlane.f32.xlu0 %v698
    %v700 = vpop.xlane.xlu0 %699
    %v701 = vrcp.pop %v700
    %v702 = vmul.f32 %v697, %v701
    %v703 = vpack.c.bf16 %v702, %v702
    %705 = vrot.lane.b32.xlu0 %v309, 96
    %v706 = vpop.permute.xlu0 %705
    %v708 = vsel %vm316, %v703, 0
    %v711 = vsel %vm320, %v706, 0
    %713 = vmatprep.subr.bf16.mxu0 0
    %714 = vmatpush1.bf16.msra.mxu0 %v711
    %715 = vmatprep.subr.bf16.mxu0 0
    %716 = vmatpush1.bf16.msra.mxu0 0
    %717 = vmatprep.subr.bf16.mxu0 0
    %718 = vmatpush1.bf16.msra.mxu0 0
    %719 = vmatprep.subr.bf16.mxu0 0
    %720 = vmatpush1.bf16.msra.mxu0 0
    %721 = vmatprep.subr.bf16.mxu0 0
    %722 = vmatpush1.bf16.msra.mxu0 0
    %723 = vmatprep.subr.bf16.mxu0 0
    %724 = vmatpush1.bf16.msra.mxu0 0
    %725 = vmatprep.subr.bf16.mxu0 0
    %726 = vmatpush1.bf16.msra.mxu0 0
    %727 = vmatprep.subr.bf16.mxu0 0
    %728 = vmatpush1.bf16.msra.mxu0 0
    %729 = vmatprep.subr.bf16.mxu0 0
    %730 = vmatpush1.bf16.msra.mxu0 0
    %731 = vmatprep.subr.bf16.mxu0 0
    %732 = vmatpush1.bf16.msra.mxu0 0
    %733 = vmatprep.subr.bf16.mxu0 0
    %734 = vmatpush1.bf16.msra.mxu0 0
    %735 = vmatprep.subr.bf16.mxu0 0
    %736 = vmatpush1.bf16.msra.mxu0 0
    %737 = vmatprep.subr.bf16.mxu0 0
    %738 = vmatpush1.bf16.msra.mxu0 0
    %739 = vmatprep.subr.bf16.mxu0 0
    %740 = vmatpush1.bf16.msra.mxu0 0
    %741 = vmatprep.subr.bf16.mxu0 0
    %742 = vmatpush1.bf16.msra.mxu0 0
    %743 = vmatprep.subr.bf16.mxu0 0
    %744 = vmatpush1.bf16.msra.mxu0 0
    %745 = vmatprep.mubr.bf16.mxu0 0
    %746 = vmatmul.mubr.bf16.gmra.mrb[0].mxu0 %v708
    %v747 = vpop.f32.mrb[0].mxu0
    %v748 = vadd.f32 0.0, %v747
    %v749 = vpop.f32.mrb[0].mxu0
    %v750 = vpop.f32.mrb[0].mxu0
    %v751 = vpop.f32.mrb[0].mxu0
    %752 = vdwg.mxu0
    %v753 = vadd.f32 %v641, %v748
    %v754 = vpack.c.bf16 %v266, %v266
    %756 = vrot.lane.b32.xlu0 %v266, 96
    %v757 = vpop.permute.xlu0 %756
    %759 = vxpose.xlu0.b32.start [1/16] %v757, 128
    %760 = vxpose.xlu0.b32.cont [2/16] 0.0, 128
    %761 = vxpose.xlu0.b32.cont [3/16] 0.0, 128
    %762 = vxpose.xlu0.b32.cont [4/16] 0.0, 128
    %763 = vxpose.xlu0.b32.cont [5/16] 0.0, 128
    %764 = vxpose.xlu0.b32.cont [6/16] 0.0, 128
    %765 = vxpose.xlu0.b32.cont [7/16] 0.0, 128
    %766 = vxpose.xlu0.b32.cont [8/16] 0.0, 128
    %767 = vxpose.xlu0.b32.cont [9/16] 0.0, 128
    %768 = vxpose.xlu0.b32.cont [10/16] 0.0, 128
    %769 = vxpose.xlu0.b32.cont [11/16] 0.0, 128
    %770 = vxpose.xlu0.b32.cont [12/16] 0.0, 128
    %771 = vxpose.xlu0.b32.cont [13/16] 0.0, 128
    %772 = vxpose.xlu0.b32.cont [14/16] 0.0, 128
    %773 = vxpose.xlu0.b32.cont [15/16] 0.0, 128
    %774 = vxpose.xlu0.b32.end [16/16] 0.0, 128
    %v775 = vpop.trf.xlu0
    %v776 = vpop.trf.xlu0
    %v777 = vpop.trf.xlu0
    %v778 = vpop.trf.xlu0
    %v779 = vpop.trf.xlu0
    %v780 = vpop.trf.xlu0
    %v781 = vpop.trf.xlu0
    %v782 = vpop.trf.xlu0
    %v783 = vpop.trf.xlu0
    %v784 = vpop.trf.xlu0
    %v785 = vpop.trf.xlu0
    %v786 = vpop.trf.xlu0
    %v787 = vpop.trf.xlu0
    %v788 = vpop.trf.xlu0
    %v789 = vpop.trf.xlu0
    %v790 = vpop.trf.xlu0
    %v791 = vpack.c.bf16 %v776, %v775
    %v792 = vpack.c.bf16 %v778, %v777
    %v793 = vpack.c.bf16 %v268, %v268
    %v795 = vlaneseq
    %v796 = vshrl.u32 %v795, 7
    %v797 = vsub.s32 0, %v796
    %v798 = vrot.slane %v115, %v797
    %v801 = vsel %vm316, %v754, 0
    %v804 = vsel %vm320, %v791, 0
    %806 = vmatprep.subr.bf16.mxu0 0
    %807 = vmatpush1.bf16.msra.mxu0 %v804
    %808 = vmatprep.subr.bf16.mxu0 0
    %809 = vmatpush1.bf16.msra.mxu0 0
    %810 = vmatprep.subr.bf16.mxu0 0
    %811 = vmatpush1.bf16.msra.mxu0 0
    %812 = vmatprep.subr.bf16.mxu0 0
    %813 = vmatpush1.bf16.msra.mxu0 0
    %814 = vmatprep.subr.bf16.mxu0 0
    %815 = vmatpush1.bf16.msra.mxu0 0
    %816 = vmatprep.subr.bf16.mxu0 0
    %817 = vmatpush1.bf16.msra.mxu0 0
    %818 = vmatprep.subr.bf16.mxu0 0
    %819 = vmatpush1.bf16.msra.mxu0 0
    %820 = vmatprep.subr.bf16.mxu0 0
    %821 = vmatpush1.bf16.msra.mxu0 0
    %822 = vmatprep.subr.bf16.mxu0 0
    %823 = vmatpush1.bf16.msra.mxu0 0
    %824 = vmatprep.subr.bf16.mxu0 0
    %825 = vmatpush1.bf16.msra.mxu0 0
    %826 = vmatprep.subr.bf16.mxu0 0
    %827 = vmatpush1.bf16.msra.mxu0 0
    %828 = vmatprep.subr.bf16.mxu0 0
    %829 = vmatpush1.bf16.msra.mxu0 0
    %830 = vmatprep.subr.bf16.mxu0 0
    %831 = vmatpush1.bf16.msra.mxu0 0
    %832 = vmatprep.subr.bf16.mxu0 0
    %833 = vmatpush1.bf16.msra.mxu0 0
    %834 = vmatprep.subr.bf16.mxu0 0
    %835 = vmatpush1.bf16.msra.mxu0 0
    %836 = vmatprep.subr.bf16.mxu0 0
    %837 = vmatpush1.bf16.msra.mxu0 0
    %838 = vmatprep.mubr.bf16.mxu0 0
    %839 = vmatmul.mubr.bf16.gmra.mrb[0].mxu0 %v801
    %v840 = vpop.f32.mrb[0].mxu0
    %v841 = vadd.f32 %v798, %v840
    %v842 = vpop.f32.mrb[0].mxu0
    %v843 = vpop.f32.mrb[0].mxu0
    %v844 = vpop.f32.mrb[0].mxu0
    %845 = vdwg.mxu0
    %v846 = vsel %vm316, %v841, -inf
    %847 = vmax.xlane.f32.xlu0 %v846
    %v848 = vpop.xlane.xlu0 %847
    %v849 = vsub.f32 %v841, %v848
    %v850 = vmul.f32 %v849, 1.442695
    %v851 = vpow.pop %v850
    %v852 = vsel %vm316, %v851, 0.0
    %853 = vadd.xlane.f32.xlu0 %v852
    %v854 = vpop.xlane.xlu0 %853
    %v855 = vrcp.pop %v854
    %v856 = vmul.f32 %v851, %v855
    %v857 = vpack.c.bf16 %v856, %v856
    %859 = vrot.lane.b32.xlu0 %v754, 120
    %v860 = vpop.permute.xlu0 %859
    %v862 = vrot.slane %v791, 4
    %v864 = vsel %vm316, %v860, 0
    %v867 = vsel %vm320, %v862, 0
    %869 = vmatprep.subr.bf16.mxu0 0
    %870 = vmatpush1.bf16.msra.mxu0 %v867
    %871 = vmatprep.subr.bf16.mxu0 0
    %872 = vmatpush1.bf16.msra.mxu0 0
    %873 = vmatprep.subr.bf16.mxu0 0
    %874 = vmatpush1.bf16.msra.mxu0 0
    %875 = vmatprep.subr.bf16.mxu0 0
    %876 = vmatpush1.bf16.msra.mxu0 0
    %877 = vmatprep.subr.bf16.mxu0 0
    %878 = vmatpush1.bf16.msra.mxu0 0
    %879 = vmatprep.subr.bf16.mxu0 0
    %880 = vmatpush1.bf16.msra.mxu0 0
    %881 = vmatprep.subr.bf16.mxu0 0
    %882 = vmatpush1.bf16.msra.mxu0 0
    %883 = vmatprep.subr.bf16.mxu0 0
    %884 = vmatpush1.bf16.msra.mxu0 0
    %885 = vmatprep.subr.bf16.mxu0 0
    %886 = vmatpush1.bf16.msra.mxu0 0
    %887 = vmatprep.subr.bf16.mxu0 0
    %888 = vmatpush1.bf16.msra.mxu0 0
    %889 = vmatprep.subr.bf16.mxu0 0
    %890 = vmatpush1.bf16.msra.mxu0 0
    %891 = vmatprep.subr.bf16.mxu0 0
    %892 = vmatpush1.bf16.msra.mxu0 0
    %893 = vmatprep.subr.bf16.mxu0 0
    %894 = vmatpush1.bf16.msra.mxu0 0
    %895 = vmatprep.subr.bf16.mxu0 0
    %896 = vmatpush1.bf16.msra.mxu0 0
    %897 = vmatprep.subr.bf16.mxu0 0
    %898 = vmatpush1.bf16.msra.mxu0 0
    %899 = vmatprep.subr.bf16.mxu0 0
    %900 = vmatpush1.bf16.msra.mxu0 0
    %901 = vmatprep.mubr.bf16.mxu0 0
    %902 = vmatmul.mubr.bf16.gmra.mrb[0].mxu0 %v864
    %v903 = vpop.f32.mrb[0].mxu0
    %v904 = vadd.f32 %v798, %v903
    %v905 = vpop.f32.mrb[0].mxu0
    %v906 = vpop.f32.mrb[0].mxu0
    %v907 = vpop.f32.mrb[0].mxu0
    %908 = vdwg.mxu0
    %v909 = vsel %vm316, %v904, -inf
    %910 = vmax.xlane.f32.xlu0 %v909
    %v911 = vpop.xlane.xlu0 %910
    %v912 = vsub.f32 %v904, %v911
    %v913 = vmul.f32 %v912, 1.442695
    %v914 = vpow.pop %v913
    %v915 = vsel %vm316, %v914, 0.0
    %916 = vadd.xlane.f32.xlu0 %v915
    %v917 = vpop.xlane.xlu0 %916
    %v918 = vrcp.pop %v917
    %v919 = vmul.f32 %v914, %v918
    %v920 = vpack.c.bf16 %v919, %v919
    %921 = vrot.lane.b32.xlu0 %v754, 32
    %v922 = vpop.permute.xlu0 %921
    %v924 = vsel %vm316, %v920, 0
    %v927 = vsel %vm320, %v922, 0
    %929 = vmatprep.subr.bf16.mxu0 0
    %930 = vmatpush1.bf16.msra.mxu0 %v927
    %931 = vmatprep.subr.bf16.mxu0 0
    %932 = vmatpush1.bf16.msra.mxu0 0
    %933 = vmatprep.subr.bf16.mxu0 0
    %934 = vmatpush1.bf16.msra.mxu0 0
    %935 = vmatprep.subr.bf16.mxu0 0
    %936 = vmatpush1.bf16.msra.mxu0 0
    %937 = vmatprep.subr.bf16.mxu0 0
    %938 = vmatpush1.bf16.msra.mxu0 0
    %939 = vmatprep.subr.bf16.mxu0 0
    %940 = vmatpush1.bf16.msra.mxu0 0
    %941 = vmatprep.subr.bf16.mxu0 0
    %942 = vmatpush1.bf16.msra.mxu0 0
    %943 = vmatprep.subr.bf16.mxu0 0
    %944 = vmatpush1.bf16.msra.mxu0 0
    %945 = vmatprep.subr.bf16.mxu0 0
    %946 = vmatpush1.bf16.msra.mxu0 0
    %947 = vmatprep.subr.bf16.mxu0 0
    %948 = vmatpush1.bf16.msra.mxu0 0
    %949 = vmatprep.subr.bf16.mxu0 0
    %950 = vmatpush1.bf16.msra.mxu0 0
    %951 = vmatprep.subr.bf16.mxu0 0
    %952 = vmatpush1.bf16.msra.mxu0 0
    %953 = vmatprep.subr.bf16.mxu0 0
    %954 = vmatpush1.bf16.msra.mxu0 0
    %955 = vmatprep.subr.bf16.mxu0 0
    %956 = vmatpush1.bf16.msra.mxu0 0
    %957 = vmatprep.subr.bf16.mxu0 0
    %958 = vmatpush1.bf16.msra.mxu0 0
    %959 = vmatprep.subr.bf16.mxu0 0
    %960 = vmatpush1.bf16.msra.mxu0 0
    %961 = vmatprep.mubr.bf16.mxu0 0
    %962 = vmatmul.mubr.bf16.gmra.mrb[0].mxu0 %v924
    %v963 = vpop.f32.mrb[0].mxu0
    %v964 = vadd.f32 0.0, %v963
    %v965 = vpop.f32.mrb[0].mxu0
    %v966 = vpop.f32.mrb[0].mxu0
    %v967 = vpop.f32.mrb[0].mxu0
    %968 = vdwg.mxu0
    %969 = vrot.lane.b32.xlu0 %v754, 64
    %v970 = vpop.permute.xlu0 %969
    %v972 = vsel %vm316, %v857, 0
    %v975 = vsel %vm320, %v970, 0
    %977 = vmatprep.subr.bf16.mxu0 0
    %978 = vmatpush1.bf16.msra.mxu0 %v975
    %979 = vmatprep.subr.bf16.mxu0 0
    %980 = vmatpush1.bf16.msra.mxu0 0
    %981 = vmatprep.subr.bf16.mxu0 0
    %982 = vmatpush1.bf16.msra.mxu0 0
    %983 = vmatprep.subr.bf16.mxu0 0
    %984 = vmatpush1.bf16.msra.mxu0 0
    %985 = vmatprep.subr.bf16.mxu0 0
    %986 = vmatpush1.bf16.msra.mxu0 0
    %987 = vmatprep.subr.bf16.mxu0 0
    %988 = vmatpush1.bf16.msra.mxu0 0
    %989 = vmatprep.subr.bf16.mxu0 0
    %990 = vmatpush1.bf16.msra.mxu0 0
    %991 = vmatprep.subr.bf16.mxu0 0
    %992 = vmatpush1.bf16.msra.mxu0 0
    %993 = vmatprep.subr.bf16.mxu0 0
    %994 = vmatpush1.bf16.msra.mxu0 0
    %995 = vmatprep.subr.bf16.mxu0 0
    %996 = vmatpush1.bf16.msra.mxu0 0
    %997 = vmatprep.subr.bf16.mxu0 0
    %998 = vmatpush1.bf16.msra.mxu0 0
    %999 = vmatprep.subr.bf16.mxu0 0
    %1000 = vmatpush1.bf16.msra.mxu0 0
    %1001 = vmatprep.subr.bf16.mxu0 0
    %1002 = vmatpush1.bf16.msra.mxu0 0
    %1003 = vmatprep.subr.bf16.mxu0 0
    %1004 = vmatpush1.bf16.msra.mxu0 0
    %1005 = vmatprep.subr.bf16.mxu0 0
    %1006 = vmatpush1.bf16.msra.mxu0 0
    %1007 = vmatprep.subr.bf16.mxu0 0
    %1008 = vmatpush1.bf16.msra.mxu0 0
    %1009 = vmatprep.mubr.bf16.mxu0 0
    %1010 = vmatmul.mubr.bf16.gmra.mrb[0].mxu0 %v972
    %v1011 = vpop.f32.mrb[0].mxu0
    %v1012 = vadd.f32 %v964, %v1011
    %v1013 = vpop.f32.mrb[0].mxu0
    %v1014 = vpop.f32.mrb[0].mxu0
    %v1015 = vpop.f32.mrb[0].mxu0
    %1016 = vdwg.mxu0
    %1017 = vrot.lane.b32.xlu0 %v754, 112
    %v1018 = vpop.permute.xlu0 %1017
    %v1020 = vsel %vm316, %v1018, 0
    %v1023 = vsel %vm320, %v792, 0
    %1025 = vmatprep.subr.bf16.mxu0 0
    %1026 = vmatpush1.bf16.msra.mxu0 %v1023
    %1027 = vmatprep.subr.bf16.mxu0 0
    %1028 = vmatpush1.bf16.msra.mxu0 0
    %1029 = vmatprep.subr.bf16.mxu0 0
    %1030 = vmatpush1.bf16.msra.mxu0 0
    %1031 = vmatprep.subr.bf16.mxu0 0
    %1032 = vmatpush1.bf16.msra.mxu0 0
    %1033 = vmatprep.subr.bf16.mxu0 0
    %1034 = vmatpush1.bf16.msra.mxu0 0
    %1035 = vmatprep.subr.bf16.mxu0 0
    %1036 = vmatpush1.bf16.msra.mxu0 0
    %1037 = vmatprep.subr.bf16.mxu0 0
    %1038 = vmatpush1.bf16.msra.mxu0 0
    %1039 = vmatprep.subr.bf16.mxu0 0
    %1040 = vmatpush1.bf16.msra.mxu0 0
    %1041 = vmatprep.subr.bf16.mxu0 0
    %1042 = vmatpush1.bf16.msra.mxu0 0
    %1043 = vmatprep.subr.bf16.mxu0 0
    %1044 = vmatpush1.bf16.msra.mxu0 0
    %1045 = vmatprep.subr.bf16.mxu0 0
    %1046 = vmatpush1.bf16.msra.mxu0 0
    %1047 = vmatprep.subr.bf16.mxu0 0
    %1048 = vmatpush1.bf16.msra.mxu0 0
    %1049 = vmatprep.subr.bf16.mxu0 0
    %1050 = vmatpush1.bf16.msra.mxu0 0
    %1051 = vmatprep.subr.bf16.mxu0 0
    %1052 = vmatpush1.bf16.msra.mxu0 0
    %1053 = vmatprep.subr.bf16.mxu0 0
    %1054 = vmatpush1.bf16.msra.mxu0 0
    %1055 = vmatprep.subr.bf16.mxu0 0
    %1056 = vmatpush1.bf16.msra.mxu0 0
    %1057 = vmatprep.mubr.bf16.mxu0 0
    %1058 = vmatmul.mubr.bf16.gmra.mrb[0].mxu0 %v1020
    %v1059 = vpop.f32.mrb[0].mxu0
    %v1060 = vadd.f32 %v798, %v1059
    %v1061 = vpop.f32.mrb[0].mxu0
    %v1062 = vpop.f32.mrb[0].mxu0
    %v1063 = vpop.f32.mrb[0].mxu0
    %1064 = vdwg.mxu0
    %v1065 = vsel %vm316, %v1060, -inf
    %1066 = vmax.xlane.f32.xlu0 %v1065
    %v1067 = vpop.xlane.xlu0 %1066
    %v1068 = vsub.f32 %v1060, %v1067
    %v1069 = vmul.f32 %v1068, 1.442695
    %v1070 = vpow.pop %v1069
    %v1071 = vsel %vm316, %v1070, 0.0
    %1072 = vadd.xlane.f32.xlu0 %v1071
    %v1073 = vpop.xlane.xlu0 %1072
    %v1074 = vrcp.pop %v1073
    %v1075 = vmul.f32 %v1070, %v1074
    %v1076 = vpack.c.bf16 %v1075, %v1075
    %v1078 = vsel %vm316, %v1076, 0
    %v1081 = vsel %vm320, %v793, 0
    %1083 = vmatprep.subr.bf16.mxu0 0
    %1084 = vmatpush1.bf16.msra.mxu0 %v1081
    %1085 = vmatprep.subr.bf16.mxu0 0
    %1086 = vmatpush1.bf16.msra.mxu0 0
    %1087 = vmatprep.subr.bf16.mxu0 0
    %1088 = vmatpush1.bf16.msra.mxu0 0
    %1089 = vmatprep.subr.bf16.mxu0 0
    %1090 = vmatpush1.bf16.msra.mxu0 0
    %1091 = vmatprep.subr.bf16.mxu0 0
    %1092 = vmatpush1.bf16.msra.mxu0 0
    %1093 = vmatprep.subr.bf16.mxu0 0
    %1094 = vmatpush1.bf16.msra.mxu0 0
    %1095 = vmatprep.subr.bf16.mxu0 0
    %1096 = vmatpush1.bf16.msra.mxu0 0
    %1097 = vmatprep.subr.bf16.mxu0 0
    %1098 = vmatpush1.bf16.msra.mxu0 0
    %1099 = vmatprep.subr.bf16.mxu0 0
    %1100 = vmatpush1.bf16.msra.mxu0 0
    %1101 = vmatprep.subr.bf16.mxu0 0
    %1102 = vmatpush1.bf16.msra.mxu0 0
    %1103 = vmatprep.subr.bf16.mxu0 0
    %1104 = vmatpush1.bf16.msra.mxu0 0
    %1105 = vmatprep.subr.bf16.mxu0 0
    %1106 = vmatpush1.bf16.msra.mxu0 0
    %1107 = vmatprep.subr.bf16.mxu0 0
    %1108 = vmatpush1.bf16.msra.mxu0 0
    %1109 = vmatprep.subr.bf16.mxu0 0
    %1110 = vmatpush1.bf16.msra.mxu0 0
    %1111 = vmatprep.subr.bf16.mxu0 0
    %1112 = vmatpush1.bf16.msra.mxu0 0
    %1113 = vmatprep.subr.bf16.mxu0 0
    %1114 = vmatpush1.bf16.msra.mxu0 0
    %1115 = vmatprep.mubr.bf16.mxu0 0
    %1116 = vmatmul.mubr.bf16.gmra.mrb[0].mxu0 %v1078
    %v1117 = vpop.f32.mrb[0].mxu0
    %v1118 = vadd.f32 0.0, %v1117
    %v1119 = vpop.f32.mrb[0].mxu0
    %v1120 = vpop.f32.mrb[0].mxu0
    %v1121 = vpop.f32.mrb[0].mxu0
    %1122 = vdwg.mxu0
    %v1123 = vadd.f32 %v1012, %v1118
    %1124 = vrot.lane.b32.xlu0 %v754, 104
    %v1125 = vpop.permute.xlu0 %1124
    %v1127 = vrot.slane %v792, 4
    %v1129 = vsel %vm316, %v1125, 0
    %v1132 = vsel %vm320, %v1127, 0
    %1134 = vmatprep.subr.bf16.mxu0 0
    %1135 = vmatpush1.bf16.msra.mxu0 %v1132
    %1136 = vmatprep.subr.bf16.mxu0 0
    %1137 = vmatpush1.bf16.msra.mxu0 0
    %1138 = vmatprep.subr.bf16.mxu0 0
    %1139 = vmatpush1.bf16.msra.mxu0 0
    %1140 = vmatprep.subr.bf16.mxu0 0
    %1141 = vmatpush1.bf16.msra.mxu0 0
    %1142 = vmatprep.subr.bf16.mxu0 0
    %1143 = vmatpush1.bf16.msra.mxu0 0
    %1144 = vmatprep.subr.bf16.mxu0 0
    %1145 = vmatpush1.bf16.msra.mxu0 0
    %1146 = vmatprep.subr.bf16.mxu0 0
    %1147 = vmatpush1.bf16.msra.mxu0 0
    %1148 = vmatprep.subr.bf16.mxu0 0
    %1149 = vmatpush1.bf16.msra.mxu0 0
    %1150 = vmatprep.subr.bf16.mxu0 0
    %1151 = vmatpush1.bf16.msra.mxu0 0
    %1152 = vmatprep.subr.bf16.mxu0 0
    %1153 = vmatpush1.bf16.msra.mxu0 0
    %1154 = vmatprep.subr.bf16.mxu0 0
    %1155 = vmatpush1.bf16.msra.mxu0 0
    %1156 = vmatprep.subr.bf16.mxu0 0
    %1157 = vmatpush1.bf16.msra.mxu0 0
    %1158 = vmatprep.subr.bf16.mxu0 0
    %1159 = vmatpush1.bf16.msra.mxu0 0
    %1160 = vmatprep.subr.bf16.mxu0 0
    %1161 = vmatpush1.bf16.msra.mxu0 0
    %1162 = vmatprep.subr.bf16.mxu0 0
    %1163 = vmatpush1.bf16.msra.mxu0 0
    %1164 = vmatprep.subr.bf16.mxu0 0
    %1165 = vmatpush1.bf16.msra.mxu0 0
    %1166 = vmatprep.mubr.bf16.mxu0 0
    %1167 = vmatmul.mubr.bf16.gmra.mrb[0].mxu0 %v1129
    %v1168 = vpop.f32.mrb[0].mxu0
    %v1169 = vadd.f32 %v798, %v1168
    %v1170 = vpop.f32.mrb[0].mxu0
    %v1171 = vpop.f32.mrb[0].mxu0
    %v1172 = vpop.f32.mrb[0].mxu0
    %1173 = vdwg.mxu0
    %v1174 = vsel %vm316, %v1169, -inf
    %1175 = vmax.xlane.f32.xlu0 %v1174
    %v1176 = vpop.xlane.xlu0 %1175
    %v1177 = vsub.f32 %v1169, %v1176
    %v1178 = vmul.f32 %v1177, 1.442695
    %v1179 = vpow.pop %v1178
    %v1180 = vsel %vm316, %v1179, 0.0
    %1181 = vadd.xlane.f32.xlu0 %v1180
    %v1182 = vpop.xlane.xlu0 %1181
    %v1183 = vrcp.pop %v1182
    %v1184 = vmul.f32 %v1179, %v1183
    %v1185 = vpack.c.bf16 %v1184, %v1184
    %1187 = vrot.lane.b32.xlu0 %v793, 96
    %v1188 = vpop.permute.xlu0 %1187
    %v1190 = vsel %vm316, %v1185, 0
    %v1193 = vsel %vm320, %v1188, 0
    %1195 = vmatprep.subr.bf16.mxu0 0
    %1196 = vmatpush1.bf16.msra.mxu0 %v1193
    %1197 = vmatprep.subr.bf16.mxu0 0
    %1198 = vmatpush1.bf16.msra.mxu0 0
    %1199 = vmatprep.subr.bf16.mxu0 0
    %1200 = vmatpush1.bf16.msra.mxu0 0
    %1201 = vmatprep.subr.bf16.mxu0 0
    %1202 = vmatpush1.bf16.msra.mxu0 0
    %1203 = vmatprep.subr.bf16.mxu0 0
    %1204 = vmatpush1.bf16.msra.mxu0 0
    %1205 = vmatprep.subr.bf16.mxu0 0
    %1206 = vmatpush1.bf16.msra.mxu0 0
    %1207 = vmatprep.subr.bf16.mxu0 0
    %1208 = vmatpush1.bf16.msra.mxu0 0
    %1209 = vmatprep.subr.bf16.mxu0 0
    %1210 = vmatpush1.bf16.msra.mxu0 0
    %1211 = vmatprep.subr.bf16.mxu0 0
    %1212 = vmatpush1.bf16.msra.mxu0 0
    %1213 = vmatprep.subr.bf16.mxu0 0
    %1214 = vmatpush1.bf16.msra.mxu0 0
    %1215 = vmatprep.subr.bf16.mxu0 0
    %1216 = vmatpush1.bf16.msra.mxu0 0
    %1217 = vmatprep.subr.bf16.mxu0 0
    %1218 = vmatpush1.bf16.msra.mxu0 0
    %1219 = vmatprep.subr.bf16.mxu0 0
    %1220 = vmatpush1.bf16.msra.mxu0 0
    %1221 = vmatprep.subr.bf16.mxu0 0
    %1222 = vmatpush1.bf16.msra.mxu0 0
    %1223 = vmatprep.subr.bf16.mxu0 0
    %1224 = vmatpush1.bf16.msra.mxu0 0
    %1225 = vmatprep.subr.bf16.mxu0 0
    %1226 = vmatpush1.bf16.msra.mxu0 0
    %1227 = vmatprep.mubr.bf16.mxu0 0
    %1228 = vmatmul.mubr.bf16.gmra.mrb[0].mxu0 %v1190
    %v1229 = vpop.f32.mrb[0].mxu0
    %v1230 = vadd.f32 0.0, %v1229
    %v1231 = vpop.f32.mrb[0].mxu0
    %v1232 = vpop.f32.mrb[0].mxu0
    %v1233 = vpop.f32.mrb[0].mxu0
    %1234 = vdwg.mxu0
    %v1235 = vadd.f32 %v1123, %v1230
    %v1236 = vadd.f32 %v112, %v753
    %v1237 = vadd.f32 %v113, %v1235
    %v1239 = vlaneseq
    %v1240 = vshrl.u32 %v1239, 7
    %v1241 = vsub.s32 0, %v1240
    %v1242 = vrot.slane %v123, %v1241
    %v1244 = vadd.f32 %v1236, %v1242
    %v1245 = vadd.f32 %v1237, %v1242
    %v1246 = vsel %vm138, %v1244, 0.0
    %1247 = vadd.xlane.f32.xlu0 %v1246
    %v1248 = vpop.xlane.xlu0 %1247
    %v1249 = vsel %vm138, %v1245, 0.0
    %1250 = vadd.xlane.f32.xlu0 %v1249
    %v1251 = vpop.xlane.xlu0 %1250
    %v1252 = vmul.f32 %v1248, %v145
    %v1253 = vmul.f32 %v1251, %v145
    %v1254 = vsub.f32 %v1244, %v1252
    %v1255 = vsub.f32 %v1245, %v1253
    %v1256 = vmul.f32 %v1254, %v1254
    %v1257 = vmul.f32 %v1255, %v1255
    %v1258 = vsel %vm138, %v1256, 0.0
    %1259 = vadd.xlane.f32.xlu0 %v1258
    %v1260 = vpop.xlane.xlu0 %1259
    %v1261 = vsel %vm138, %v1257, 0.0
    %1262 = vadd.xlane.f32.xlu0 %v1261
    %v1263 = vpop.xlane.xlu0 %1262
    %v1264 = vmul.f32 %v1260, 0.032258064
    %v1265 = vmul.f32 %v1263, 0.032258064
    %v1266 = vrsqrt.pop %v1264
    %v1267 = vmul.f32 %v1264, %v1266
    %vm1268 = vcmp.eq.f32.partialorder %v1264, inf
    %v1269 = vsel %vm1268, %v1264, %v1267
    %vm1270 = vcmp.eq.f32.partialorder %v1264, 0.0
    %v1271 = vand.u32 %v1264, 2147483648
    %v1272 = vsel %vm1270, %v1271, %v1269
    %v1273 = vrsqrt.pop %v1265
    %v1274 = vmul.f32 %v1265, %v1273
    %vm1275 = vcmp.eq.f32.partialorder %v1265, inf
    %v1276 = vsel %vm1275, %v1265, %v1274
    %vm1277 = vcmp.eq.f32.partialorder %v1265, 0.0
    %v1278 = vand.u32 %v1265, 2147483648
    %v1279 = vsel %vm1277, %v1278, %v1276
    %v1280 = vadd.f32 %v1272, 1e-06
    %v1281 = vadd.f32 %v1279, 1e-06
    %v1282 = vrcp.pop %v1280
    %v1283 = vrcp.pop %v1281
    %v1284 = vmul.f32 %v1254, %v1282
    %v1285 = vmul.f32 %v1255, %v1283
    %v1286 = vlaneseq
    %v1287 = vshrl.u32 %v1286, 7
    %v1288 = vsub.s32 1, %v1287
    %v1289 = vrot.slane %v116, %v1288
    %v1290 = vmul.f32 %v1289, %v1284
    %v1291 = vmul.f32 %v1289, %v1285
    %v1292 = vlaneseq
    %v1293 = vshrl.u32 %v1292, 7
    %v1294 = vsub.s32 1, %v1293
    %v1295 = vrot.slane %v117, %v1294
    %v1296 = vadd.f32 %v1290, %v1295
    %v1297 = vadd.f32 %v1291, %v1295
    %v1298 = vpack.c.bf16 %v1297, %v1296
    %v1300 = vlaneseq
    %v1301 = vshrl.u32 %v1300, 7
    %v1302 = vsub.s32 0, %v1301
    %v1303 = vrot.slane %v128, %v1302
    %v1309 = vunpack.c.l.b16 %v124
    %v1310 = vunpack.c.l.b16 %v125
    %v1311 = vunpack.c.l.b16 %v126
    %v1312 = vunpack.c.l.b16 %v127
    %v1313 = vpack.c.b16 %v1310, %v1309
    %v1314 = vpack.c.b16 %v1312, %v1311
    %v1318 = vsel %vm138, %v1298, 0
    %1320 = vmatprep.subr.bf16.mxu0 0
    %1321 = vmatpush1.bf16.msra.mxu0 %v1313
    %1322 = vmatprep.subr.bf16.mxu0 0
    %1323 = vmatpush1.bf16.msra.mxu0 %v1314
    %1324 = vmatprep.subr.bf16.mxu0 0
    %1325 = vmatpush1.bf16.msra.mxu0 0
    %1326 = vmatprep.subr.bf16.mxu0 0
    %1327 = vmatpush1.bf16.msra.mxu0 0
    %1328 = vmatprep.subr.bf16.mxu0 0
    %1329 = vmatpush1.bf16.msra.mxu0 0
    %1330 = vmatprep.subr.bf16.mxu0 0
    %1331 = vmatpush1.bf16.msra.mxu0 0
    %1332 = vmatprep.subr.bf16.mxu0 0
    %1333 = vmatpush1.bf16.msra.mxu0 0
    %1334 = vmatprep.subr.bf16.mxu0 0
    %1335 = vmatpush1.bf16.msra.mxu0 0
    %1336 = vmatprep.subr.bf16.mxu0 0
    %1337 = vmatpush1.bf16.msra.mxu0 0
    %1338 = vmatprep.subr.bf16.mxu0 0
    %1339 = vmatpush1.bf16.msra.mxu0 0
    %1340 = vmatprep.subr.bf16.mxu0 0
    %1341 = vmatpush1.bf16.msra.mxu0 0
    %1342 = vmatprep.subr.bf16.mxu0 0
    %1343 = vmatpush1.bf16.msra.mxu0 0
    %1344 = vmatprep.subr.bf16.mxu0 0
    %1345 = vmatpush1.bf16.msra.mxu0 0
    %1346 = vmatprep.subr.bf16.mxu0 0
    %1347 = vmatpush1.bf16.msra.mxu0 0
    %1348 = vmatprep.subr.bf16.mxu0 0
    %1349 = vmatpush1.bf16.msra.mxu0 0
    %1350 = vmatprep.subr.bf16.mxu0 0
    %1351 = vmatpush1.bf16.msra.mxu0 0
    %1352 = vmatprep.mubr.bf16.mxu0 0
    %1353 = vmatmul.mubr.bf16.gmra.mrb[0].mxu0 %v1318
    %v1354 = vpop.f32.mrb[0].mxu0
    %v1355 = vadd.f32 %v1303, %v1354
    %v1356 = vpop.f32.mrb[0].mxu0
    %v1357 = vpop.f32.mrb[0].mxu0
    %v1358 = vadd.f32 %v1303, %v1357
    %v1359 = vpop.f32.mrb[0].mxu0
    %1360 = vdwg.mxu0
    %v1361 = vmax.f32 %v1355, 0.0
    %v1362 = vmax.f32 %v1358, 0.0
    %v1363 = vpack.c.bf16 %v1362, %v1361
    %v1365 = vlaneseq
    %v1366 = vshrl.u32 %v1365, 7
    %v1367 = vsub.s32 0, %v1366
    %v1368 = vrot.slane %v137, %v1367
    %v1378 = vunpack.c.l.b16 %v129
    %v1379 = vunpack.c.l.b16 %v130
    %v1380 = vunpack.c.l.b16 %v131
    %v1381 = vunpack.c.l.b16 %v132
    %v1382 = vunpack.c.l.b16 %v133
    %v1383 = vunpack.c.l.b16 %v134
    %v1384 = vunpack.c.l.b16 %v135
    %v1385 = vunpack.c.l.b16 %v136
    %v1386 = vpack.c.b16 %v1379, %v1378
    %v1387 = vpack.c.b16 %v1381, %v1380
    %v1388 = vpack.c.b16 %v1383, %v1382
    %v1389 = vpack.c.b16 %v1385, %v1384
    %vm1394 = vcmask 523264
    %v1396 = vsel %vm1394, %v1363, 0
    %1398 = vmatprep.subr.bf16.mxu0 0
    %1399 = vmatpush1.bf16.msra.mxu0 %v1386
    %1400 = vmatprep.subr.bf16.mxu0 0
    %1401 = vmatpush1.bf16.msra.mxu0 %v1387
    %1402 = vmatprep.subr.bf16.mxu0 0
    %1403 = vmatpush1.bf16.msra.mxu0 %v1388
    %1404 = vmatprep.subr.bf16.mxu0 0
    %1405 = vmatpush1.bf16.msra.mxu0 %v1389
    %1406 = vmatprep.subr.bf16.mxu0 0
    %1407 = vmatpush1.bf16.msra.mxu0 0
    %1408 = vmatprep.subr.bf16.mxu0 0
    %1409 = vmatpush1.bf16.msra.mxu0 0
    %1410 = vmatprep.subr.bf16.mxu0 0
    %1411 = vmatpush1.bf16.msra.mxu0 0
    %1412 = vmatprep.subr.bf16.mxu0 0
    %1413 = vmatpush1.bf16.msra.mxu0 0
    %1414 = vmatprep.subr.bf16.mxu0 0
    %1415 = vmatpush1.bf16.msra.mxu0 0
    %1416 = vmatprep.subr.bf16.mxu0 0
    %1417 = vmatpush1.bf16.msra.mxu0 0
    %1418 = vmatprep.subr.bf16.mxu0 0
    %1419 = vmatpush1.bf16.msra.mxu0 0
    %1420 = vmatprep.subr.bf16.mxu0 0
    %1421 = vmatpush1.bf16.msra.mxu0 0
    %1422 = vmatprep.subr.bf16.mxu0 0
    %1423 = vmatpush1.bf16.msra.mxu0 0
    %1424 = vmatprep.subr.bf16.mxu0 0
    %1425 = vmatpush1.bf16.msra.mxu0 0
    %1426 = vmatprep.subr.bf16.mxu0 0
    %1427 = vmatpush1.bf16.msra.mxu0 0
    %1428 = vmatprep.subr.bf16.mxu0 0
    %1429 = vmatpush1.bf16.msra.mxu0 0
    %1430 = vmatprep.mubr.bf16.mxu0 0
    %1431 = vmatmul.mubr.bf16.gmra.mrb[0].mxu0 %v1396
    %v1432 = vpop.f32.mrb[0].mxu0
    %v1433 = vadd.f32 %v1368, %v1432
    %v1434 = vpop.f32.mrb[0].mxu0
    %v1435 = vpop.f32.mrb[0].mxu0
    %v1436 = vadd.f32 %v1368, %v1435
    %v1437 = vpop.f32.mrb[0].mxu0
    %1438 = vdwg.mxu0
    %v1439 = vadd.f32 %v1244, %v1433
    %v1440 = vadd.f32 %v1245, %v1436
    %s1441 = scalar_lea.vmem %s9, 2
    %v1442 = vld [vmem:[%s1441] sm:$0x3]
    %s1443 = scalar_lea.vmem %s10, 2
    %v1444 = vld [vmem:[%s1443] sm:$0x3]
    %s1445 = scalar_lea.vmem %s2, 32
    %v1446 = vld [vmem:[%s1445] sm:$0xff]
    %v1447 = vld [vmem:[%s1445 + $0x8] sm:$0xff]
    %v1448 = vld [vmem:[%s1445 + $0x10] sm:$0xff]
    %v1449 = vld [vmem:[%s1445 + $0x18] sm:$0xff]
    %s1450 = scalar_lea.vmem %s3, 2
    %v1451 = vld [vmem:[%s1450] sm:$0x3]
    %s1452 = scalar_lea.vmem [#allocation5], 1
    %v1453 = vld [vmem:[%s1452] sm:$0x1]
    %s1454 = scalar_lea.vmem %s5, 16
    %v1455 = vld [vmem:[%s1454] sm:$0xf]
    %v1456 = vld [vmem:[%s1454 + $0x4] sm:$0xf]
    %v1457 = vld [vmem:[%s1454 + $0x8] sm:$0xf]
    %v1458 = vld [vmem:[%s1454 + $0xc] sm:$0xf]
    %s1459 = scalar_lea.vmem [#allocation7], 1
    %v1460 = vld [vmem:[%s1459] sm:$0x1]
    %s1461 = scalar_lea.vmem %s7, 32
    %v1462 = vld [vmem:[%s1461] sm:$0xf]
    %v1463 = vld [vmem:[%s1461 + $0x4] sm:$0xf]
    %v1464 = vld [vmem:[%s1461 + $0x8] sm:$0xf]
    %v1465 = vld [vmem:[%s1461 + $0xc] sm:$0xf]
    %v1466 = vld [vmem:[%s1461 + $0x10] sm:$0xf]
    %v1467 = vld [vmem:[%s1461 + $0x14] sm:$0xf]
    %v1468 = vld [vmem:[%s1461 + $0x18] sm:$0xf]
    %v1469 = vld [vmem:[%s1461 + $0x1c] sm:$0xf]
    %s1470 = scalar_lea.vmem [#allocation8], 1
    %v1471 = vld [vmem:[%s1470] sm:$0x1]
    %v1472 = vsel %vm138, %v1439, 0.0
    %1473 = vadd.xlane.f32.xlu0 %v1472
    %v1474 = vpop.xlane.xlu0 %1473
    %v1475 = vsel %vm138, %v1440, 0.0
    %1476 = vadd.xlane.f32.xlu0 %v1475
    %v1477 = vpop.xlane.xlu0 %1476
    %v1478 = vmul.f32 %v1474, %v145
    %v1479 = vmul.f32 %v1477, %v145
    %v1480 = vsub.f32 %v1439, %v1478
    %v1481 = vsub.f32 %v1440, %v1479
    %v1482 = vmul.f32 %v1480, %v1480
    %v1483 = vmul.f32 %v1481, %v1481
    %v1484 = vsel %vm138, %v1482, 0.0
    %1485 = vadd.xlane.f32.xlu0 %v1484
    %v1486 = vpop.xlane.xlu0 %1485
    %v1487 = vsel %vm138, %v1483, 0.0
    %1488 = vadd.xlane.f32.xlu0 %v1487
    %v1489 = vpop.xlane.xlu0 %1488
    %v1490 = vmul.f32 %v1486, 0.032258064
    %v1491 = vmul.f32 %v1489, 0.032258064
    %v1492 = vrsqrt.pop %v1490
    %v1493 = vmul.f32 %v1490, %v1492
    %vm1494 = vcmp.eq.f32.partialorder %v1490, inf
    %v1495 = vsel %vm1494, %v1490, %v1493
    %vm1496 = vcmp.eq.f32.partialorder %v1490, 0.0
    %v1497 = vand.u32 %v1490, 2147483648
    %v1498 = vsel %vm1496, %v1497, %v1495
    %v1499 = vrsqrt.pop %v1491
    %v1500 = vmul.f32 %v1491, %v1499
    %vm1501 = vcmp.eq.f32.partialorder %v1491, inf
    %v1502 = vsel %vm1501, %v1491, %v1500
    %vm1503 = vcmp.eq.f32.partialorder %v1491, 0.0
    %v1504 = vand.u32 %v1491, 2147483648
    %v1505 = vsel %vm1503, %v1504, %v1502
    %v1506 = vadd.f32 %v1498, 1e-06
    %v1507 = vadd.f32 %v1505, 1e-06
    %v1508 = vrcp.pop %v1506
    %v1509 = vrcp.pop %v1507
    %v1510 = vmul.f32 %v1480, %v1508
    %v1511 = vmul.f32 %v1481, %v1509
    %v1512 = vlaneseq
    %v1513 = vshrl.u32 %v1512, 7
    %v1514 = vsub.s32 0, %v1513
    %v1515 = vrot.slane %v1442, %v1514
    %v1516 = vmul.f32 %v1515, %v1510
    %v1517 = vmul.f32 %v1515, %v1511
    %v1518 = vlaneseq
    %v1519 = vshrl.u32 %v1518, 7
    %v1520 = vsub.s32 0, %v1519
    %v1521 = vrot.slane %v1444, %v1520
    %v1522 = vadd.f32 %v1516, %v1521
    %v1523 = vadd.f32 %v1517, %v1521
    %v1524 = vpack.c.bf16 %v1523, %v1522
    %v1526 = vlaneseq
    %v1527 = vshrl.u32 %v1526, 7
    %v1528 = vsub.s32 0, %v1527
    %v1529 = vrot.slane %v1451, %v1528
    %v1530 = vlaneseq
    %v1531 = vshrl.u32 %v1530, 7
    %v1532 = vsub.s32 1, %v1531
    %v1533 = vrot.slane %v1451, %v1532
    %v1540 = vunpack.c.l.b16 %v1446
    %v1541 = vunpack.c.h.b16 %v1446
    %v1542 = vunpack.c.l.b16 %v1447
    %v1543 = vunpack.c.h.b16 %v1447
    %v1544 = vunpack.c.l.b16 %v1448
    %v1545 = vunpack.c.h.b16 %v1448
    %v1546 = vunpack.c.l.b16 %v1449
    %v1547 = vunpack.c.h.b16 %v1449
    %v1548 = vpack.c.b16 %v1542, %v1540
    %v1549 = vpack.c.b16 %v1543, %v1541
    %v1550 = vpack.c.b16 %v1546, %v1544
    %v1551 = vpack.c.b16 %v1547, %v1545
    %v1557 = vsel %vm138, %v1524, 0
    %1559 = vmatprep.subr.bf16.mxu0 %v1549
    %1560 = vmatpush1.bf16.msra.mxu0 %v1548
    %1561 = vmatprep.subr.bf16.mxu0 %v1551
    %1562 = vmatpush1.bf16.msra.mxu0 %v1550
    %1563 = vmatprep.subr.bf16.mxu0 0
    %1564 = vmatpush1.bf16.msra.mxu0 0
    %1565 = vmatprep.subr.bf16.mxu0 0
    %1566 = vmatpush1.bf16.msra.mxu0 0
    %1567 = vmatprep.subr.bf16.mxu0 0
    %1568 = vmatpush1.bf16.msra.mxu0 0
    %1569 = vmatprep.subr.bf16.mxu0 0
    %1570 = vmatpush1.bf16.msra.mxu0 0
    %1571 = vmatprep.subr.bf16.mxu0 0
    %1572 = vmatpush1.bf16.msra.mxu0 0
    %1573 = vmatprep.subr.bf16.mxu0 0
    %1574 = vmatpush1.bf16.msra.mxu0 0
    %1575 = vmatprep.subr.bf16.mxu0 0
    %1576 = vmatpush1.bf16.msra.mxu0 0
    %1577 = vmatprep.subr.bf16.mxu0 0
    %1578 = vmatpush1.bf16.msra.mxu0 0
    %1579 = vmatprep.subr.bf16.mxu0 0
    %1580 = vmatpush1.bf16.msra.mxu0 0
    %1581 = vmatprep.subr.bf16.mxu0 0
    %1582 = vmatpush1.bf16.msra.mxu0 0
    %1583 = vmatprep.subr.bf16.mxu0 0
    %1584 = vmatpush1.bf16.msra.mxu0 0
    %1585 = vmatprep.subr.bf16.mxu0 0
    %1586 = vmatpush1.bf16.msra.mxu0 0
    %1587 = vmatprep.subr.bf16.mxu0 0
    %1588 = vmatpush1.bf16.msra.mxu0 0
    %1589 = vmatprep.subr.bf16.mxu0 0
    %1590 = vmatpush1.bf16.msra.mxu0 0
    %1591 = vmatprep.mubr.bf16.mxu0 0
    %1592 = vmatmul.mubr.bf16.gmra.mrb[0].mxu0 %v1557
    %v1593 = vpop.f32.mrb[0].mxu0
    %v1594 = vadd.f32 %v1529, %v1593
    %v1595 = vpop.f32.mrb[0].mxu0
    %v1596 = vadd.f32 %v1533, %v1595
    %v1597 = vpop.f32.mrb[0].mxu0
    %v1598 = vadd.f32 %v1529, %v1597
    %v1599 = vpop.f32.mrb[0].mxu0
    %v1600 = vadd.f32 %v1533, %v1599
    %1601 = vdwg.mxu0
    %v1602 = vpack.c.bf16 %v1594, %v1594
    %1604 = vrot.lane.b32.xlu0 %v1594, 96
    %v1605 = vpop.permute.xlu0 %1604
    %1607 = vxpose.xlu0.b32.start [1/16] %v1605, 128
    %1608 = vxpose.xlu0.b32.cont [2/16] 0.0, 128
    %1609 = vxpose.xlu0.b32.cont [3/16] 0.0, 128
    %1610 = vxpose.xlu0.b32.cont [4/16] 0.0, 128
    %1611 = vxpose.xlu0.b32.cont [5/16] 0.0, 128
    %1612 = vxpose.xlu0.b32.cont [6/16] 0.0, 128
    %1613 = vxpose.xlu0.b32.cont [7/16] 0.0, 128
    %1614 = vxpose.xlu0.b32.cont [8/16] 0.0, 128
    %1615 = vxpose.xlu0.b32.cont [9/16] 0.0, 128
    %1616 = vxpose.xlu0.b32.cont [10/16] 0.0, 128
    %1617 = vxpose.xlu0.b32.cont [11/16] 0.0, 128
    %1618 = vxpose.xlu0.b32.cont [12/16] 0.0, 128
    %1619 = vxpose.xlu0.b32.cont [13/16] 0.0, 128
    %1620 = vxpose.xlu0.b32.cont [14/16] 0.0, 128
    %1621 = vxpose.xlu0.b32.cont [15/16] 0.0, 128
    %1622 = vxpose.xlu0.b32.end [16/16] 0.0, 128
    %v1623 = vpop.trf.xlu0
    %v1624 = vpop.trf.xlu0
    %v1625 = vpop.trf.xlu0
    %v1626 = vpop.trf.xlu0
    %v1627 = vpop.trf.xlu0
    %v1628 = vpop.trf.xlu0
    %v1629 = vpop.trf.xlu0
    %v1630 = vpop.trf.xlu0
    %v1631 = vpop.trf.xlu0
    %v1632 = vpop.trf.xlu0
    %v1633 = vpop.trf.xlu0
    %v1634 = vpop.trf.xlu0
    %v1635 = vpop.trf.xlu0
    %v1636 = vpop.trf.xlu0
    %v1637 = vpop.trf.xlu0
    %v1638 = vpop.trf.xlu0
    %v1639 = vpack.c.bf16 %v1624, %v1623
    %v1640 = vpack.c.bf16 %v1626, %v1625
    %v1641 = vpack.c.bf16 %v1596, %v1596
    %v1643 = vsel %vm316, %v1602, 0
    %v1646 = vsel %vm320, %v1639, 0
    %1648 = vmatprep.subr.bf16.mxu0 0
    %1649 = vmatpush1.bf16.msra.mxu0 %v1646
    %1650 = vmatprep.subr.bf16.mxu0 0
    %1651 = vmatpush1.bf16.msra.mxu0 0
    %1652 = vmatprep.subr.bf16.mxu0 0
    %1653 = vmatpush1.bf16.msra.mxu0 0
    %1654 = vmatprep.subr.bf16.mxu0 0
    %1655 = vmatpush1.bf16.msra.mxu0 0
    %1656 = vmatprep.subr.bf16.mxu0 0
    %1657 = vmatpush1.bf16.msra.mxu0 0
    %1658 = vmatprep.subr.bf16.mxu0 0
    %1659 = vmatpush1.bf16.msra.mxu0 0
    %1660 = vmatprep.subr.bf16.mxu0 0
    %1661 = vmatpush1.bf16.msra.mxu0 0
    %1662 = vmatprep.subr.bf16.mxu0 0
    %1663 = vmatpush1.bf16.msra.mxu0 0
    %1664 = vmatprep.subr.bf16.mxu0 0
    %1665 = vmatpush1.bf16.msra.mxu0 0
    %1666 = vmatprep.subr.bf16.mxu0 0
    %1667 = vmatpush1.bf16.msra.mxu0 0
    %1668 = vmatprep.subr.bf16.mxu0 0
    %1669 = vmatpush1.bf16.msra.mxu0 0
    %1670 = vmatprep.subr.bf16.mxu0 0
    %1671 = vmatpush1.bf16.msra.mxu0 0
    %1672 = vmatprep.subr.bf16.mxu0 0
    %1673 = vmatpush1.bf16.msra.mxu0 0
    %1674 = vmatprep.subr.bf16.mxu0 0
    %1675 = vmatpush1.bf16.msra.mxu0 0
    %1676 = vmatprep.subr.bf16.mxu0 0
    %1677 = vmatpush1.bf16.msra.mxu0 0
    %1678 = vmatprep.subr.bf16.mxu0 0
    %1679 = vmatpush1.bf16.msra.mxu0 0
    %1680 = vmatprep.mubr.bf16.mxu0 0
    %1681 = vmatmul.mubr.bf16.gmra.mrb[0].mxu0 %v1643
    %v1682 = vpop.f32.mrb[0].mxu0
    %v1683 = vadd.f32 %v314, %v1682
    %v1684 = vpop.f32.mrb[0].mxu0
    %v1685 = vpop.f32.mrb[0].mxu0
    %v1686 = vpop.f32.mrb[0].mxu0
    %1687 = vdwg.mxu0
    %v1688 = vsel %vm316, %v1683, -inf
    %1689 = vmax.xlane.f32.xlu0 %v1688
    %v1690 = vpop.xlane.xlu0 %1689
    %v1691 = vsub.f32 %v1683, %v1690
    %v1692 = vmul.f32 %v1691, 1.442695
    %v1693 = vpow.pop %v1692
    %v1694 = vsel %vm316, %v1693, 0.0
    %1695 = vadd.xlane.f32.xlu0 %v1694
    %v1696 = vpop.xlane.xlu0 %1695
    %v1697 = vrcp.pop %v1696
    %v1698 = vmul.f32 %v1693, %v1697
    %v1699 = vpack.c.bf16 %v1698, %v1698
    %1701 = vrot.lane.b32.xlu0 %v1602, 120
    %v1702 = vpop.permute.xlu0 %1701
    %v1704 = vrot.slane %v1639, 4
    %v1706 = vsel %vm316, %v1702, 0
    %v1709 = vsel %vm320, %v1704, 0
    %1711 = vmatprep.subr.bf16.mxu0 0
    %1712 = vmatpush1.bf16.msra.mxu0 %v1709
    %1713 = vmatprep.subr.bf16.mxu0 0
    %1714 = vmatpush1.bf16.msra.mxu0 0
    %1715 = vmatprep.subr.bf16.mxu0 0
    %1716 = vmatpush1.bf16.msra.mxu0 0
    %1717 = vmatprep.subr.bf16.mxu0 0
    %1718 = vmatpush1.bf16.msra.mxu0 0
    %1719 = vmatprep.subr.bf16.mxu0 0
    %1720 = vmatpush1.bf16.msra.mxu0 0
    %1721 = vmatprep.subr.bf16.mxu0 0
    %1722 = vmatpush1.bf16.msra.mxu0 0
    %1723 = vmatprep.subr.bf16.mxu0 0
    %1724 = vmatpush1.bf16.msra.mxu0 0
    %1725 = vmatprep.subr.bf16.mxu0 0
    %1726 = vmatpush1.bf16.msra.mxu0 0
    %1727 = vmatprep.subr.bf16.mxu0 0
    %1728 = vmatpush1.bf16.msra.mxu0 0
    %1729 = vmatprep.subr.bf16.mxu0 0
    %1730 = vmatpush1.bf16.msra.mxu0 0
    %1731 = vmatprep.subr.bf16.mxu0 0
    %1732 = vmatpush1.bf16.msra.mxu0 0
    %1733 = vmatprep.subr.bf16.mxu0 0
    %1734 = vmatpush1.bf16.msra.mxu0 0
    %1735 = vmatprep.subr.bf16.mxu0 0
    %1736 = vmatpush1.bf16.msra.mxu0 0
    %1737 = vmatprep.subr.bf16.mxu0 0
    %1738 = vmatpush1.bf16.msra.mxu0 0
    %1739 = vmatprep.subr.bf16.mxu0 0
    %1740 = vmatpush1.bf16.msra.mxu0 0
    %1741 = vmatprep.subr.bf16.mxu0 0
    %1742 = vmatpush1.bf16.msra.mxu0 0
    %1743 = vmatprep.mubr.bf16.mxu0 0
    %1744 = vmatmul.mubr.bf16.gmra.mrb[0].mxu0 %v1706
    %v1745 = vpop.f32.mrb[0].mxu0
    %v1746 = vadd.f32 %v314, %v1745
    %v1747 = vpop.f32.mrb[0].mxu0
    %v1748 = vpop.f32.mrb[0].mxu0
    %v1749 = vpop.f32.mrb[0].mxu0
    %1750 = vdwg.mxu0
    %v1751 = vsel %vm316, %v1746, -inf
    %1752 = vmax.xlane.f32.xlu0 %v1751
    %v1753 = vpop.xlane.xlu0 %1752
    %v1754 = vsub.f32 %v1746, %v1753
    %v1755 = vmul.f32 %v1754, 1.442695
    %v1756 = vpow.pop %v1755
    %v1757 = vsel %vm316, %v1756, 0.0
    %1758 = vadd.xlane.f32.xlu0 %v1757
    %v1759 = vpop.xlane.xlu0 %1758
    %v1760 = vrcp.pop %v1759
    %v1761 = vmul.f32 %v1756, %v1760
    %v1762 = vpack.c.bf16 %v1761, %v1761
    %1763 = vrot.lane.b32.xlu0 %v1602, 32
    %v1764 = vpop.permute.xlu0 %1763
    %v1766 = vsel %vm316, %v1762, 0
    %v1769 = vsel %vm320, %v1764, 0
    %1771 = vmatprep.subr.bf16.mxu0 0
    %1772 = vmatpush1.bf16.msra.mxu0 %v1769
    %1773 = vmatprep.subr.bf16.mxu0 0
    %1774 = vmatpush1.bf16.msra.mxu0 0
    %1775 = vmatprep.subr.bf16.mxu0 0
    %1776 = vmatpush1.bf16.msra.mxu0 0
    %1777 = vmatprep.subr.bf16.mxu0 0
    %1778 = vmatpush1.bf16.msra.mxu0 0
    %1779 = vmatprep.subr.bf16.mxu0 0
    %1780 = vmatpush1.bf16.msra.mxu0 0
    %1781 = vmatprep.subr.bf16.mxu0 0
    %1782 = vmatpush1.bf16.msra.mxu0 0
    %1783 = vmatprep.subr.bf16.mxu0 0
    %1784 = vmatpush1.bf16.msra.mxu0 0
    %1785 = vmatprep.subr.bf16.mxu0 0
    %1786 = vmatpush1.bf16.msra.mxu0 0
    %1787 = vmatprep.subr.bf16.mxu0 0
    %1788 = vmatpush1.bf16.msra.mxu0 0
    %1789 = vmatprep.subr.bf16.mxu0 0
    %1790 = vmatpush1.bf16.msra.mxu0 0
    %1791 = vmatprep.subr.bf16.mxu0 0
    %1792 = vmatpush1.bf16.msra.mxu0 0
    %1793 = vmatprep.subr.bf16.mxu0 0
    %1794 = vmatpush1.bf16.msra.mxu0 0
    %1795 = vmatprep.subr.bf16.mxu0 0
    %1796 = vmatpush1.bf16.msra.mxu0 0
    %1797 = vmatprep.subr.bf16.mxu0 0
    %1798 = vmatpush1.bf16.msra.mxu0 0
    %1799 = vmatprep.subr.bf16.mxu0 0
    %1800 = vmatpush1.bf16.msra.mxu0 0
    %1801 = vmatprep.subr.bf16.mxu0 0
    %1802 = vmatpush1.bf16.msra.mxu0 0
    %1803 = vmatprep.mubr.bf16.mxu0 0
    %1804 = vmatmul.mubr.bf16.gmra.mrb[0].mxu0 %v1766
    %v1805 = vpop.f32.mrb[0].mxu0
    %v1806 = vadd.f32 0.0, %v1805
    %v1807 = vpop.f32.mrb[0].mxu0
    %v1808 = vpop.f32.mrb[0].mxu0
    %v1809 = vpop.f32.mrb[0].mxu0
    %1810 = vdwg.mxu0
    %1811 = vrot.lane.b32.xlu0 %v1602, 64
    %v1812 = vpop.permute.xlu0 %1811
    %v1814 = vsel %vm316, %v1699, 0
    %v1817 = vsel %vm320, %v1812, 0
    %1819 = vmatprep.subr.bf16.mxu0 0
    %1820 = vmatpush1.bf16.msra.mxu0 %v1817
    %1821 = vmatprep.subr.bf16.mxu0 0
    %1822 = vmatpush1.bf16.msra.mxu0 0
    %1823 = vmatprep.subr.bf16.mxu0 0
    %1824 = vmatpush1.bf16.msra.mxu0 0
    %1825 = vmatprep.subr.bf16.mxu0 0
    %1826 = vmatpush1.bf16.msra.mxu0 0
    %1827 = vmatprep.subr.bf16.mxu0 0
    %1828 = vmatpush1.bf16.msra.mxu0 0
    %1829 = vmatprep.subr.bf16.mxu0 0
    %1830 = vmatpush1.bf16.msra.mxu0 0
    %1831 = vmatprep.subr.bf16.mxu0 0
    %1832 = vmatpush1.bf16.msra.mxu0 0
    %1833 = vmatprep.subr.bf16.mxu0 0
    %1834 = vmatpush1.bf16.msra.mxu0 0
    %1835 = vmatprep.subr.bf16.mxu0 0
    %1836 = vmatpush1.bf16.msra.mxu0 0
    %1837 = vmatprep.subr.bf16.mxu0 0
    %1838 = vmatpush1.bf16.msra.mxu0 0
    %1839 = vmatprep.subr.bf16.mxu0 0
    %1840 = vmatpush1.bf16.msra.mxu0 0
    %1841 = vmatprep.subr.bf16.mxu0 0
    %1842 = vmatpush1.bf16.msra.mxu0 0
    %1843 = vmatprep.subr.bf16.mxu0 0
    %1844 = vmatpush1.bf16.msra.mxu0 0
    %1845 = vmatprep.subr.bf16.mxu0 0
    %1846 = vmatpush1.bf16.msra.mxu0 0
    %1847 = vmatprep.subr.bf16.mxu0 0
    %1848 = vmatpush1.bf16.msra.mxu0 0
    %1849 = vmatprep.subr.bf16.mxu0 0
    %1850 = vmatpush1.bf16.msra.mxu0 0
    %1851 = vmatprep.mubr.bf16.mxu0 0
    %1852 = vmatmul.mubr.bf16.gmra.mrb[0].mxu0 %v1814
    %v1853 = vpop.f32.mrb[0].mxu0
    %v1854 = vadd.f32 %v1806, %v1853
    %v1855 = vpop.f32.mrb[0].mxu0
    %v1856 = vpop.f32.mrb[0].mxu0
    %v1857 = vpop.f32.mrb[0].mxu0
    %1858 = vdwg.mxu0
    %1859 = vrot.lane.b32.xlu0 %v1602, 112
    %v1860 = vpop.permute.xlu0 %1859
    %v1862 = vsel %vm316, %v1860, 0
    %v1865 = vsel %vm320, %v1640, 0
    %1867 = vmatprep.subr.bf16.mxu0 0
    %1868 = vmatpush1.bf16.msra.mxu0 %v1865
    %1869 = vmatprep.subr.bf16.mxu0 0
    %1870 = vmatpush1.bf16.msra.mxu0 0
    %1871 = vmatprep.subr.bf16.mxu0 0
    %1872 = vmatpush1.bf16.msra.mxu0 0
    %1873 = vmatprep.subr.bf16.mxu0 0
    %1874 = vmatpush1.bf16.msra.mxu0 0
    %1875 = vmatprep.subr.bf16.mxu0 0
    %1876 = vmatpush1.bf16.msra.mxu0 0
    %1877 = vmatprep.subr.bf16.mxu0 0
    %1878 = vmatpush1.bf16.msra.mxu0 0
    %1879 = vmatprep.subr.bf16.mxu0 0
    %1880 = vmatpush1.bf16.msra.mxu0 0
    %1881 = vmatprep.subr.bf16.mxu0 0
    %1882 = vmatpush1.bf16.msra.mxu0 0
    %1883 = vmatprep.subr.bf16.mxu0 0
    %1884 = vmatpush1.bf16.msra.mxu0 0
    %1885 = vmatprep.subr.bf16.mxu0 0
    %1886 = vmatpush1.bf16.msra.mxu0 0
    %1887 = vmatprep.subr.bf16.mxu0 0
    %1888 = vmatpush1.bf16.msra.mxu0 0
    %1889 = vmatprep.subr.bf16.mxu0 0
    %1890 = vmatpush1.bf16.msra.mxu0 0
    %1891 = vmatprep.subr.bf16.mxu0 0
    %1892 = vmatpush1.bf16.msra.mxu0 0
    %1893 = vmatprep.subr.bf16.mxu0 0
    %1894 = vmatpush1.bf16.msra.mxu0 0
    %1895 = vmatprep.subr.bf16.mxu0 0
    %1896 = vmatpush1.bf16.msra.mxu0 0
    %1897 = vmatprep.subr.bf16.mxu0 0
    %1898 = vmatpush1.bf16.msra.mxu0 0
    %1899 = vmatprep.mubr.bf16.mxu0 0
    %1900 = vmatmul.mubr.bf16.gmra.mrb[0].mxu0 %v1862
    %v1901 = vpop.f32.mrb[0].mxu0
    %v1902 = vadd.f32 %v314, %v1901
    %v1903 = vpop.f32.mrb[0].mxu0
    %v1904 = vpop.f32.mrb[0].mxu0
    %v1905 = vpop.f32.mrb[0].mxu0
    %1906 = vdwg.mxu0
    %v1907 = vsel %vm316, %v1902, -inf
    %1908 = vmax.xlane.f32.xlu0 %v1907
    %v1909 = vpop.xlane.xlu0 %1908
    %v1910 = vsub.f32 %v1902, %v1909
    %v1911 = vmul.f32 %v1910, 1.442695
    %v1912 = vpow.pop %v1911
    %v1913 = vsel %vm316, %v1912, 0.0
    %1914 = vadd.xlane.f32.xlu0 %v1913
    %v1915 = vpop.xlane.xlu0 %1914
    %v1916 = vrcp.pop %v1915
    %v1917 = vmul.f32 %v1912, %v1916
    %v1918 = vpack.c.bf16 %v1917, %v1917
    %v1920 = vsel %vm316, %v1918, 0
    %v1923 = vsel %vm320, %v1641, 0
    %1925 = vmatprep.subr.bf16.mxu0 0
    %1926 = vmatpush1.bf16.msra.mxu0 %v1923
    %1927 = vmatprep.subr.bf16.mxu0 0
    %1928 = vmatpush1.bf16.msra.mxu0 0
    %1929 = vmatprep.subr.bf16.mxu0 0
    %1930 = vmatpush1.bf16.msra.mxu0 0
    %1931 = vmatprep.subr.bf16.mxu0 0
    %1932 = vmatpush1.bf16.msra.mxu0 0
    %1933 = vmatprep.subr.bf16.mxu0 0
    %1934 = vmatpush1.bf16.msra.mxu0 0
    %1935 = vmatprep.subr.bf16.mxu0 0
    %1936 = vmatpush1.bf16.msra.mxu0 0
    %1937 = vmatprep.subr.bf16.mxu0 0
    %1938 = vmatpush1.bf16.msra.mxu0 0
    %1939 = vmatprep.subr.bf16.mxu0 0
    %1940 = vmatpush1.bf16.msra.mxu0 0
    %1941 = vmatprep.subr.bf16.mxu0 0
    %1942 = vmatpush1.bf16.msra.mxu0 0
    %1943 = vmatprep.subr.bf16.mxu0 0
    %1944 = vmatpush1.bf16.msra.mxu0 0
    %1945 = vmatprep.subr.bf16.mxu0 0
    %1946 = vmatpush1.bf16.msra.mxu0 0
    %1947 = vmatprep.subr.bf16.mxu0 0
    %1948 = vmatpush1.bf16.msra.mxu0 0
    %1949 = vmatprep.subr.bf16.mxu0 0
    %1950 = vmatpush1.bf16.msra.mxu0 0
    %1951 = vmatprep.subr.bf16.mxu0 0
    %1952 = vmatpush1.bf16.msra.mxu0 0
    %1953 = vmatprep.subr.bf16.mxu0 0
    %1954 = vmatpush1.bf16.msra.mxu0 0
    %1955 = vmatprep.subr.bf16.mxu0 0
    %1956 = vmatpush1.bf16.msra.mxu0 0
    %1957 = vmatprep.mubr.bf16.mxu0 0
    %1958 = vmatmul.mubr.bf16.gmra.mrb[0].mxu0 %v1920
    %v1959 = vpop.f32.mrb[0].mxu0
    %v1960 = vadd.f32 0.0, %v1959
    %v1961 = vpop.f32.mrb[0].mxu0
    %v1962 = vpop.f32.mrb[0].mxu0
    %v1963 = vpop.f32.mrb[0].mxu0
    %1964 = vdwg.mxu0
    %v1965 = vadd.f32 %v1854, %v1960
    %1966 = vrot.lane.b32.xlu0 %v1602, 104
    %v1967 = vpop.permute.xlu0 %1966
    %v1969 = vrot.slane %v1640, 4
    %v1971 = vsel %vm316, %v1967, 0
    %v1974 = vsel %vm320, %v1969, 0
    %1976 = vmatprep.subr.bf16.mxu0 0
    %1977 = vmatpush1.bf16.msra.mxu0 %v1974
    %1978 = vmatprep.subr.bf16.mxu0 0
    %1979 = vmatpush1.bf16.msra.mxu0 0
    %1980 = vmatprep.subr.bf16.mxu0 0
    %1981 = vmatpush1.bf16.msra.mxu0 0
    %1982 = vmatprep.subr.bf16.mxu0 0
    %1983 = vmatpush1.bf16.msra.mxu0 0
    %1984 = vmatprep.subr.bf16.mxu0 0
    %1985 = vmatpush1.bf16.msra.mxu0 0
    %1986 = vmatprep.subr.bf16.mxu0 0
    %1987 = vmatpush1.bf16.msra.mxu0 0
    %1988 = vmatprep.subr.bf16.mxu0 0
    %1989 = vmatpush1.bf16.msra.mxu0 0
    %1990 = vmatprep.subr.bf16.mxu0 0
    %1991 = vmatpush1.bf16.msra.mxu0 0
    %1992 = vmatprep.subr.bf16.mxu0 0
    %1993 = vmatpush1.bf16.msra.mxu0 0
    %1994 = vmatprep.subr.bf16.mxu0 0
    %1995 = vmatpush1.bf16.msra.mxu0 0
    %1996 = vmatprep.subr.bf16.mxu0 0
    %1997 = vmatpush1.bf16.msra.mxu0 0
    %1998 = vmatprep.subr.bf16.mxu0 0
    %1999 = vmatpush1.bf16.msra.mxu0 0
    %2000 = vmatprep.subr.bf16.mxu0 0
    %2001 = vmatpush1.bf16.msra.mxu0 0
    %2002 = vmatprep.subr.bf16.mxu0 0
    %2003 = vmatpush1.bf16.msra.mxu0 0
    %2004 = vmatprep.subr.bf16.mxu0 0
    %2005 = vmatpush1.bf16.msra.mxu0 0
    %2006 = vmatprep.subr.bf16.mxu0 0
    %2007 = vmatpush1.bf16.msra.mxu0 0
    %2008 = vmatprep.mubr.bf16.mxu0 0
    %2009 = vmatmul.mubr.bf16.gmra.mrb[0].mxu0 %v1971
    %v2010 = vpop.f32.mrb[0].mxu0
    %v2011 = vadd.f32 %v314, %v2010
    %v2012 = vpop.f32.mrb[0].mxu0
    %v2013 = vpop.f32.mrb[0].mxu0
    %v2014 = vpop.f32.mrb[0].mxu0
    %2015 = vdwg.mxu0
    %v2016 = vsel %vm316, %v2011, -inf
    %2017 = vmax.xlane.f32.xlu0 %v2016
    %v2018 = vpop.xlane.xlu0 %2017
    %v2019 = vsub.f32 %v2011, %v2018
    %v2020 = vmul.f32 %v2019, 1.442695
    %v2021 = vpow.pop %v2020
    %v2022 = vsel %vm316, %v2021, 0.0
    %2023 = vadd.xlane.f32.xlu0 %v2022
    %v2024 = vpop.xlane.xlu0 %2023
    %v2025 = vrcp.pop %v2024
    %v2026 = vmul.f32 %v2021, %v2025
    %v2027 = vpack.c.bf16 %v2026, %v2026
    %2029 = vrot.lane.b32.xlu0 %v1641, 96
    %v2030 = vpop.permute.xlu0 %2029
    %v2032 = vsel %vm316, %v2027, 0
    %v2035 = vsel %vm320, %v2030, 0
    %2037 = vmatprep.subr.bf16.mxu0 0
    %2038 = vmatpush1.bf16.msra.mxu0 %v2035
    %2039 = vmatprep.subr.bf16.mxu0 0
    %2040 = vmatpush1.bf16.msra.mxu0 0
    %2041 = vmatprep.subr.bf16.mxu0 0
    %2042 = vmatpush1.bf16.msra.mxu0 0
    %2043 = vmatprep.subr.bf16.mxu0 0
    %2044 = vmatpush1.bf16.msra.mxu0 0
    %2045 = vmatprep.subr.bf16.mxu0 0
    %2046 = vmatpush1.bf16.msra.mxu0 0
    %2047 = vmatprep.subr.bf16.mxu0 0
    %2048 = vmatpush1.bf16.msra.mxu0 0
    %2049 = vmatprep.subr.bf16.mxu0 0
    %2050 = vmatpush1.bf16.msra.mxu0 0
    %2051 = vmatprep.subr.bf16.mxu0 0
    %2052 = vmatpush1.bf16.msra.mxu0 0
    %2053 = vmatprep.subr.bf16.mxu0 0
    %2054 = vmatpush1.bf16.msra.mxu0 0
    %2055 = vmatprep.subr.bf16.mxu0 0
    %2056 = vmatpush1.bf16.msra.mxu0 0
    %2057 = vmatprep.subr.bf16.mxu0 0
    %2058 = vmatpush1.bf16.msra.mxu0 0
    %2059 = vmatprep.subr.bf16.mxu0 0
    %2060 = vmatpush1.bf16.msra.mxu0 0
    %2061 = vmatprep.subr.bf16.mxu0 0
    %2062 = vmatpush1.bf16.msra.mxu0 0
    %2063 = vmatprep.subr.bf16.mxu0 0
    %2064 = vmatpush1.bf16.msra.mxu0 0
    %2065 = vmatprep.subr.bf16.mxu0 0
    %2066 = vmatpush1.bf16.msra.mxu0 0
    %2067 = vmatprep.subr.bf16.mxu0 0
    %2068 = vmatpush1.bf16.msra.mxu0 0
    %2069 = vmatprep.mubr.bf16.mxu0 0
    %2070 = vmatmul.mubr.bf16.gmra.mrb[0].mxu0 %v2032
    %v2071 = vpop.f32.mrb[0].mxu0
    %v2072 = vadd.f32 0.0, %v2071
    %v2073 = vpop.f32.mrb[0].mxu0
    %v2074 = vpop.f32.mrb[0].mxu0
    %v2075 = vpop.f32.mrb[0].mxu0
    %2076 = vdwg.mxu0
    %v2077 = vadd.f32 %v1965, %v2072
    %v2078 = vpack.c.bf16 %v1598, %v1598
    %2080 = vrot.lane.b32.xlu0 %v1598, 96
    %v2081 = vpop.permute.xlu0 %2080
    %2083 = vxpose.xlu0.b32.start [1/16] %v2081, 128
    %2084 = vxpose.xlu0.b32.cont [2/16] 0.0, 128
    %2085 = vxpose.xlu0.b32.cont [3/16] 0.0, 128
    %2086 = vxpose.xlu0.b32.cont [4/16] 0.0, 128
    %2087 = vxpose.xlu0.b32.cont [5/16] 0.0, 128
    %2088 = vxpose.xlu0.b32.cont [6/16] 0.0, 128
    %2089 = vxpose.xlu0.b32.cont [7/16] 0.0, 128
    %2090 = vxpose.xlu0.b32.cont [8/16] 0.0, 128
    %2091 = vxpose.xlu0.b32.cont [9/16] 0.0, 128
    %2092 = vxpose.xlu0.b32.cont [10/16] 0.0, 128
    %2093 = vxpose.xlu0.b32.cont [11/16] 0.0, 128
    %2094 = vxpose.xlu0.b32.cont [12/16] 0.0, 128
    %2095 = vxpose.xlu0.b32.cont [13/16] 0.0, 128
    %2096 = vxpose.xlu0.b32.cont [14/16] 0.0, 128
    %2097 = vxpose.xlu0.b32.cont [15/16] 0.0, 128
    %2098 = vxpose.xlu0.b32.end [16/16] 0.0, 128
    %v2099 = vpop.trf.xlu0
    %v2100 = vpop.trf.xlu0
    %v2101 = vpop.trf.xlu0
    %v2102 = vpop.trf.xlu0
    %v2103 = vpop.trf.xlu0
    %v2104 = vpop.trf.xlu0
    %v2105 = vpop.trf.xlu0
    %v2106 = vpop.trf.xlu0
    %v2107 = vpop.trf.xlu0
    %v2108 = vpop.trf.xlu0
    %v2109 = vpop.trf.xlu0
    %v2110 = vpop.trf.xlu0
    %v2111 = vpop.trf.xlu0
    %v2112 = vpop.trf.xlu0
    %v2113 = vpop.trf.xlu0
    %v2114 = vpop.trf.xlu0
    %v2115 = vpack.c.bf16 %v2100, %v2099
    %v2116 = vpack.c.bf16 %v2102, %v2101
    %v2117 = vpack.c.bf16 %v1600, %v1600
    %v2119 = vsel %vm316, %v2078, 0
    %v2122 = vsel %vm320, %v2115, 0
    %2124 = vmatprep.subr.bf16.mxu0 0
    %2125 = vmatpush1.bf16.msra.mxu0 %v2122
    %2126 = vmatprep.subr.bf16.mxu0 0
    %2127 = vmatpush1.bf16.msra.mxu0 0
    %2128 = vmatprep.subr.bf16.mxu0 0
    %2129 = vmatpush1.bf16.msra.mxu0 0
    %2130 = vmatprep.subr.bf16.mxu0 0
    %2131 = vmatpush1.bf16.msra.mxu0 0
    %2132 = vmatprep.subr.bf16.mxu0 0
    %2133 = vmatpush1.bf16.msra.mxu0 0
    %2134 = vmatprep.subr.bf16.mxu0 0
    %2135 = vmatpush1.bf16.msra.mxu0 0
    %2136 = vmatprep.subr.bf16.mxu0 0
    %2137 = vmatpush1.bf16.msra.mxu0 0
    %2138 = vmatprep.subr.bf16.mxu0 0
    %2139 = vmatpush1.bf16.msra.mxu0 0
    %2140 = vmatprep.subr.bf16.mxu0 0
    %2141 = vmatpush1.bf16.msra.mxu0 0
    %2142 = vmatprep.subr.bf16.mxu0 0
    %2143 = vmatpush1.bf16.msra.mxu0 0
    %2144 = vmatprep.subr.bf16.mxu0 0
    %2145 = vmatpush1.bf16.msra.mxu0 0
    %2146 = vmatprep.subr.bf16.mxu0 0
    %2147 = vmatpush1.bf16.msra.mxu0 0
    %2148 = vmatprep.subr.bf16.mxu0 0
    %2149 = vmatpush1.bf16.msra.mxu0 0
    %2150 = vmatprep.subr.bf16.mxu0 0
    %2151 = vmatpush1.bf16.msra.mxu0 0
    %2152 = vmatprep.subr.bf16.mxu0 0
    %2153 = vmatpush1.bf16.msra.mxu0 0
    %2154 = vmatprep.subr.bf16.mxu0 0
    %2155 = vmatpush1.bf16.msra.mxu0 0
    %2156 = vmatprep.mubr.bf16.mxu0 0
    %2157 = vmatmul.mubr.bf16.gmra.mrb[0].mxu0 %v2119
    %v2158 = vpop.f32.mrb[0].mxu0
    %v2159 = vadd.f32 %v798, %v2158
    %v2160 = vpop.f32.mrb[0].mxu0
    %v2161 = vpop.f32.mrb[0].mxu0
    %v2162 = vpop.f32.mrb[0].mxu0
    %2163 = vdwg.mxu0
    %v2164 = vsel %vm316, %v2159, -inf
    %2165 = vmax.xlane.f32.xlu0 %v2164
    %v2166 = vpop.xlane.xlu0 %2165
    %v2167 = vsub.f32 %v2159, %v2166
    %v2168 = vmul.f32 %v2167, 1.442695
    %v2169 = vpow.pop %v2168
    %v2170 = vsel %vm316, %v2169, 0.0
    %2171 = vadd.xlane.f32.xlu0 %v2170
    %v2172 = vpop.xlane.xlu0 %2171
    %v2173 = vrcp.pop %v2172
    %v2174 = vmul.f32 %v2169, %v2173
    %v2175 = vpack.c.bf16 %v2174, %v2174
    %2177 = vrot.lane.b32.xlu0 %v2078, 120
    %v2178 = vpop.permute.xlu0 %2177
    %v2180 = vrot.slane %v2115, 4
    %v2182 = vsel %vm316, %v2178, 0
    %v2185 = vsel %vm320, %v2180, 0
    %2187 = vmatprep.subr.bf16.mxu0 0
    %2188 = vmatpush1.bf16.msra.mxu0 %v2185
    %2189 = vmatprep.subr.bf16.mxu0 0
    %2190 = vmatpush1.bf16.msra.mxu0 0
    %2191 = vmatprep.subr.bf16.mxu0 0
    %2192 = vmatpush1.bf16.msra.mxu0 0
    %2193 = vmatprep.subr.bf16.mxu0 0
    %2194 = vmatpush1.bf16.msra.mxu0 0
    %2195 = vmatprep.subr.bf16.mxu0 0
    %2196 = vmatpush1.bf16.msra.mxu0 0
    %2197 = vmatprep.subr.bf16.mxu0 0
    %2198 = vmatpush1.bf16.msra.mxu0 0
    %2199 = vmatprep.subr.bf16.mxu0 0
    %2200 = vmatpush1.bf16.msra.mxu0 0
    %2201 = vmatprep.subr.bf16.mxu0 0
    %2202 = vmatpush1.bf16.msra.mxu0 0
    %2203 = vmatprep.subr.bf16.mxu0 0
    %2204 = vmatpush1.bf16.msra.mxu0 0
    %2205 = vmatprep.subr.bf16.mxu0 0
    %2206 = vmatpush1.bf16.msra.mxu0 0
    %2207 = vmatprep.subr.bf16.mxu0 0
    %2208 = vmatpush1.bf16.msra.mxu0 0
    %2209 = vmatprep.subr.bf16.mxu0 0
    %2210 = vmatpush1.bf16.msra.mxu0 0
    %2211 = vmatprep.subr.bf16.mxu0 0
    %2212 = vmatpush1.bf16.msra.mxu0 0
    %2213 = vmatprep.subr.bf16.mxu0 0
    %2214 = vmatpush1.bf16.msra.mxu0 0
    %2215 = vmatprep.subr.bf16.mxu0 0
    %2216 = vmatpush1.bf16.msra.mxu0 0
    %2217 = vmatprep.subr.bf16.mxu0 0
    %2218 = vmatpush1.bf16.msra.mxu0 0
    %2219 = vmatprep.mubr.bf16.mxu0 0
    %2220 = vmatmul.mubr.bf16.gmra.mrb[0].mxu0 %v2182
    %v2221 = vpop.f32.mrb[0].mxu0
    %v2222 = vadd.f32 %v798, %v2221
    %v2223 = vpop.f32.mrb[0].mxu0
    %v2224 = vpop.f32.mrb[0].mxu0
    %v2225 = vpop.f32.mrb[0].mxu0
    %2226 = vdwg.mxu0
    %v2227 = vsel %vm316, %v2222, -inf
    %2228 = vmax.xlane.f32.xlu0 %v2227
    %v2229 = vpop.xlane.xlu0 %2228
    %v2230 = vsub.f32 %v2222, %v2229
    %v2231 = vmul.f32 %v2230, 1.442695
    %v2232 = vpow.pop %v2231
    %v2233 = vsel %vm316, %v2232, 0.0
    %2234 = vadd.xlane.f32.xlu0 %v2233
    %v2235 = vpop.xlane.xlu0 %2234
    %v2236 = vrcp.pop %v2235
    %v2237 = vmul.f32 %v2232, %v2236
    %v2238 = vpack.c.bf16 %v2237, %v2237
    %2239 = vrot.lane.b32.xlu0 %v2078, 32
    %v2240 = vpop.permute.xlu0 %2239
    %v2242 = vsel %vm316, %v2238, 0
    %v2245 = vsel %vm320, %v2240, 0
    %2247 = vmatprep.subr.bf16.mxu0 0
    %2248 = vmatpush1.bf16.msra.mxu0 %v2245
    %2249 = vmatprep.subr.bf16.mxu0 0
    %2250 = vmatpush1.bf16.msra.mxu0 0
    %2251 = vmatprep.subr.bf16.mxu0 0
    %2252 = vmatpush1.bf16.msra.mxu0 0
    %2253 = vmatprep.subr.bf16.mxu0 0
    %2254 = vmatpush1.bf16.msra.mxu0 0
    %2255 = vmatprep.subr.bf16.mxu0 0
    %2256 = vmatpush1.bf16.msra.mxu0 0
    %2257 = vmatprep.subr.bf16.mxu0 0
    %2258 = vmatpush1.bf16.msra.mxu0 0
    %2259 = vmatprep.subr.bf16.mxu0 0
    %2260 = vmatpush1.bf16.msra.mxu0 0
    %2261 = vmatprep.subr.bf16.mxu0 0
    %2262 = vmatpush1.bf16.msra.mxu0 0
    %2263 = vmatprep.subr.bf16.mxu0 0
    %2264 = vmatpush1.bf16.msra.mxu0 0
    %2265 = vmatprep.subr.bf16.mxu0 0
    %2266 = vmatpush1.bf16.msra.mxu0 0
    %2267 = vmatprep.subr.bf16.mxu0 0
    %2268 = vmatpush1.bf16.msra.mxu0 0
    %2269 = vmatprep.subr.bf16.mxu0 0
    %2270 = vmatpush1.bf16.msra.mxu0 0
    %2271 = vmatprep.subr.bf16.mxu0 0
    %2272 = vmatpush1.bf16.msra.mxu0 0
    %2273 = vmatprep.subr.bf16.mxu0 0
    %2274 = vmatpush1.bf16.msra.mxu0 0
    %2275 = vmatprep.subr.bf16.mxu0 0
    %2276 = vmatpush1.bf16.msra.mxu0 0
    %2277 = vmatprep.subr.bf16.mxu0 0
    %2278 = vmatpush1.bf16.msra.mxu0 0
    %2279 = vmatprep.mubr.bf16.mxu0 0
    %2280 = vmatmul.mubr.bf16.gmra.mrb[0].mxu0 %v2242
    %v2281 = vpop.f32.mrb[0].mxu0
    %v2282 = vadd.f32 0.0, %v2281
    %v2283 = vpop.f32.mrb[0].mxu0
    %v2284 = vpop.f32.mrb[0].mxu0
    %v2285 = vpop.f32.mrb[0].mxu0
    %2286 = vdwg.mxu0
    %2287 = vrot.lane.b32.xlu0 %v2078, 64
    %v2288 = vpop.permute.xlu0 %2287
    %v2290 = vsel %vm316, %v2175, 0
    %v2293 = vsel %vm320, %v2288, 0
    %2295 = vmatprep.subr.bf16.mxu0 0
    %2296 = vmatpush1.bf16.msra.mxu0 %v2293
    %2297 = vmatprep.subr.bf16.mxu0 0
    %2298 = vmatpush1.bf16.msra.mxu0 0
    %2299 = vmatprep.subr.bf16.mxu0 0
    %2300 = vmatpush1.bf16.msra.mxu0 0
    %2301 = vmatprep.subr.bf16.mxu0 0
    %2302 = vmatpush1.bf16.msra.mxu0 0
    %2303 = vmatprep.subr.bf16.mxu0 0
    %2304 = vmatpush1.bf16.msra.mxu0 0
    %2305 = vmatprep.subr.bf16.mxu0 0
    %2306 = vmatpush1.bf16.msra.mxu0 0
    %2307 = vmatprep.subr.bf16.mxu0 0
    %2308 = vmatpush1.bf16.msra.mxu0 0
    %2309 = vmatprep.subr.bf16.mxu0 0
    %2310 = vmatpush1.bf16.msra.mxu0 0
    %2311 = vmatprep.subr.bf16.mxu0 0
    %2312 = vmatpush1.bf16.msra.mxu0 0
    %2313 = vmatprep.subr.bf16.mxu0 0
    %2314 = vmatpush1.bf16.msra.mxu0 0
    %2315 = vmatprep.subr.bf16.mxu0 0
    %2316 = vmatpush1.bf16.msra.mxu0 0
    %2317 = vmatprep.subr.bf16.mxu0 0
    %2318 = vmatpush1.bf16.msra.mxu0 0
    %2319 = vmatprep.subr.bf16.mxu0 0
    %2320 = vmatpush1.bf16.msra.mxu0 0
    %2321 = vmatprep.subr.bf16.mxu0 0
    %2322 = vmatpush1.bf16.msra.mxu0 0
    %2323 = vmatprep.subr.bf16.mxu0 0
    %2324 = vmatpush1.bf16.msra.mxu0 0
    %2325 = vmatprep.subr.bf16.mxu0 0
    %2326 = vmatpush1.bf16.msra.mxu0 0
    %2327 = vmatprep.mubr.bf16.mxu0 0
    %2328 = vmatmul.mubr.bf16.gmra.mrb[0].mxu0 %v2290
    %v2329 = vpop.f32.mrb[0].mxu0
    %v2330 = vadd.f32 %v2282, %v2329
    %v2331 = vpop.f32.mrb[0].mxu0
    %v2332 = vpop.f32.mrb[0].mxu0
    %v2333 = vpop.f32.mrb[0].mxu0
    %2334 = vdwg.mxu0
    %2335 = vrot.lane.b32.xlu0 %v2078, 112
    %v2336 = vpop.permute.xlu0 %2335
    %v2338 = vsel %vm316, %v2336, 0
    %v2341 = vsel %vm320, %v2116, 0
    %2343 = vmatprep.subr.bf16.mxu0 0
    %2344 = vmatpush1.bf16.msra.mxu0 %v2341
    %2345 = vmatprep.subr.bf16.mxu0 0
    %2346 = vmatpush1.bf16.msra.mxu0 0
    %2347 = vmatprep.subr.bf16.mxu0 0
    %2348 = vmatpush1.bf16.msra.mxu0 0
    %2349 = vmatprep.subr.bf16.mxu0 0
    %2350 = vmatpush1.bf16.msra.mxu0 0
    %2351 = vmatprep.subr.bf16.mxu0 0
    %2352 = vmatpush1.bf16.msra.mxu0 0
    %2353 = vmatprep.subr.bf16.mxu0 0
    %2354 = vmatpush1.bf16.msra.mxu0 0
    %2355 = vmatprep.subr.bf16.mxu0 0
    %2356 = vmatpush1.bf16.msra.mxu0 0
    %2357 = vmatprep.subr.bf16.mxu0 0
    %2358 = vmatpush1.bf16.msra.mxu0 0
    %2359 = vmatprep.subr.bf16.mxu0 0
    %2360 = vmatpush1.bf16.msra.mxu0 0
    %2361 = vmatprep.subr.bf16.mxu0 0
    %2362 = vmatpush1.bf16.msra.mxu0 0
    %2363 = vmatprep.subr.bf16.mxu0 0
    %2364 = vmatpush1.bf16.msra.mxu0 0
    %2365 = vmatprep.subr.bf16.mxu0 0
    %2366 = vmatpush1.bf16.msra.mxu0 0
    %2367 = vmatprep.subr.bf16.mxu0 0
    %2368 = vmatpush1.bf16.msra.mxu0 0
    %2369 = vmatprep.subr.bf16.mxu0 0
    %2370 = vmatpush1.bf16.msra.mxu0 0
    %2371 = vmatprep.subr.bf16.mxu0 0
    %2372 = vmatpush1.bf16.msra.mxu0 0
    %2373 = vmatprep.subr.bf16.mxu0 0
    %2374 = vmatpush1.bf16.msra.mxu0 0
    %2375 = vmatprep.mubr.bf16.mxu0 0
    %2376 = vmatmul.mubr.bf16.gmra.mrb[0].mxu0 %v2338
    %v2377 = vpop.f32.mrb[0].mxu0
    %v2378 = vadd.f32 %v798, %v2377
    %v2379 = vpop.f32.mrb[0].mxu0
    %v2380 = vpop.f32.mrb[0].mxu0
    %v2381 = vpop.f32.mrb[0].mxu0
    %2382 = vdwg.mxu0
    %v2383 = vsel %vm316, %v2378, -inf
    %2384 = vmax.xlane.f32.xlu0 %v2383
    %v2385 = vpop.xlane.xlu0 %2384
    %v2386 = vsub.f32 %v2378, %v2385
    %v2387 = vmul.f32 %v2386, 1.442695
    %v2388 = vpow.pop %v2387
    %v2389 = vsel %vm316, %v2388, 0.0
    %2390 = vadd.xlane.f32.xlu0 %v2389
    %v2391 = vpop.xlane.xlu0 %2390
    %v2392 = vrcp.pop %v2391
    %v2393 = vmul.f32 %v2388, %v2392
    %v2394 = vpack.c.bf16 %v2393, %v2393
    %v2396 = vsel %vm316, %v2394, 0
    %v2399 = vsel %vm320, %v2117, 0
    %2401 = vmatprep.subr.bf16.mxu0 0
    %2402 = vmatpush1.bf16.msra.mxu0 %v2399
    %2403 = vmatprep.subr.bf16.mxu0 0
    %2404 = vmatpush1.bf16.msra.mxu0 0
    %2405 = vmatprep.subr.bf16.mxu0 0
    %2406 = vmatpush1.bf16.msra.mxu0 0
    %2407 = vmatprep.subr.bf16.mxu0 0
    %2408 = vmatpush1.bf16.msra.mxu0 0
    %2409 = vmatprep.subr.bf16.mxu0 0
    %2410 = vmatpush1.bf16.msra.mxu0 0
    %2411 = vmatprep.subr.bf16.mxu0 0
    %2412 = vmatpush1.bf16.msra.mxu0 0
    %2413 = vmatprep.subr.bf16.mxu0 0
    %2414 = vmatpush1.bf16.msra.mxu0 0
    %2415 = vmatprep.subr.bf16.mxu0 0
    %2416 = vmatpush1.bf16.msra.mxu0 0
    %2417 = vmatprep.subr.bf16.mxu0 0
    %2418 = vmatpush1.bf16.msra.mxu0 0
    %2419 = vmatprep.subr.bf16.mxu0 0
    %2420 = vmatpush1.bf16.msra.mxu0 0
    %2421 = vmatprep.subr.bf16.mxu0 0
    %2422 = vmatpush1.bf16.msra.mxu0 0
    %2423 = vmatprep.subr.bf16.mxu0 0
    %2424 = vmatpush1.bf16.msra.mxu0 0
    %2425 = vmatprep.subr.bf16.mxu0 0
    %2426 = vmatpush1.bf16.msra.mxu0 0
    %2427 = vmatprep.subr.bf16.mxu0 0
    %2428 = vmatpush1.bf16.msra.mxu0 0
    %2429 = vmatprep.subr.bf16.mxu0 0
    %2430 = vmatpush1.bf16.msra.mxu0 0
    %2431 = vmatprep.subr.bf16.mxu0 0
    %2432 = vmatpush1.bf16.msra.mxu0 0
    %2433 = vmatprep.mubr.bf16.mxu0 0
    %2434 = vmatmul.mubr.bf16.gmra.mrb[0].mxu0 %v2396
    %v2435 = vpop.f32.mrb[0].mxu0
    %v2436 = vadd.f32 0.0, %v2435
    %v2437 = vpop.f32.mrb[0].mxu0
    %v2438 = vpop.f32.mrb[0].mxu0
    %v2439 = vpop.f32.mrb[0].mxu0
    %2440 = vdwg.mxu0
    %v2441 = vadd.f32 %v2330, %v2436
    %2442 = vrot.lane.b32.xlu0 %v2078, 104
    %v2443 = vpop.permute.xlu0 %2442
    %v2445 = vrot.slane %v2116, 4
    %v2447 = vsel %vm316, %v2443, 0
    %v2450 = vsel %vm320, %v2445, 0
    %2452 = vmatprep.subr.bf16.mxu0 0
    %2453 = vmatpush1.bf16.msra.mxu0 %v2450
    %2454 = vmatprep.subr.bf16.mxu0 0
    %2455 = vmatpush1.bf16.msra.mxu0 0
    %2456 = vmatprep.subr.bf16.mxu0 0
    %2457 = vmatpush1.bf16.msra.mxu0 0
    %2458 = vmatprep.subr.bf16.mxu0 0
    %2459 = vmatpush1.bf16.msra.mxu0 0
    %2460 = vmatprep.subr.bf16.mxu0 0
    %2461 = vmatpush1.bf16.msra.mxu0 0
    %2462 = vmatprep.subr.bf16.mxu0 0
    %2463 = vmatpush1.bf16.msra.mxu0 0
    %2464 = vmatprep.subr.bf16.mxu0 0
    %2465 = vmatpush1.bf16.msra.mxu0 0
    %2466 = vmatprep.subr.bf16.mxu0 0
    %2467 = vmatpush1.bf16.msra.mxu0 0
    %2468 = vmatprep.subr.bf16.mxu0 0
    %2469 = vmatpush1.bf16.msra.mxu0 0
    %2470 = vmatprep.subr.bf16.mxu0 0
    %2471 = vmatpush1.bf16.msra.mxu0 0
    %2472 = vmatprep.subr.bf16.mxu0 0
    %2473 = vmatpush1.bf16.msra.mxu0 0
    %2474 = vmatprep.subr.bf16.mxu0 0
    %2475 = vmatpush1.bf16.msra.mxu0 0
    %2476 = vmatprep.subr.bf16.mxu0 0
    %2477 = vmatpush1.bf16.msra.mxu0 0
    %2478 = vmatprep.subr.bf16.mxu0 0
    %2479 = vmatpush1.bf16.msra.mxu0 0
    %2480 = vmatprep.subr.bf16.mxu0 0
    %2481 = vmatpush1.bf16.msra.mxu0 0
    %2482 = vmatprep.subr.bf16.mxu0 0
    %2483 = vmatpush1.bf16.msra.mxu0 0
    %2484 = vmatprep.mubr.bf16.mxu0 0
    %2485 = vmatmul.mubr.bf16.gmra.mrb[0].mxu0 %v2447
    %v2486 = vpop.f32.mrb[0].mxu0
    %v2487 = vadd.f32 %v798, %v2486
    %v2488 = vpop.f32.mrb[0].mxu0
    %v2489 = vpop.f32.mrb[0].mxu0
    %v2490 = vpop.f32.mrb[0].mxu0
    %2491 = vdwg.mxu0
    %v2492 = vsel %vm316, %v2487, -inf
    %2493 = vmax.xlane.f32.xlu0 %v2492
    %v2494 = vpop.xlane.xlu0 %2493
    %v2495 = vsub.f32 %v2487, %v2494
    %v2496 = vmul.f32 %v2495, 1.442695
    %v2497 = vpow.pop %v2496
    %v2498 = vsel %vm316, %v2497, 0.0
    %2499 = vadd.xlane.f32.xlu0 %v2498
    %v2500 = vpop.xlane.xlu0 %2499
    %v2501 = vrcp.pop %v2500
    %v2502 = vmul.f32 %v2497, %v2501
    %v2503 = vpack.c.bf16 %v2502, %v2502
    %2505 = vrot.lane.b32.xlu0 %v2117, 96
    %v2506 = vpop.permute.xlu0 %2505
    %v2508 = vsel %vm316, %v2503, 0
    %v2511 = vsel %vm320, %v2506, 0
    %2513 = vmatprep.subr.bf16.mxu0 0
    %2514 = vmatpush1.bf16.msra.mxu0 %v2511
    %2515 = vmatprep.subr.bf16.mxu0 0
    %2516 = vmatpush1.bf16.msra.mxu0 0
    %2517 = vmatprep.subr.bf16.mxu0 0
    %2518 = vmatpush1.bf16.msra.mxu0 0
    %2519 = vmatprep.subr.bf16.mxu0 0
    %2520 = vmatpush1.bf16.msra.mxu0 0
    %2521 = vmatprep.subr.bf16.mxu0 0
    %2522 = vmatpush1.bf16.msra.mxu0 0
    %2523 = vmatprep.subr.bf16.mxu0 0
    %2524 = vmatpush1.bf16.msra.mxu0 0
    %2525 = vmatprep.subr.bf16.mxu0 0
    %2526 = vmatpush1.bf16.msra.mxu0 0
    %2527 = vmatprep.subr.bf16.mxu0 0
    %2528 = vmatpush1.bf16.msra.mxu0 0
    %2529 = vmatprep.subr.bf16.mxu0 0
    %2530 = vmatpush1.bf16.msra.mxu0 0
    %2531 = vmatprep.subr.bf16.mxu0 0
    %2532 = vmatpush1.bf16.msra.mxu0 0
    %2533 = vmatprep.subr.bf16.mxu0 0
    %2534 = vmatpush1.bf16.msra.mxu0 0
    %2535 = vmatprep.subr.bf16.mxu0 0
    %2536 = vmatpush1.bf16.msra.mxu0 0
    %2537 = vmatprep.subr.bf16.mxu0 0
    %2538 = vmatpush1.bf16.msra.mxu0 0
    %2539 = vmatprep.subr.bf16.mxu0 0
    %2540 = vmatpush1.bf16.msra.mxu0 0
    %2541 = vmatprep.subr.bf16.mxu0 0
    %2542 = vmatpush1.bf16.msra.mxu0 0
    %2543 = vmatprep.subr.bf16.mxu0 0
    %2544 = vmatpush1.bf16.msra.mxu0 0
    %2545 = vmatprep.mubr.bf16.mxu0 0
    %2546 = vmatmul.mubr.bf16.gmra.mrb[0].mxu0 %v2508
    %v2547 = vpop.f32.mrb[0].mxu0
    %v2548 = vadd.f32 0.0, %v2547
    %v2549 = vpop.f32.mrb[0].mxu0
    %v2550 = vpop.f32.mrb[0].mxu0
    %v2551 = vpop.f32.mrb[0].mxu0
    %2552 = vdwg.mxu0
    %v2553 = vadd.f32 %v2441, %v2548
    %v2554 = vadd.f32 %v1439, %v2077
    %v2555 = vadd.f32 %v1440, %v2553
    %v2557 = vlaneseq
    %v2558 = vshrl.u32 %v2557, 7
    %v2559 = vsub.s32 0, %v2558
    %v2560 = vrot.slane %v1453, %v2559
    %v2562 = vadd.f32 %v2554, %v2560
    %v2563 = vadd.f32 %v2555, %v2560
    %v2564 = vsel %vm138, %v2562, 0.0
    %2565 = vadd.xlane.f32.xlu0 %v2564
    %v2566 = vpop.xlane.xlu0 %2565
    %v2567 = vsel %vm138, %v2563, 0.0
    %2568 = vadd.xlane.f32.xlu0 %v2567
    %v2569 = vpop.xlane.xlu0 %2568
    %v2570 = vmul.f32 %v2566, %v145
    %v2571 = vmul.f32 %v2569, %v145
    %v2572 = vsub.f32 %v2562, %v2570
    %v2573 = vsub.f32 %v2563, %v2571
    %v2574 = vmul.f32 %v2572, %v2572
    %v2575 = vmul.f32 %v2573, %v2573
    %v2576 = vsel %vm138, %v2574, 0.0
    %2577 = vadd.xlane.f32.xlu0 %v2576
    %v2578 = vpop.xlane.xlu0 %2577
    %v2579 = vsel %vm138, %v2575, 0.0
    %2580 = vadd.xlane.f32.xlu0 %v2579
    %v2581 = vpop.xlane.xlu0 %2580
    %v2582 = vmul.f32 %v2578, 0.032258064
    %v2583 = vmul.f32 %v2581, 0.032258064
    %v2584 = vrsqrt.pop %v2582
    %v2585 = vmul.f32 %v2582, %v2584
    %vm2586 = vcmp.eq.f32.partialorder %v2582, inf
    %v2587 = vsel %vm2586, %v2582, %v2585
    %vm2588 = vcmp.eq.f32.partialorder %v2582, 0.0
    %v2589 = vand.u32 %v2582, 2147483648
    %v2590 = vsel %vm2588, %v2589, %v2587
    %v2591 = vrsqrt.pop %v2583
    %v2592 = vmul.f32 %v2583, %v2591
    %vm2593 = vcmp.eq.f32.partialorder %v2583, inf
    %v2594 = vsel %vm2593, %v2583, %v2592
    %vm2595 = vcmp.eq.f32.partialorder %v2583, 0.0
    %v2596 = vand.u32 %v2583, 2147483648
    %v2597 = vsel %vm2595, %v2596, %v2594
    %v2598 = vadd.f32 %v2590, 1e-06
    %v2599 = vadd.f32 %v2597, 1e-06
    %v2600 = vrcp.pop %v2598
    %v2601 = vrcp.pop %v2599
    %v2602 = vmul.f32 %v2572, %v2600
    %v2603 = vmul.f32 %v2573, %v2601
    %v2604 = vlaneseq
    %v2605 = vshrl.u32 %v2604, 7
    %v2606 = vsub.s32 1, %v2605
    %v2607 = vrot.slane %v1442, %v2606
    %v2608 = vmul.f32 %v2607, %v2602
    %v2609 = vmul.f32 %v2607, %v2603
    %v2610 = vlaneseq
    %v2611 = vshrl.u32 %v2610, 7
    %v2612 = vsub.s32 1, %v2611
    %v2613 = vrot.slane %v1444, %v2612
    %v2614 = vadd.f32 %v2608, %v2613
    %v2615 = vadd.f32 %v2609, %v2613
    %v2616 = vpack.c.bf16 %v2615, %v2614
    %v2618 = vlaneseq
    %v2619 = vshrl.u32 %v2618, 7
    %v2620 = vsub.s32 0, %v2619
    %v2621 = vrot.slane %v1460, %v2620
    %v2627 = vunpack.c.l.b16 %v1455
    %v2628 = vunpack.c.l.b16 %v1456
    %v2629 = vunpack.c.l.b16 %v1457
    %v2630 = vunpack.c.l.b16 %v1458
    %v2631 = vpack.c.b16 %v2628, %v2627
    %v2632 = vpack.c.b16 %v2630, %v2629
    %v2636 = vsel %vm138, %v2616, 0
    %2638 = vmatprep.subr.bf16.mxu0 0
    %2639 = vmatpush1.bf16.msra.mxu0 %v2631
    %2640 = vmatprep.subr.bf16.mxu0 0
    %2641 = vmatpush1.bf16.msra.mxu0 %v2632
    %2642 = vmatprep.subr.bf16.mxu0 0
    %2643 = vmatpush1.bf16.msra.mxu0 0
    %2644 = vmatprep.subr.bf16.mxu0 0
    %2645 = vmatpush1.bf16.msra.mxu0 0
    %2646 = vmatprep.subr.bf16.mxu0 0
    %2647 = vmatpush1.bf16.msra.mxu0 0
    %2648 = vmatprep.subr.bf16.mxu0 0
    %2649 = vmatpush1.bf16.msra.mxu0 0
    %2650 = vmatprep.subr.bf16.mxu0 0
    %2651 = vmatpush1.bf16.msra.mxu0 0
    %2652 = vmatprep.subr.bf16.mxu0 0
    %2653 = vmatpush1.bf16.msra.mxu0 0
    %2654 = vmatprep.subr.bf16.mxu0 0
    %2655 = vmatpush1.bf16.msra.mxu0 0
    %2656 = vmatprep.subr.bf16.mxu0 0
    %2657 = vmatpush1.bf16.msra.mxu0 0
    %2658 = vmatprep.subr.bf16.mxu0 0
    %2659 = vmatpush1.bf16.msra.mxu0 0
    %2660 = vmatprep.subr.bf16.mxu0 0
    %2661 = vmatpush1.bf16.msra.mxu0 0
    %2662 = vmatprep.subr.bf16.mxu0 0
    %2663 = vmatpush1.bf16.msra.mxu0 0
    %2664 = vmatprep.subr.bf16.mxu0 0
    %2665 = vmatpush1.bf16.msra.mxu0 0
    %2666 = vmatprep.subr.bf16.mxu0 0
    %2667 = vmatpush1.bf16.msra.mxu0 0
    %2668 = vmatprep.subr.bf16.mxu0 0
    %2669 = vmatpush1.bf16.msra.mxu0 0
    %2670 = vmatprep.mubr.bf16.mxu0 0
    %2671 = vmatmul.mubr.bf16.gmra.mrb[0].mxu0 %v2636
    %v2672 = vpop.f32.mrb[0].mxu0
    %v2673 = vadd.f32 %v2621, %v2672
    %v2674 = vpop.f32.mrb[0].mxu0
    %v2675 = vpop.f32.mrb[0].mxu0
    %v2676 = vadd.f32 %v2621, %v2675
    %v2677 = vpop.f32.mrb[0].mxu0
    %2678 = vdwg.mxu0
    %v2679 = vmax.f32 %v2673, 0.0
    %v2680 = vmax.f32 %v2676, 0.0
    %v2681 = vpack.c.bf16 %v2680, %v2679
    %v2683 = vlaneseq
    %v2684 = vshrl.u32 %v2683, 7
    %v2685 = vsub.s32 0, %v2684
    %v2686 = vrot.slane %v1471, %v2685
    %v2696 = vunpack.c.l.b16 %v1462
    %v2697 = vunpack.c.l.b16 %v1463
    %v2698 = vunpack.c.l.b16 %v1464
    %v2699 = vunpack.c.l.b16 %v1465
    %v2700 = vunpack.c.l.b16 %v1466
    %v2701 = vunpack.c.l.b16 %v1467
    %v2702 = vunpack.c.l.b16 %v1468
    %v2703 = vunpack.c.l.b16 %v1469
    %v2704 = vpack.c.b16 %v2697, %v2696
    %v2705 = vpack.c.b16 %v2699, %v2698
    %v2706 = vpack.c.b16 %v2701, %v2700
    %v2707 = vpack.c.b16 %v2703, %v2702
    %v2713 = vsel %vm1394, %v2681, 0
    %2715 = vmatprep.subr.bf16.mxu0 0
    %2716 = vmatpush1.bf16.msra.mxu0 %v2704
    %2717 = vmatprep.subr.bf16.mxu0 0
    %2718 = vmatpush1.bf16.msra.mxu0 %v2705
    %2719 = vmatprep.subr.bf16.mxu0 0
    %2720 = vmatpush1.bf16.msra.mxu0 %v2706
    %2721 = vmatprep.subr.bf16.mxu0 0
    %2722 = vmatpush1.bf16.msra.mxu0 %v2707
    %2723 = vmatprep.subr.bf16.mxu0 0
    %2724 = vmatpush1.bf16.msra.mxu0 0
    %2725 = vmatprep.subr.bf16.mxu0 0
    %2726 = vmatpush1.bf16.msra.mxu0 0
    %2727 = vmatprep.subr.bf16.mxu0 0
    %2728 = vmatpush1.bf16.msra.mxu0 0
    %2729 = vmatprep.subr.bf16.mxu0 0
    %2730 = vmatpush1.bf16.msra.mxu0 0
    %2731 = vmatprep.subr.bf16.mxu0 0
    %2732 = vmatpush1.bf16.msra.mxu0 0
    %2733 = vmatprep.subr.bf16.mxu0 0
    %2734 = vmatpush1.bf16.msra.mxu0 0
    %2735 = vmatprep.subr.bf16.mxu0 0
    %2736 = vmatpush1.bf16.msra.mxu0 0
    %2737 = vmatprep.subr.bf16.mxu0 0
    %2738 = vmatpush1.bf16.msra.mxu0 0
    %2739 = vmatprep.subr.bf16.mxu0 0
    %2740 = vmatpush1.bf16.msra.mxu0 0
    %2741 = vmatprep.subr.bf16.mxu0 0
    %2742 = vmatpush1.bf16.msra.mxu0 0
    %2743 = vmatprep.subr.bf16.mxu0 0
    %2744 = vmatpush1.bf16.msra.mxu0 0
    %2745 = vmatprep.subr.bf16.mxu0 0
    %2746 = vmatpush1.bf16.msra.mxu0 0
    %2747 = vmatprep.mubr.bf16.mxu0 0
    %2748 = vmatmul.mubr.bf16.gmra.mrb[0].mxu0 %v2713
    %v2749 = vpop.f32.mrb[0].mxu0
    %v2750 = vadd.f32 %v2686, %v2749
    %v2751 = vpop.f32.mrb[0].mxu0
    %v2752 = vpop.f32.mrb[0].mxu0
    %v2753 = vadd.f32 %v2686, %v2752
    %v2754 = vpop.f32.mrb[0].mxu0
    %2755 = vdwg.mxu0
    %v2756 = vadd.f32 %v2562, %v2750
    %v2757 = vadd.f32 %v2563, %v2753
    %v2758 = vld [vmem:[%s11] sm:$0x1]
    %v2759 = vld [vmem:[#allocation10] sm:$0x1]
    %v2760 = vsel %vm138, %v2756, 0.0
    %2761 = vadd.xlane.f32.xlu0 %v2760
    %v2762 = vpop.xlane.xlu0 %2761
    %v2763 = vsel %vm138, %v2757, 0.0
    %2764 = vadd.xlane.f32.xlu0 %v2763
    %v2765 = vpop.xlane.xlu0 %2764
    %v2766 = vmul.f32 %v2762, %v145
    %v2767 = vmul.f32 %v2765, %v145
    %v2768 = vsub.f32 %v2756, %v2766
    %v2769 = vsub.f32 %v2757, %v2767
    %v2770 = vmul.f32 %v2768, %v2768
    %v2771 = vmul.f32 %v2769, %v2769
    %v2772 = vsel %vm138, %v2770, 0.0
    %2773 = vadd.xlane.f32.xlu0 %v2772
    %v2774 = vpop.xlane.xlu0 %2773
    %v2775 = vsel %vm138, %v2771, 0.0
    %2776 = vadd.xlane.f32.xlu0 %v2775
    %v2777 = vpop.xlane.xlu0 %2776
    %v2778 = vmul.f32 %v2774, 0.032258064
    %v2779 = vmul.f32 %v2777, 0.032258064
    %v2780 = vrsqrt.pop %v2778
    %v2781 = vmul.f32 %v2778, %v2780
    %vm2782 = vcmp.eq.f32.partialorder %v2778, inf
    %v2783 = vsel %vm2782, %v2778, %v2781
    %vm2784 = vcmp.eq.f32.partialorder %v2778, 0.0
    %v2785 = vand.u32 %v2778, 2147483648
    %v2786 = vsel %vm2784, %v2785, %v2783
    %v2787 = vrsqrt.pop %v2779
    %v2788 = vmul.f32 %v2779, %v2787
    %vm2789 = vcmp.eq.f32.partialorder %v2779, inf
    %v2790 = vsel %vm2789, %v2779, %v2788
    %vm2791 = vcmp.eq.f32.partialorder %v2779, 0.0
    %v2792 = vand.u32 %v2779, 2147483648
    %v2793 = vsel %vm2791, %v2792, %v2790
    %v2794 = vadd.f32 %v2786, 1e-06
    %v2795 = vadd.f32 %v2793, 1e-06
    %v2796 = vrcp.pop %v2794
    %v2797 = vrcp.pop %v2795
    %v2798 = vmul.f32 %v2768, %v2796
    %v2799 = vmul.f32 %v2769, %v2797
    %v2801 = vlaneseq
    %v2802 = vshrl.u32 %v2801, 7
    %v2803 = vsub.s32 0, %v2802
    %v2804 = vrot.slane %v2758, %v2803
    %v2806 = vmul.f32 %v2804, %v2798
    %v2807 = vmul.f32 %v2804, %v2799
    %v2809 = vlaneseq
    %v2810 = vshrl.u32 %v2809, 7
    %v2811 = vsub.s32 0, %v2810
    %v2812 = vrot.slane %v2759, %v2811
    %v2814 = vadd.f32 %v2806, %v2812
    %v2815 = vadd.f32 %v2807, %v2812
    %2816 = vst.msk [vmem:[#allocation11] sm:$0xff] %vm138, %v2814
    %2817 = vst.msk [vmem:[#allocation11 + $0x8] sm:$0xff] %vm138, %v2815
    // Predicated region
    $region74: #{_encoder_forward_impl.1} parent=1 // pred_check
      _
    $region75: #{_encoder_forward_impl.1} parent=1 // pred_check_branch
      %2819 = sbr.rel (0) target = $region77
    $region76: #{_encoder_forward_impl.1} parent=1 // pred_region
      %s2821 = ssub.s32 256, 256
      %2822 = vsyncadd [#allocation4], %s2821
      %s2823 = sshll.u32 [#allocation11], 4
      %s2824 = int_to_ptr.vmem [resolvable:$true] %s2823
      %2829 = dma.vmem_to_hbm [thread:$0]  %s2824, 256, %s13, [#allocation4], 128, 128, 8
    $region77: #{_encoder_forward_impl.1} parent=1 // pred_fallthru
      _
    // Predicated region
    $region78: #{_encoder_forward_impl.1} parent=1 // pred_check
      _
    $region79: #{_encoder_forward_impl.1} parent=1 // pred_check_branch
      %2831 = sbr.rel (0) target = $region81
    $region80: #{_encoder_forward_impl.1} parent=1 // pred_region
      %2832 = dma.done [#allocation4], 256
    $region81: #{_encoder_forward_impl.1} parent=1 // pred_fallthru
      _
    %2833 = vsyncpa [#allocation3], 1
    %2834 = vsyncpa [#allocation6], 1
    %2835 = vsyncpa [#allocation9], 1
    %2836 = vsyncpa [#allocation4], 1

</llo_original>
